<compile_context>
chip_gen: v7x
topology: tpu7x:2x2x1
jax: 0.10.0
libtpu: 0.0.40
codegen_flags: <defaults>
</compile_context>

<pallas_src>
import jax
import jax.numpy as jnp
from jax.experimental import pallas as pl
from jax.experimental.pallas import tpu as pltpu

EPS = 1e-5
NUM_CLASSES = 2     # PongNet policy head output
LOGITS_PAD = 128    # lane-dense padding for the final layer / output


def _round_up(n, m):
    return ((n + m - 1) // m) * m


# ----------------------------------------------------------------------------- kernel
def pongnet_kernel(
    x_ref,                       # (TB, IN)        float32
    w1_ref, b1_ref,              # fc1 (bn1 folded):  (IN, H) bf16, (1, H) bf16
    w2_ref, b2_ref,              # fc2 (bn2 folded)
    w3_ref, b3_ref,              # fc3 (bn2 folded)
    w4_ref, b4_ref,              # fc4 (bn2 folded)
    w5_ref, b5_ref,              # fc5 (bn2 folded)
    wp1_ref, bp1_ref,            # policy linear 1:   (H, H),  (1, H)
    wp2_ref, bp2_ref,            # policy linear 2 (padded): (H, 128), (1, 128)
    out_ref,                     # (TB, 128) bf16 — lanes >= 2 carry zeros
):
    f32 = jnp.float32
    bf16 = jnp.bfloat16

    def layer(a, w_ref, b_ref):
        # MXU matmul with f32 accumulation, then a bf16 epilogue:
        # downcast -> bias add -> ReLU (bf16 VALU packs 2x elements per op).
        y = jnp.dot(a, w_ref[...], preferred_element_type=f32)
        y = y.astype(bf16) + b_ref[...]
        return jnp.maximum(y, 0)

    h = layer(x_ref[...].astype(bf16), w1_ref, b1_ref)   # relu(fc1(bn1(x)))
    h = layer(h, w2_ref, b2_ref)                          # relu(fc2(bn2(.)))
    h = layer(h, w3_ref, b3_ref)                          # relu(fc3(bn2(.)))
    h = layer(h, w4_ref, b4_ref)                          # relu(fc4(bn2(.)))
    h = layer(h, w5_ref, b5_ref)                          # relu(fc5(bn2(.)))
    h = layer(h, wp1_ref, bp1_ref)                        # policy: Linear -> ReLU
    logits = layer(h, wp2_ref, bp2_ref)                   # Linear -> ReLU, (TB, 128)

    # Softmax over the 2 real lanes only (padded lanes -> probability 0),
    # computed in f32 for stability, stored as bf16.
    logits = logits.astype(f32)
    lane = jax.lax.broadcasted_iota(jnp.int32, logits.shape, 1)
    masked = jnp.where(lane < NUM_CLASSES, logits, -jnp.inf)
    m = jnp.max(masked, axis=1, keepdims=True)
    e = jnp.exp(masked - m)
    denom = jnp.sum(e, axis=1, keepdims=True)
    out_ref[...] = (e / denom).astype(out_ref.dtype)


# ----------------------------------------------------------------------------- host-side param prep
def _fold_bn(bn):
    gamma, beta, mean, var = bn
    scale = gamma / jnp.sqrt(var + EPS)
    shift = beta - mean * scale
    return scale, shift


def prepare_params(params, dtype):
    """Fold BN into adjacent Linears, transpose to [in,out], cast weights AND
    biases to `dtype` (bf16 epilogue), pad policy2 to 128 lanes."""

    def folded(bn_name, fc_name):
        scale, shift = _fold_bn(params[bn_name])
        w, b = params[fc_name]
        wt = w.T * scale[:, None]                 # (in, out)
        bb = b + shift @ w.T
        return wt.astype(dtype), bb.reshape(1, -1).astype(dtype)

    def plain(name):
        w, b = params[name]
        return w.T.astype(dtype), b.reshape(1, -1).astype(dtype)

    w1, b1 = folded("bn1", "fc1")
    w2, b2 = folded("bn2", "fc2")
    w3, b3 = folded("bn2", "fc3")
    w4, b4 = folded("bn2", "fc4")
    w5, b5 = folded("bn2", "fc5")
    wp1, bp1 = plain("policy1")
    wp2, bp2 = plain("policy2")

    pad = LOGITS_PAD - wp2.shape[1]
    wp2 = jnp.pad(wp2, ((0, 0), (0, pad)))
    bp2 = jnp.pad(bp2, ((0, 0), (0, pad)))

    return (w1, b1, w2, b2, w3, b3, w4, b4, w5, b5, wp1, bp1, wp2, bp2)


# ----------------------------------------------------------------------------- wrapper
def pongnet_forward(x, params, *, weights_dtype=jnp.bfloat16, batch_tile=1024):
    B, IN = x.shape
    args = prepare_params(params, weights_dtype)

    # Pick a batch tile that (a) is large enough to amortize per-step pipeline
    # overhead, (b) gives >=2 grid steps when possible (both v7x TensorCores
    # get work), and (c) keeps the second-to-last block dim a multiple of 8.
    target = min(batch_tile, _round_up(pl.cdiv(B, 2), 8))
    TB = B if target >= B else target
    grid = (pl.cdiv(B, TB),)

    out_spec = pl.BlockSpec((TB, LOGITS_PAD), lambda i: (i, 0))

    def run(single_buffer_weights):
        def resident(arr):
            # Full-array block with a constant block index: fetched once and
            # kept resident in VMEM across all grid steps.
            kwargs = {}
            if single_buffer_weights:
                kwargs["pipeline_mode"] = pl.Buffered(1)
            return pl.BlockSpec(arr.shape, lambda i: (0,) * arr.ndim, **kwargs)

        in_specs = [pl.BlockSpec((TB, IN), lambda i: (i, 0))]
        in_specs += [resident(a) for a in args]

        return pl.pallas_call(
            pongnet_kernel,
            out_shape=jax.ShapeDtypeStruct((B, LOGITS_PAD), jnp.bfloat16),
            grid=grid,
            in_specs=in_specs,
            out_specs=out_spec,
            compiler_params=pltpu.CompilerParams(
                dimension_semantics=("parallel",),   # shards batch across TCs on v7x
                vmem_limit_bytes=16 << 20,
            ),
        )(x, *args)

    try:
        out_padded = run(True)
    except Exception:
        # Fallback: default double-buffering for the resident weights.
        out_padded = run(False)

    return out_padded[:, :NUM_CLASSES]


# ----------------------------------------------------------------------------- references
def reference_forward(x, params):
    """Pure-JAX f32 reference of the PyTorch eval-mode forward (dropout no-op)."""
    def bn(h, p):
        gamma, beta, mean, var = p
        return (h - mean) / jnp.sqrt(var + EPS) * gamma + beta

    def lin(h, name):
        w, b = params[name]
        return h @ w.T + b

    h = bn(x, params["bn1"])
    h = jax.nn.relu(lin(h, "fc1"))
    h = jax.nn.relu(lin(bn(h, params["bn2"]), "fc2"))
    h = jax.nn.relu(lin(bn(h, params["bn2"]), "fc3"))
    h = jax.nn.relu(lin(bn(h, params["bn2"]), "fc4"))
    h = jax.nn.relu(lin(bn(h, params["bn2"]), "fc5"))
    h = jax.nn.relu(lin(h, "policy1"))
    h = jax.nn.relu(lin(h, "policy2"))
    return jax.nn.softmax(h, axis=1)


def folded_reference(x, prepared):
    """Pure-JAX reference that mirrors the kernel numerics (same folded bf16
    weights/biases, same bf16 epilogue rounding) — tight correctness check."""
    f32 = jnp.float32
    bf16 = jnp.bfloat16
    (w1, b1, w2, b2, w3, b3, w4, b4, w5, b5, wp1, bp1, wp2, bp2) = prepared

    def layer(h, w, b):
        y = jnp.dot(h.astype(f32), w.astype(f32))     # f32 accumulation
        y = y.astype(bf16) + b                        # bf16 bias add
        return jnp.maximum(y, 0).astype(bf16)         # bf16 ReLU

    h = layer(x.astype(bf16), w1, b1)
    h = layer(h, w2, b2)
    h = layer(h, w3, b3)
    h = layer(h, w4, b4)
    h = layer(h, w5, b5)
    h = layer(h, wp1, bp1)
    logits = layer(h, wp2, bp2)[:, :NUM_CLASSES].astype(f32)
    return jax.nn.softmax(logits, axis=1).astype(bf16)


# ----------------------------------------------------------------------------- params / demo
def init_params(key, in_dim, hidden=256, out=256):
    ks = jax.random.split(key, 16)

    def linear(k, fan_in, fan_out):
        kw, kb = jax.random.split(k)
        bound = 1.0 / jnp.sqrt(fan_in)
        w = jax.random.uniform(kw, (fan_out, fan_in), jnp.float32, -bound, bound)
        b = jax.random.uniform(kb, (fan_out,), jnp.float32, -bound, bound)
        return w, b

    def batchnorm(k, n):
        k1, k2, k3, k4 = jax.random.split(k, 4)
        gamma = 1.0 + 0.1 * jax.random.normal(k1, (n,), jnp.float32)
        beta = 0.1 * jax.random.normal(k2, (n,), jnp.float32)
        mean = 0.1 * jax.random.normal(k3, (n,), jnp.float32)
        var = 1.0 + 0.1 * jax.random.uniform(k4, (n,), jnp.float32)
        return gamma, beta, mean, var

    return {
        "bn1": batchnorm(ks[0], in_dim),
        "bn2": batchnorm(ks[1], hidden),
        "fc1": linear(ks[2], in_dim, hidden),
        "fc2": linear(ks[3], hidden, hidden),
        "fc3": linear(ks[4], hidden, hidden),
        "fc4": linear(ks[5], hidden, hidden),
        "fc5": linear(ks[6], hidden, out),
        "policy1": linear(ks[7], out, 256),
        "policy2": linear(ks[8], 256, 2),
    }


if __name__ == "__main__":
    B, IN_DIM = 8, 128
    key = jax.random.PRNGKey(0)
    kp, kx = jax.random.split(key)

    params = init_params(kp, IN_DIM)
    x = jax.random.normal(kx, (B, IN_DIM), jnp.float32)

    out = jax.block_until_ready(pongnet_forward(x, params)).astype(jnp.float32)

    # tight check: same folded bf16 weights / bf16 epilogue rounding as the kernel
    ref_matched = jax.block_until_ready(
        folded_reference(x, prepare_params(params, jnp.bfloat16))).astype(jnp.float32)
    # loose semantic check: original f32 eval-mode forward
    ref_f32 = jax.block_until_ready(reference_forward(x, params))

    assert out.shape == (B, NUM_CLASSES)
    assert jnp.allclose(jnp.sum(out, axis=1), 1.0, atol=1e-2)
    assert jnp.allclose(out, ref_matched, atol=5e-3, rtol=5e-3)
    assert jnp.allclose(out, ref_f32, atol=5e-2, rtol=5e-2)
    print("KERNEL_OK")
</pallas_src>

<mosaic_0001>
module attributes {stable_mosaic.version = 11 : i64} {
  func.func @pongnet_kernel(%arg0: i32, %arg1: memref<8x128xf32, #tpu.memory_space<vmem>>, %arg2: memref<128x256xbf16, #tpu.memory_space<vmem>>, %arg3: memref<1x256xbf16, #tpu.memory_space<vmem>>, %arg4: memref<256x256xbf16, #tpu.memory_space<vmem>>, %arg5: memref<1x256xbf16, #tpu.memory_space<vmem>>, %arg6: memref<256x256xbf16, #tpu.memory_space<vmem>>, %arg7: memref<1x256xbf16, #tpu.memory_space<vmem>>, %arg8: memref<256x256xbf16, #tpu.memory_space<vmem>>, %arg9: memref<1x256xbf16, #tpu.memory_space<vmem>>, %arg10: memref<256x256xbf16, #tpu.memory_space<vmem>>, %arg11: memref<1x256xbf16, #tpu.memory_space<vmem>>, %arg12: memref<256x256xbf16, #tpu.memory_space<vmem>>, %arg13: memref<1x256xbf16, #tpu.memory_space<vmem>>, %arg14: memref<256x128xbf16, #tpu.memory_space<vmem>>, %arg15: memref<1x128xbf16, #tpu.memory_space<vmem>>, %arg16: memref<8x128xbf16, #tpu.memory_space<vmem>>) attributes {dimension_semantics = [#tpu.dimension_semantics<parallel>], iteration_bounds = array<i64: 1>, scalar_prefetch = 0 : i64, scratch_operands = 0 : i64, tpu.core_type = #tpu.core_type<tc>, window_params = [{transform_indices = @transform_0, window_bounds = array<i64: 8, 128>}, {pipeline_mode = #tpu.pipeline_mode<synchronous>, transform_indices = @transform_1, window_bounds = array<i64: 128, 256>}, {pipeline_mode = #tpu.pipeline_mode<synchronous>, transform_indices = @transform_2, window_bounds = array<i64: 1, 256>}, {pipeline_mode = #tpu.pipeline_mode<synchronous>, transform_indices = @transform_3, window_bounds = array<i64: 256, 256>}, {pipeline_mode = #tpu.pipeline_mode<synchronous>, transform_indices = @transform_4, window_bounds = array<i64: 1, 256>}, {pipeline_mode = #tpu.pipeline_mode<synchronous>, transform_indices = @transform_5, window_bounds = array<i64: 256, 256>}, {pipeline_mode = #tpu.pipeline_mode<synchronous>, transform_indices = @transform_6, window_bounds = array<i64: 1, 256>}, {pipeline_mode = #tpu.pipeline_mode<synchronous>, transform_indices = @transform_7, window_bounds = array<i64: 256, 256>}, {pipeline_mode = #tpu.pipeline_mode<synchronous>, transform_indices = @transform_8, window_bounds = array<i64: 1, 256>}, {pipeline_mode = #tpu.pipeline_mode<synchronous>, transform_indices = @transform_9, window_bounds = array<i64: 256, 256>}, {pipeline_mode = #tpu.pipeline_mode<synchronous>, transform_indices = @transform_10, window_bounds = array<i64: 1, 256>}, {pipeline_mode = #tpu.pipeline_mode<synchronous>, transform_indices = @transform_11, window_bounds = array<i64: 256, 256>}, {pipeline_mode = #tpu.pipeline_mode<synchronous>, transform_indices = @transform_12, window_bounds = array<i64: 1, 256>}, {pipeline_mode = #tpu.pipeline_mode<synchronous>, transform_indices = @transform_13, window_bounds = array<i64: 256, 128>}, {pipeline_mode = #tpu.pipeline_mode<synchronous>, transform_indices = @transform_14, window_bounds = array<i64: 1, 128>}, {transform_indices = @transform_15, window_bounds = array<i64: 8, 128>}]} {
    %c0 = arith.constant 0 : index
    %c0_0 = arith.constant 0 : index
    %0 = vector.load %arg1[%c0, %c0_0] : memref<8x128xf32, #tpu.memory_space<vmem>>, vector<8x128xf32>
    %1 = arith.truncf %0 : vector<8x128xf32> to vector<8x128xbf16>
    %c0_1 = arith.constant 0 : index
    %c0_2 = arith.constant 0 : index
    %2 = vector.load %arg2[%c0_1, %c0_2] : memref<128x256xbf16, #tpu.memory_space<vmem>>, vector<128x256xbf16>
    %cst = arith.constant dense<0.000000e+00> : vector<8x256xf32>
    %3 = tpu.matmul %1, %2, %cst {dimension_numbers = #tpu.dot_dimension_numbers<[1], [0], [0], [1], [0, 0, 1, 1], [], []>} : vector<8x128xbf16>, vector<128x256xbf16>, vector<8x256xf32> -> vector<8x256xf32>
    %4 = arith.truncf %3 : vector<8x256xf32> to vector<8x256xbf16>
    %c0_3 = arith.constant 0 : index
    %c0_4 = arith.constant 0 : index
    %5 = vector.load %arg3[%c0_3, %c0_4] : memref<1x256xbf16, #tpu.memory_space<vmem>>, vector<1x256xbf16>
    %6 = vector.broadcast %5 : vector<1x256xbf16> to vector<8x256xbf16>
    %7 = arith.addf %4, %6 : vector<8x256xbf16>
    %cst_5 = arith.constant 0.000000e+00 : bf16
    %8 = vector.broadcast %cst_5 : bf16 to vector<8x256xbf16>
    %9 = arith.maximumf %7, %8 : vector<8x256xbf16>
    %c0_6 = arith.constant 0 : index
    %c0_7 = arith.constant 0 : index
    %10 = vector.load %arg4[%c0_6, %c0_7] : memref<256x256xbf16, #tpu.memory_space<vmem>>, vector<256x256xbf16>
    %cst_8 = arith.constant dense<0.000000e+00> : vector<8x256xf32>
    %11 = tpu.matmul %9, %10, %cst_8 {dimension_numbers = #tpu.dot_dimension_numbers<[1], [0], [0], [1], [0, 0, 1, 1], [], []>} : vector<8x256xbf16>, vector<256x256xbf16>, vector<8x256xf32> -> vector<8x256xf32>
    %12 = arith.truncf %11 : vector<8x256xf32> to vector<8x256xbf16>
    %c0_9 = arith.constant 0 : index
    %c0_10 = arith.constant 0 : index
    %13 = vector.load %arg5[%c0_9, %c0_10] : memref<1x256xbf16, #tpu.memory_space<vmem>>, vector<1x256xbf16>
    %14 = vector.broadcast %13 : vector<1x256xbf16> to vector<8x256xbf16>
    %15 = arith.addf %12, %14 : vector<8x256xbf16>
    %cst_11 = arith.constant 0.000000e+00 : bf16
    %16 = vector.broadcast %cst_11 : bf16 to vector<8x256xbf16>
    %17 = arith.maximumf %15, %16 : vector<8x256xbf16>
    %c0_12 = arith.constant 0 : index
    %c0_13 = arith.constant 0 : index
    %18 = vector.load %arg6[%c0_12, %c0_13] : memref<256x256xbf16, #tpu.memory_space<vmem>>, vector<256x256xbf16>
    %cst_14 = arith.constant dense<0.000000e+00> : vector<8x256xf32>
    %19 = tpu.matmul %17, %18, %cst_14 {dimension_numbers = #tpu.dot_dimension_numbers<[1], [0], [0], [1], [0, 0, 1, 1], [], []>} : vector<8x256xbf16>, vector<256x256xbf16>, vector<8x256xf32> -> vector<8x256xf32>
    %20 = arith.truncf %19 : vector<8x256xf32> to vector<8x256xbf16>
    %c0_15 = arith.constant 0 : index
    %c0_16 = arith.constant 0 : index
    %21 = vector.load %arg7[%c0_15, %c0_16] : memref<1x256xbf16, #tpu.memory_space<vmem>>, vector<1x256xbf16>
    %22 = vector.broadcast %21 : vector<1x256xbf16> to vector<8x256xbf16>
    %23 = arith.addf %20, %22 : vector<8x256xbf16>
    %cst_17 = arith.constant 0.000000e+00 : bf16
    %24 = vector.broadcast %cst_17 : bf16 to vector<8x256xbf16>
    %25 = arith.maximumf %23, %24 : vector<8x256xbf16>
    %c0_18 = arith.constant 0 : index
    %c0_19 = arith.constant 0 : index
    %26 = vector.load %arg8[%c0_18, %c0_19] : memref<256x256xbf16, #tpu.memory_space<vmem>>, vector<256x256xbf16>
    %cst_20 = arith.constant dense<0.000000e+00> : vector<8x256xf32>
    %27 = tpu.matmul %25, %26, %cst_20 {dimension_numbers = #tpu.dot_dimension_numbers<[1], [0], [0], [1], [0, 0, 1, 1], [], []>} : vector<8x256xbf16>, vector<256x256xbf16>, vector<8x256xf32> -> vector<8x256xf32>
    %28 = arith.truncf %27 : vector<8x256xf32> to vector<8x256xbf16>
    %c0_21 = arith.constant 0 : index
    %c0_22 = arith.constant 0 : index
    %29 = vector.load %arg9[%c0_21, %c0_22] : memref<1x256xbf16, #tpu.memory_space<vmem>>, vector<1x256xbf16>
    %30 = vector.broadcast %29 : vector<1x256xbf16> to vector<8x256xbf16>
    %31 = arith.addf %28, %30 : vector<8x256xbf16>
    %cst_23 = arith.constant 0.000000e+00 : bf16
    %32 = vector.broadcast %cst_23 : bf16 to vector<8x256xbf16>
    %33 = arith.maximumf %31, %32 : vector<8x256xbf16>
    %c0_24 = arith.constant 0 : index
    %c0_25 = arith.constant 0 : index
    %34 = vector.load %arg10[%c0_24, %c0_25] : memref<256x256xbf16, #tpu.memory_space<vmem>>, vector<256x256xbf16>
    %cst_26 = arith.constant dense<0.000000e+00> : vector<8x256xf32>
    %35 = tpu.matmul %33, %34, %cst_26 {dimension_numbers = #tpu.dot_dimension_numbers<[1], [0], [0], [1], [0, 0, 1, 1], [], []>} : vector<8x256xbf16>, vector<256x256xbf16>, vector<8x256xf32> -> vector<8x256xf32>
    %36 = arith.truncf %35 : vector<8x256xf32> to vector<8x256xbf16>
    %c0_27 = arith.constant 0 : index
    %c0_28 = arith.constant 0 : index
    %37 = vector.load %arg11[%c0_27, %c0_28] : memref<1x256xbf16, #tpu.memory_space<vmem>>, vector<1x256xbf16>
    %38 = vector.broadcast %37 : vector<1x256xbf16> to vector<8x256xbf16>
    %39 = arith.addf %36, %38 : vector<8x256xbf16>
    %cst_29 = arith.constant 0.000000e+00 : bf16
    %40 = vector.broadcast %cst_29 : bf16 to vector<8x256xbf16>
    %41 = arith.maximumf %39, %40 : vector<8x256xbf16>
    %c0_30 = arith.constant 0 : index
    %c0_31 = arith.constant 0 : index
    %42 = vector.load %arg12[%c0_30, %c0_31] : memref<256x256xbf16, #tpu.memory_space<vmem>>, vector<256x256xbf16>
    %cst_32 = arith.constant dense<0.000000e+00> : vector<8x256xf32>
    %43 = tpu.matmul %41, %42, %cst_32 {dimension_numbers = #tpu.dot_dimension_numbers<[1], [0], [0], [1], [0, 0, 1, 1], [], []>} : vector<8x256xbf16>, vector<256x256xbf16>, vector<8x256xf32> -> vector<8x256xf32>
    %44 = arith.truncf %43 : vector<8x256xf32> to vector<8x256xbf16>
    %c0_33 = arith.constant 0 : index
    %c0_34 = arith.constant 0 : index
    %45 = vector.load %arg13[%c0_33, %c0_34] : memref<1x256xbf16, #tpu.memory_space<vmem>>, vector<1x256xbf16>
    %46 = vector.broadcast %45 : vector<1x256xbf16> to vector<8x256xbf16>
    %47 = arith.addf %44, %46 : vector<8x256xbf16>
    %cst_35 = arith.constant 0.000000e+00 : bf16
    %48 = vector.broadcast %cst_35 : bf16 to vector<8x256xbf16>
    %49 = arith.maximumf %47, %48 : vector<8x256xbf16>
    %c0_36 = arith.constant 0 : index
    %c0_37 = arith.constant 0 : index
    %50 = vector.load %arg14[%c0_36, %c0_37] : memref<256x128xbf16, #tpu.memory_space<vmem>>, vector<256x128xbf16>
    %cst_38 = arith.constant dense<0.000000e+00> : vector<8x128xf32>
    %51 = tpu.matmul %49, %50, %cst_38 {dimension_numbers = #tpu.dot_dimension_numbers<[1], [0], [0], [1], [0, 0, 1, 1], [], []>} : vector<8x256xbf16>, vector<256x128xbf16>, vector<8x128xf32> -> vector<8x128xf32>
    %52 = arith.truncf %51 : vector<8x128xf32> to vector<8x128xbf16>
    %c0_39 = arith.constant 0 : index
    %c0_40 = arith.constant 0 : index
    %53 = vector.load %arg15[%c0_39, %c0_40] : memref<1x128xbf16, #tpu.memory_space<vmem>>, vector<1x128xbf16>
    %54 = vector.broadcast %53 : vector<1x128xbf16> to vector<8x128xbf16>
    %55 = arith.addf %52, %54 : vector<8x128xbf16>
    %cst_41 = arith.constant 0.000000e+00 : bf16
    %56 = vector.broadcast %cst_41 : bf16 to vector<8x128xbf16>
    %57 = arith.maximumf %55, %56 : vector<8x128xbf16>
    %58 = arith.extf %57 : vector<8x128xbf16> to vector<8x128xf32>
    %59 = tpu.iota {dimensions = array<i32: 1>} : vector<8x128xi32>
    %c2_i32 = arith.constant 2 : i32
    %60 = vector.broadcast %c2_i32 : i32 to vector<8x128xi32>
    %61 = arith.cmpi slt, %59, %60 : vector<8x128xi32>
    %cst_42 = arith.constant 0xFF800000 : f32
    %62 = vector.broadcast %cst_42 : f32 to vector<8x128xf32>
    %63 = arith.select %61, %58, %62 : vector<8x128xi1>, vector<8x128xf32>
    %cst_43 = arith.constant dense<0xFF800000> : vector<8xf32>
    %64 = vector.multi_reduction <maximumf>, %63, %cst_43 [1] : vector<8x128xf32> to vector<8xf32>
    %65 = vector.shape_cast %64 : vector<8xf32> to vector<8x1xf32>
    %66 = vector.broadcast %65 : vector<8x1xf32> to vector<8x128xf32>
    %67 = arith.subf %63, %66 : vector<8x128xf32>
    %68 = math.exp %67 : vector<8x128xf32>
    %cst_44 = arith.constant dense<0.000000e+00> : vector<8xf32>
    %69 = vector.multi_reduction <add>, %68, %cst_44 [1] : vector<8x128xf32> to vector<8xf32>
    %70 = vector.shape_cast %69 : vector<8xf32> to vector<8x1xf32>
    %71 = vector.broadcast %70 : vector<8x1xf32> to vector<8x128xf32>
    %72 = arith.divf %68, %71 : vector<8x128xf32>
    %73 = arith.truncf %72 : vector<8x128xf32> to vector<8x128xbf16>
    %c0_45 = arith.constant 0 : index
    %c0_46 = arith.constant 0 : index
    %74 = vector.load %arg16[%c0_45, %c0_46] : memref<8x128xbf16, #tpu.memory_space<vmem>>, vector<8x128xbf16>
    tpu.vector_store %arg16[%c0_45, %c0_46], %73 {strides = array<i32>} : memref<8x128xbf16, #tpu.memory_space<vmem>>, vector<8x128xbf16>,
    return
  }
  func.func @transform_0(%arg0: i32) -> (i32, i32) {
    %c0_i32 = arith.constant 0 : i32
    %c0_i32_0 = arith.constant 0 : i32
    return %arg0, %c0_i32 : i32, i32
  }
  func.func @transform_1(%arg0: i32) -> (i32, i32) {
    %c0_i32 = arith.constant 0 : i32
    %c0_i32_0 = arith.constant 0 : i32
    %c0_i32_1 = arith.constant 0 : i32
    return %c0_i32, %c0_i32_0 : i32, i32
  }
  func.func @transform_2(%arg0: i32) -> (i32, i32) {
    %c0_i32 = arith.constant 0 : i32
    %c0_i32_0 = arith.constant 0 : i32
    %c0_i32_1 = arith.constant 0 : i32
    return %c0_i32, %c0_i32_0 : i32, i32
  }
  func.func @transform_3(%arg0: i32) -> (i32, i32) {
    %c0_i32 = arith.constant 0 : i32
    %c0_i32_0 = arith.constant 0 : i32
    %c0_i32_1 = arith.constant 0 : i32
    return %c0_i32, %c0_i32_0 : i32, i32
  }
  func.func @transform_4(%arg0: i32) -> (i32, i32) {
    %c0_i32 = arith.constant 0 : i32
    %c0_i32_0 = arith.constant 0 : i32
    %c0_i32_1 = arith.constant 0 : i32
    return %c0_i32, %c0_i32_0 : i32, i32
  }
  func.func @transform_5(%arg0: i32) -> (i32, i32) {
    %c0_i32 = arith.constant 0 : i32
    %c0_i32_0 = arith.constant 0 : i32
    %c0_i32_1 = arith.constant 0 : i32
    return %c0_i32, %c0_i32_0 : i32, i32
  }
  func.func @transform_6(%arg0: i32) -> (i32, i32) {
    %c0_i32 = arith.constant 0 : i32
    %c0_i32_0 = arith.constant 0 : i32
    %c0_i32_1 = arith.constant 0 : i32
    return %c0_i32, %c0_i32_0 : i32, i32
  }
  func.func @transform_7(%arg0: i32) -> (i32, i32) {
    %c0_i32 = arith.constant 0 : i32
    %c0_i32_0 = arith.constant 0 : i32
    %c0_i32_1 = arith.constant 0 : i32
    return %c0_i32, %c0_i32_0 : i32, i32
  }
  func.func @transform_8(%arg0: i32) -> (i32, i32) {
    %c0_i32 = arith.constant 0 : i32
    %c0_i32_0 = arith.constant 0 : i32
    %c0_i32_1 = arith.constant 0 : i32
    return %c0_i32, %c0_i32_0 : i32, i32
  }
  func.func @transform_9(%arg0: i32) -> (i32, i32) {
    %c0_i32 = arith.constant 0 : i32
    %c0_i32_0 = arith.constant 0 : i32
    %c0_i32_1 = arith.constant 0 : i32
    return %c0_i32, %c0_i32_0 : i32, i32
  }
  func.func @transform_10(%arg0: i32) -> (i32, i32) {
    %c0_i32 = arith.constant 0 : i32
    %c0_i32_0 = arith.constant 0 : i32
    %c0_i32_1 = arith.constant 0 : i32
    return %c0_i32, %c0_i32_0 : i32, i32
  }
  func.func @transform_11(%arg0: i32) -> (i32, i32) {
    %c0_i32 = arith.constant 0 : i32
    %c0_i32_0 = arith.constant 0 : i32
    %c0_i32_1 = arith.constant 0 : i32
    return %c0_i32, %c0_i32_0 : i32, i32
  }
  func.func @transform_12(%arg0: i32) -> (i32, i32) {
    %c0_i32 = arith.constant 0 : i32
    %c0_i32_0 = arith.constant 0 : i32
    %c0_i32_1 = arith.constant 0 : i32
    return %c0_i32, %c0_i32_0 : i32, i32
  }
  func.func @transform_13(%arg0: i32) -> (i32, i32) {
    %c0_i32 = arith.constant 0 : i32
    %c0_i32_0 = arith.constant 0 : i32
    %c0_i32_1 = arith.constant 0 : i32
    return %c0_i32, %c0_i32_0 : i32, i32
  }
  func.func @transform_14(%arg0: i32) -> (i32, i32) {
    %c0_i32 = arith.constant 0 : i32
    %c0_i32_0 = arith.constant 0 : i32
    %c0_i32_1 = arith.constant 0 : i32
    return %c0_i32, %c0_i32_0 : i32, i32
  }
  func.func @transform_15(%arg0: i32) -> (i32, i32) {
    %c0_i32 = arith.constant 0 : i32
    %c0_i32_0 = arith.constant 0 : i32
    return %arg0, %c0_i32 : i32, i32
  }
}

module attributes {stable_mosaic.version = 11 : i64} {
  func.func @pongnet_kernel(%arg0: i32, %arg1: memref<8x128xf32, #tpu.memory_space<vmem>>, %arg2: memref<128x256xbf16, #tpu.memory_space<vmem>>, %arg3: memref<1x256xbf16, #tpu.memory_space<vmem>>, %arg4: memref<256x256xbf16, #tpu.memory_space<vmem>>, %arg5: memref<1x256xbf16, #tpu.memory_space<vmem>>, %arg6: memref<256x256xbf16, #tpu.memory_space<vmem>>, %arg7: memref<1x256xbf16, #tpu.memory_space<vmem>>, %arg8: memref<256x256xbf16, #tpu.memory_space<vmem>>, %arg9: memref<1x256xbf16, #tpu.memory_space<vmem>>, %arg10: memref<256x256xbf16, #tpu.memory_space<vmem>>, %arg11: memref<1x256xbf16, #tpu.memory_space<vmem>>, %arg12: memref<256x256xbf16, #tpu.memory_space<vmem>>, %arg13: memref<1x256xbf16, #tpu.memory_space<vmem>>, %arg14: memref<256x128xbf16, #tpu.memory_space<vmem>>, %arg15: memref<1x128xbf16, #tpu.memory_space<vmem>>, %arg16: memref<8x128xbf16, #tpu.memory_space<vmem>>) attributes {dimension_semantics = [#tpu.dimension_semantics<parallel>], iteration_bounds = array<i64: 1>, scalar_prefetch = 0 : i64, scratch_operands = 0 : i64, tpu.core_type = #tpu.core_type<tc>, window_params = [{transform_indices = @transform_0, window_bounds = array<i64: 8, 128>}, {pipeline_mode = #tpu.pipeline_mode<synchronous>, transform_indices = @transform_1, window_bounds = array<i64: 128, 256>}, {pipeline_mode = #tpu.pipeline_mode<synchronous>, transform_indices = @transform_2, window_bounds = array<i64: 1, 256>}, {pipeline_mode = #tpu.pipeline_mode<synchronous>, transform_indices = @transform_3, window_bounds = array<i64: 256, 256>}, {pipeline_mode = #tpu.pipeline_mode<synchronous>, transform_indices = @transform_4, window_bounds = array<i64: 1, 256>}, {pipeline_mode = #tpu.pipeline_mode<synchronous>, transform_indices = @transform_5, window_bounds = array<i64: 256, 256>}, {pipeline_mode = #tpu.pipeline_mode<synchronous>, transform_indices = @transform_6, window_bounds = array<i64: 1, 256>}, {pipeline_mode = #tpu.pipeline_mode<synchronous>, transform_indices = @transform_7, window_bounds = array<i64: 256, 256>}, {pipeline_mode = #tpu.pipeline_mode<synchronous>, transform_indices = @transform_8, window_bounds = array<i64: 1, 256>}, {pipeline_mode = #tpu.pipeline_mode<synchronous>, transform_indices = @transform_9, window_bounds = array<i64: 256, 256>}, {pipeline_mode = #tpu.pipeline_mode<synchronous>, transform_indices = @transform_10, window_bounds = array<i64: 1, 256>}, {pipeline_mode = #tpu.pipeline_mode<synchronous>, transform_indices = @transform_11, window_bounds = array<i64: 256, 256>}, {pipeline_mode = #tpu.pipeline_mode<synchronous>, transform_indices = @transform_12, window_bounds = array<i64: 1, 256>}, {pipeline_mode = #tpu.pipeline_mode<synchronous>, transform_indices = @transform_13, window_bounds = array<i64: 256, 128>}, {pipeline_mode = #tpu.pipeline_mode<synchronous>, transform_indices = @transform_14, window_bounds = array<i64: 1, 128>}, {transform_indices = @transform_15, window_bounds = array<i64: 8, 128>}]} {
    %c0 = arith.constant 0 : index
    %c0_0 = arith.constant 0 : index
    %0 = vector.load %arg1[%c0, %c0_0] : memref<8x128xf32, #tpu.memory_space<vmem>>, vector<8x128xf32>
    %1 = arith.truncf %0 : vector<8x128xf32> to vector<8x128xbf16>
    %c0_1 = arith.constant 0 : index
    %c0_2 = arith.constant 0 : index
    %2 = vector.load %arg2[%c0_1, %c0_2] : memref<128x256xbf16, #tpu.memory_space<vmem>>, vector<128x256xbf16>
    %cst = arith.constant dense<0.000000e+00> : vector<8x256xf32>
    %3 = tpu.matmul %1, %2, %cst {dimension_numbers = #tpu.dot_dimension_numbers<[1], [0], [0], [1], [0, 0, 1, 1], [], []>} : vector<8x128xbf16>, vector<128x256xbf16>, vector<8x256xf32> -> vector<8x256xf32>
    %4 = arith.truncf %3 : vector<8x256xf32> to vector<8x256xbf16>
    %c0_3 = arith.constant 0 : index
    %c0_4 = arith.constant 0 : index
    %5 = vector.load %arg3[%c0_3, %c0_4] : memref<1x256xbf16, #tpu.memory_space<vmem>>, vector<1x256xbf16>
    %6 = vector.broadcast %5 : vector<1x256xbf16> to vector<8x256xbf16>
    %7 = arith.addf %4, %6 : vector<8x256xbf16>
    %cst_5 = arith.constant 0.000000e+00 : bf16
    %8 = vector.broadcast %cst_5 : bf16 to vector<8x256xbf16>
    %9 = arith.maximumf %7, %8 : vector<8x256xbf16>
    %c0_6 = arith.constant 0 : index
    %c0_7 = arith.constant 0 : index
    %10 = vector.load %arg4[%c0_6, %c0_7] : memref<256x256xbf16, #tpu.memory_space<vmem>>, vector<256x256xbf16>
    %cst_8 = arith.constant dense<0.000000e+00> : vector<8x256xf32>
    %11 = tpu.matmul %9, %10, %cst_8 {dimension_numbers = #tpu.dot_dimension_numbers<[1], [0], [0], [1], [0, 0, 1, 1], [], []>} : vector<8x256xbf16>, vector<256x256xbf16>, vector<8x256xf32> -> vector<8x256xf32>
    %12 = arith.truncf %11 : vector<8x256xf32> to vector<8x256xbf16>
    %c0_9 = arith.constant 0 : index
    %c0_10 = arith.constant 0 : index
    %13 = vector.load %arg5[%c0_9, %c0_10] : memref<1x256xbf16, #tpu.memory_space<vmem>>, vector<1x256xbf16>
    %14 = vector.broadcast %13 : vector<1x256xbf16> to vector<8x256xbf16>
    %15 = arith.addf %12, %14 : vector<8x256xbf16>
    %cst_11 = arith.constant 0.000000e+00 : bf16
    %16 = vector.broadcast %cst_11 : bf16 to vector<8x256xbf16>
    %17 = arith.maximumf %15, %16 : vector<8x256xbf16>
    %c0_12 = arith.constant 0 : index
    %c0_13 = arith.constant 0 : index
    %18 = vector.load %arg6[%c0_12, %c0_13] : memref<256x256xbf16, #tpu.memory_space<vmem>>, vector<256x256xbf16>
    %cst_14 = arith.constant dense<0.000000e+00> : vector<8x256xf32>
    %19 = tpu.matmul %17, %18, %cst_14 {dimension_numbers = #tpu.dot_dimension_numbers<[1], [0], [0], [1], [0, 0, 1, 1], [], []>} : vector<8x256xbf16>, vector<256x256xbf16>, vector<8x256xf32> -> vector<8x256xf32>
    %20 = arith.truncf %19 : vector<8x256xf32> to vector<8x256xbf16>
    %c0_15 = arith.constant 0 : index
    %c0_16 = arith.constant 0 : index
    %21 = vector.load %arg7[%c0_15, %c0_16] : memref<1x256xbf16, #tpu.memory_space<vmem>>, vector<1x256xbf16>
    %22 = vector.broadcast %21 : vector<1x256xbf16> to vector<8x256xbf16>
    %23 = arith.addf %20, %22 : vector<8x256xbf16>
    %cst_17 = arith.constant 0.000000e+00 : bf16
    %24 = vector.broadcast %cst_17 : bf16 to vector<8x256xbf16>
    %25 = arith.maximumf %23, %24 : vector<8x256xbf16>
    %c0_18 = arith.constant 0 : index
    %c0_19 = arith.constant 0 : index
    %26 = vector.load %arg8[%c0_18, %c0_19] : memref<256x256xbf16, #tpu.memory_space<vmem>>, vector<256x256xbf16>
    %cst_20 = arith.constant dense<0.000000e+00> : vector<8x256xf32>
    %27 = tpu.matmul %25, %26, %cst_20 {dimension_numbers = #tpu.dot_dimension_numbers<[1], [0], [0], [1], [0, 0, 1, 1], [], []>} : vector<8x256xbf16>, vector<256x256xbf16>, vector<8x256xf32> -> vector<8x256xf32>
    %28 = arith.truncf %27 : vector<8x256xf32> to vector<8x256xbf16>
    %c0_21 = arith.constant 0 : index
    %c0_22 = arith.constant 0 : index
    %29 = vector.load %arg9[%c0_21, %c0_22] : memref<1x256xbf16, #tpu.memory_space<vmem>>, vector<1x256xbf16>
    %30 = vector.broadcast %29 : vector<1x256xbf16> to vector<8x256xbf16>
    %31 = arith.addf %28, %30 : vector<8x256xbf16>
    %cst_23 = arith.constant 0.000000e+00 : bf16
    %32 = vector.broadcast %cst_23 : bf16 to vector<8x256xbf16>
    %33 = arith.maximumf %31, %32 : vector<8x256xbf16>
    %c0_24 = arith.constant 0 : index
    %c0_25 = arith.constant 0 : index
    %34 = vector.load %arg10[%c0_24, %c0_25] : memref<256x256xbf16, #tpu.memory_space<vmem>>, vector<256x256xbf16>
    %cst_26 = arith.constant dense<0.000000e+00> : vector<8x256xf32>
    %35 = tpu.matmul %33, %34, %cst_26 {dimension_numbers = #tpu.dot_dimension_numbers<[1], [0], [0], [1], [0, 0, 1, 1], [], []>} : vector<8x256xbf16>, vector<256x256xbf16>, vector<8x256xf32> -> vector<8x256xf32>
    %36 = arith.truncf %35 : vector<8x256xf32> to vector<8x256xbf16>
    %c0_27 = arith.constant 0 : index
    %c0_28 = arith.constant 0 : index
    %37 = vector.load %arg11[%c0_27, %c0_28] : memref<1x256xbf16, #tpu.memory_space<vmem>>, vector<1x256xbf16>
    %38 = vector.broadcast %37 : vector<1x256xbf16> to vector<8x256xbf16>
    %39 = arith.addf %36, %38 : vector<8x256xbf16>
    %cst_29 = arith.constant 0.000000e+00 : bf16
    %40 = vector.broadcast %cst_29 : bf16 to vector<8x256xbf16>
    %41 = arith.maximumf %39, %40 : vector<8x256xbf16>
    %c0_30 = arith.constant 0 : index
    %c0_31 = arith.constant 0 : index
    %42 = vector.load %arg12[%c0_30, %c0_31] : memref<256x256xbf16, #tpu.memory_space<vmem>>, vector<256x256xbf16>
    %cst_32 = arith.constant dense<0.000000e+00> : vector<8x256xf32>
    %43 = tpu.matmul %41, %42, %cst_32 {dimension_numbers = #tpu.dot_dimension_numbers<[1], [0], [0], [1], [0, 0, 1, 1], [], []>} : vector<8x256xbf16>, vector<256x256xbf16>, vector<8x256xf32> -> vector<8x256xf32>
    %44 = arith.truncf %43 : vector<8x256xf32> to vector<8x256xbf16>
    %c0_33 = arith.constant 0 : index
    %c0_34 = arith.constant 0 : index
    %45 = vector.load %arg13[%c0_33, %c0_34] : memref<1x256xbf16, #tpu.memory_space<vmem>>, vector<1x256xbf16>
    %46 = vector.broadcast %45 : vector<1x256xbf16> to vector<8x256xbf16>
    %47 = arith.addf %44, %46 : vector<8x256xbf16>
    %cst_35 = arith.constant 0.000000e+00 : bf16
    %48 = vector.broadcast %cst_35 : bf16 to vector<8x256xbf16>
    %49 = arith.maximumf %47, %48 : vector<8x256xbf16>
    %c0_36 = arith.constant 0 : index
    %c0_37 = arith.constant 0 : index
    %50 = vector.load %arg14[%c0_36, %c0_37] : memref<256x128xbf16, #tpu.memory_space<vmem>>, vector<256x128xbf16>
    %cst_38 = arith.constant dense<0.000000e+00> : vector<8x128xf32>
    %51 = tpu.matmul %49, %50, %cst_38 {dimension_numbers = #tpu.dot_dimension_numbers<[1], [0], [0], [1], [0, 0, 1, 1], [], []>} : vector<8x256xbf16>, vector<256x128xbf16>, vector<8x128xf32> -> vector<8x128xf32>
    %52 = arith.truncf %51 : vector<8x128xf32> to vector<8x128xbf16>
    %c0_39 = arith.constant 0 : index
    %c0_40 = arith.constant 0 : index
    %53 = vector.load %arg15[%c0_39, %c0_40] : memref<1x128xbf16, #tpu.memory_space<vmem>>, vector<1x128xbf16>
    %54 = vector.broadcast %53 : vector<1x128xbf16> to vector<8x128xbf16>
    %55 = arith.addf %52, %54 : vector<8x128xbf16>
    %cst_41 = arith.constant 0.000000e+00 : bf16
    %56 = vector.broadcast %cst_41 : bf16 to vector<8x128xbf16>
    %57 = arith.maximumf %55, %56 : vector<8x128xbf16>
    %58 = arith.extf %57 : vector<8x128xbf16> to vector<8x128xf32>
    %59 = tpu.iota {dimensions = array<i32: 1>} : vector<8x128xi32>
    %c2_i32 = arith.constant 2 : i32
    %60 = vector.broadcast %c2_i32 : i32 to vector<8x128xi32>
    %61 = arith.cmpi slt, %59, %60 : vector<8x128xi32>
    %cst_42 = arith.constant 0xFF800000 : f32
    %62 = vector.broadcast %cst_42 : f32 to vector<8x128xf32>
    %63 = arith.select %61, %58, %62 : vector<8x128xi1>, vector<8x128xf32>
    %cst_43 = arith.constant dense<0xFF800000> : vector<8xf32>
    %64 = vector.multi_reduction <maximumf>, %63, %cst_43 [1] : vector<8x128xf32> to vector<8xf32>
    %65 = vector.shape_cast %64 : vector<8xf32> to vector<8x1xf32>
    %66 = vector.broadcast %65 : vector<8x1xf32> to vector<8x128xf32>
    %67 = arith.subf %63, %66 : vector<8x128xf32>
    %68 = math.exp %67 : vector<8x128xf32>
    %cst_44 = arith.constant dense<0.000000e+00> : vector<8xf32>
    %69 = vector.multi_reduction <add>, %68, %cst_44 [1] : vector<8x128xf32> to vector<8xf32>
    %70 = vector.shape_cast %69 : vector<8xf32> to vector<8x1xf32>
    %71 = vector.broadcast %70 : vector<8x1xf32> to vector<8x128xf32>
    %72 = arith.divf %68, %71 : vector<8x128xf32>
    %73 = arith.truncf %72 : vector<8x128xf32> to vector<8x128xbf16>
    %c0_45 = arith.constant 0 : index
    %c0_46 = arith.constant 0 : index
    %74 = vector.load %arg16[%c0_45, %c0_46] : memref<8x128xbf16, #tpu.memory_space<vmem>>, vector<8x128xbf16>
    tpu.vector_store %arg16[%c0_45, %c0_46], %73 {strides = array<i32>} : memref<8x128xbf16, #tpu.memory_space<vmem>>, vector<8x128xbf16>,
    return
  }
  func.func @transform_0(%arg0: i32) -> (i32, i32) {
    %c0_i32 = arith.constant 0 : i32
    %c0_i32_0 = arith.constant 0 : i32
    return %arg0, %c0_i32 : i32, i32
  }
  func.func @transform_1(%arg0: i32) -> (i32, i32) {
    %c0_i32 = arith.constant 0 : i32
    %c0_i32_0 = arith.constant 0 : i32
    %c0_i32_1 = arith.constant 0 : i32
    return %c0_i32, %c0_i32_0 : i32, i32
  }
  func.func @transform_2(%arg0: i32) -> (i32, i32) {
    %c0_i32 = arith.constant 0 : i32
    %c0_i32_0 = arith.constant 0 : i32
    %c0_i32_1 = arith.constant 0 : i32
    return %c0_i32, %c0_i32_0 : i32, i32
  }
  func.func @transform_3(%arg0: i32) -> (i32, i32) {
    %c0_i32 = arith.constant 0 : i32
    %c0_i32_0 = arith.constant 0 : i32
    %c0_i32_1 = arith.constant 0 : i32
    return %c0_i32, %c0_i32_0 : i32, i32
  }
  func.func @transform_4(%arg0: i32) -> (i32, i32) {
    %c0_i32 = arith.constant 0 : i32
    %c0_i32_0 = arith.constant 0 : i32
    %c0_i32_1 = arith.constant 0 : i32
    return %c0_i32, %c0_i32_0 : i32, i32
  }
  func.func @transform_5(%arg0: i32) -> (i32, i32) {
    %c0_i32 = arith.constant 0 : i32
    %c0_i32_0 = arith.constant 0 : i32
    %c0_i32_1 = arith.constant 0 : i32
    return %c0_i32, %c0_i32_0 : i32, i32
  }
  func.func @transform_6(%arg0: i32) -> (i32, i32) {
    %c0_i32 = arith.constant 0 : i32
    %c0_i32_0 = arith.constant 0 : i32
    %c0_i32_1 = arith.constant 0 : i32
    return %c0_i32, %c0_i32_0 : i32, i32
  }
  func.func @transform_7(%arg0: i32) -> (i32, i32) {
    %c0_i32 = arith.constant 0 : i32
    %c0_i32_0 = arith.constant 0 : i32
    %c0_i32_1 = arith.constant 0 : i32
    return %c0_i32, %c0_i32_0 : i32, i32
  }
  func.func @transform_8(%arg0: i32) -> (i32, i32) {
    %c0_i32 = arith.constant 0 : i32
    %c0_i32_0 = arith.constant 0 : i32
    %c0_i32_1 = arith.constant 0 : i32
    return %c0_i32, %c0_i32_0 : i32, i32
  }
  func.func @transform_9(%arg0: i32) -> (i32, i32) {
    %c0_i32 = arith.constant 0 : i32
    %c0_i32_0 = arith.constant 0 : i32
    %c0_i32_1 = arith.constant 0 : i32
    return %c0_i32, %c0_i32_0 : i32, i32
  }
  func.func @transform_10(%arg0: i32) -> (i32, i32) {
    %c0_i32 = arith.constant 0 : i32
    %c0_i32_0 = arith.constant 0 : i32
    %c0_i32_1 = arith.constant 0 : i32
    return %c0_i32, %c0_i32_0 : i32, i32
  }
  func.func @transform_11(%arg0: i32) -> (i32, i32) {
    %c0_i32 = arith.constant 0 : i32
    %c0_i32_0 = arith.constant 0 : i32
    %c0_i32_1 = arith.constant 0 : i32
    return %c0_i32, %c0_i32_0 : i32, i32
  }
  func.func @transform_12(%arg0: i32) -> (i32, i32) {
    %c0_i32 = arith.constant 0 : i32
    %c0_i32_0 = arith.constant 0 : i32
    %c0_i32_1 = arith.constant 0 : i32
    return %c0_i32, %c0_i32_0 : i32, i32
  }
  func.func @transform_13(%arg0: i32) -> (i32, i32) {
    %c0_i32 = arith.constant 0 : i32
    %c0_i32_0 = arith.constant 0 : i32
    %c0_i32_1 = arith.constant 0 : i32
    return %c0_i32, %c0_i32_0 : i32, i32
  }
  func.func @transform_14(%arg0: i32) -> (i32, i32) {
    %c0_i32 = arith.constant 0 : i32
    %c0_i32_0 = arith.constant 0 : i32
    %c0_i32_1 = arith.constant 0 : i32
    return %c0_i32, %c0_i32_0 : i32, i32
  }
  func.func @transform_15(%arg0: i32) -> (i32, i32) {
    %c0_i32 = arith.constant 0 : i32
    %c0_i32_0 = arith.constant 0 : i32
    return %arg0, %c0_i32 : i32, i32
  }
}

</mosaic_0001>

<llo_original>
// kernel: tpu_custom_call.1
$region0: #{tpu_custom_call.1}
  #allocation0 [shape = 'u32[]', space=smem, size = 0x4, offset = 0x4, fixed_abs, tag = 'smem constant byte address 0x4 - core index']
  #allocation1 [shape = 'u32[144,128]{1,0:T(1,128)}', space=vmem, size = 0x12000, scoped, tag = 'internal scratch']
  %s0 = inlined_call_operand.hbm [shape: f32[8,128], index: 0, kind: input, shape index: {}]
  %s1 = inlined_call_operand.hbm [shape: bf16[128,256], index: 1, kind: input, shape index: {}]
  %s2 = inlined_call_operand.vmem [shape: bf16[1,256], index: 2, kind: input, shape index: {}]
  %s3 = inlined_call_operand.hbm [shape: bf16[256,256], index: 3, kind: input, shape index: {}]
  %s4 = inlined_call_operand.vmem [shape: bf16[1,256], index: 4, kind: input, shape index: {}]
  %s5 = inlined_call_operand.hbm [shape: bf16[256,256], index: 5, kind: input, shape index: {}]
  %s6 = inlined_call_operand.vmem [shape: bf16[1,256], index: 6, kind: input, shape index: {}]
  %s7 = inlined_call_operand.hbm [shape: bf16[256,256], index: 7, kind: input, shape index: {}]
  %s8 = inlined_call_operand.vmem [shape: bf16[1,256], index: 8, kind: input, shape index: {}]
  %s9 = inlined_call_operand.hbm [shape: bf16[256,256], index: 9, kind: input, shape index: {}]
  %s10 = inlined_call_operand.vmem [shape: bf16[1,256], index: 10, kind: input, shape index: {}]
  %s11 = inlined_call_operand.hbm [shape: bf16[256,256], index: 11, kind: input, shape index: {}]
  %s12 = inlined_call_operand.vmem [shape: bf16[1,256], index: 12, kind: input, shape index: {}]
  %s13 = inlined_call_operand.hbm [shape: bf16[256,128], index: 13, kind: input, shape index: {}]
  %s14 = inlined_call_operand.vmem [shape: bf16[1,128], index: 14, kind: input, shape index: {}]
  %s15 = inlined_call_operand.hbm [shape: bf16[8,128], index: 15, kind: output, shape index: {}]
  %s16 = sld [smem:[#allocation0]]
  $region102: #{tpu_custom_call.1} parent=0
    _
  %s18 = ssub.s32 1, %s16
  %s19 = scalar_select 0, %s18, %s16
  $region1: #{tpu_custom_call.1} parent=0
    #allocation2 [shape = 'u8[4096]{0}', space=vmem, size = 0x1000, scoped, tag = 'input window, operand 0, single buffered']
    #allocation3 [shape = 's32[1]{0}', space=sflag, size = 0x4, scoped, tag = 'scoped memory for tpu_custom_call.1']
    #allocation4 [shape = 's32[1]{0}', space=sflag, size = 0x4, scoped, tag = 'scoped memory for tpu_custom_call.1']
    #allocation5 [shape = 'u8[65536]{0}', space=vmem, size = 0x10000, scoped, tag = 'input window, operand 1, single buffered']
    #allocation6 [shape = 's32[1]{0}', space=sflag, size = 0x4, scoped, tag = 'scoped memory for tpu_custom_call.1']
    #allocation7 [shape = 'u8[131072]{0}', space=vmem, size = 0x20000, scoped, tag = 'input window, operand 3, single buffered']
    #allocation8 [shape = 'u8[131072]{0}', space=vmem, size = 0x20000, scoped, tag = 'input window, operand 5, single buffered']
    #allocation9 [shape = 's32[1]{0}', space=sflag, size = 0x4, scoped, tag = 'scoped memory for tpu_custom_call.1']
    #allocation10 [shape = 'u8[131072]{0}', space=vmem, size = 0x20000, scoped, tag = 'input window, operand 7, single buffered']
    #allocation11 [shape = 'u8[131072]{0}', space=vmem, size = 0x20000, scoped, tag = 'input window, operand 9, single buffered']
    #allocation12 [shape = 's32[1]{0}', space=sflag, size = 0x4, scoped, tag = 'scoped memory for tpu_custom_call.1']
    #allocation13 [shape = 'u8[131072]{0}', space=vmem, size = 0x20000, scoped, tag = 'input window, operand 11, single buffered']
    #allocation14 [shape = 'u8[65536]{0}', space=vmem, size = 0x10000, scoped, tag = 'input window, operand 13, single buffered']
    #allocation15 [shape = 's32[1]{0}', space=sflag, size = 0x4, scoped, tag = 'scoped memory for tpu_custom_call.1']
    #allocation16 [shape = 'u8[2048]{0}', space=vmem, size = 0x800, scoped, tag = 'output window, operand 0, single buffered']
    %20 = vsyncpa [#allocation3], 0
    %21 = vsyncpa [#allocation6], 0
    %22 = vsyncpa [#allocation9], 0
    %23 = vsyncpa [#allocation12], 0
    %24 = vsyncpa [#allocation15], 0
    %25 = vsyncpa [#allocation4], 0
    // Predicated region
    $region2: #{tpu_custom_call.1} parent=1 // pred_check
      _
    $region3: #{tpu_custom_call.1} parent=1 // pred_check_branch
      %27 = sbr.rel (0) target = $region5
    $region4: #{tpu_custom_call.1} parent=1 // pred_region
      %s29 = ssub.s32 128, 128
      %30 = vsyncadd [#allocation3], %s29
      %s32 = sshll.u32 [#allocation2], 4
      %s33 = int_to_ptr.vmem [resolvable:$true] %s32
      %35 = dma.hbm_to_vmem [thread:$0]  %s0, 128, %s33, [#allocation3]
    $region5: #{tpu_custom_call.1} parent=1 // pred_fallthru
      _
    // Predicated region
    $region6: #{tpu_custom_call.1} parent=1 // pred_check
      _
    $region7: #{tpu_custom_call.1} parent=1 // pred_check_branch
      %37 = sbr.rel (0) target = $region9
    $region8: #{tpu_custom_call.1} parent=1 // pred_region
      %s39 = ssub.s32 2048, 2048
      %40 = vsyncadd [#allocation6], %s39
      %s41 = sshll.u32 [#allocation5], 4
      %s42 = int_to_ptr.vmem [resolvable:$true] %s41
      %47 = dma.hbm_to_vmem [thread:$0]  %s1, 2048, %s42, [#allocation6], 128, 128, 8
    $region9: #{tpu_custom_call.1} parent=1 // pred_fallthru
      _
    // Predicated region
    $region10: #{tpu_custom_call.1} parent=1 // pred_check
      _
    $region11: #{tpu_custom_call.1} parent=1 // pred_check_branch
      %49 = sbr.rel (0) target = $region13
    $region12: #{tpu_custom_call.1} parent=1 // pred_region
      _
    $region13: #{tpu_custom_call.1} parent=1 // pred_fallthru
      _
    // Predicated region
    $region14: #{tpu_custom_call.1} parent=1 // pred_check
      _
    $region15: #{tpu_custom_call.1} parent=1 // pred_check_branch
      %51 = sbr.rel (0) target = $region17
    $region16: #{tpu_custom_call.1} parent=1 // pred_region
      %s53 = ssub.s32 4096, 4096
      %54 = vsyncadd [#allocation6], %s53
      %s55 = sshll.u32 [#allocation7], 4
      %s56 = int_to_ptr.vmem [resolvable:$true] %s55
      %61 = dma.hbm_to_vmem [thread:$0]  %s3, 4096, %s56, [#allocation6], 128, 128, 8
    $region17: #{tpu_custom_call.1} parent=1 // pred_fallthru
      _
    // Predicated region
    $region18: #{tpu_custom_call.1} parent=1 // pred_check
      _
    $region19: #{tpu_custom_call.1} parent=1 // pred_check_branch
      %63 = sbr.rel (0) target = $region21
    $region20: #{tpu_custom_call.1} parent=1 // pred_region
      _
    $region21: #{tpu_custom_call.1} parent=1 // pred_fallthru
      _
    // Predicated region
    $region22: #{tpu_custom_call.1} parent=1 // pred_check
      _
    $region23: #{tpu_custom_call.1} parent=1 // pred_check_branch
      %65 = sbr.rel (0) target = $region25
    $region24: #{tpu_custom_call.1} parent=1 // pred_region
      %s67 = ssub.s32 4096, 4096
      %68 = vsyncadd [#allocation9], %s67
      %s69 = sshll.u32 [#allocation8], 4
      %s70 = int_to_ptr.vmem [resolvable:$true] %s69
      %75 = dma.hbm_to_vmem [thread:$0]  %s5, 4096, %s70, [#allocation9], 128, 128, 8
    $region25: #{tpu_custom_call.1} parent=1 // pred_fallthru
      _
    // Predicated region
    $region26: #{tpu_custom_call.1} parent=1 // pred_check
      _
    $region27: #{tpu_custom_call.1} parent=1 // pred_check_branch
      %77 = sbr.rel (0) target = $region29
    $region28: #{tpu_custom_call.1} parent=1 // pred_region
      _
    $region29: #{tpu_custom_call.1} parent=1 // pred_fallthru
      _
    // Predicated region
    $region30: #{tpu_custom_call.1} parent=1 // pred_check
      _
    $region31: #{tpu_custom_call.1} parent=1 // pred_check_branch
      %79 = sbr.rel (0) target = $region33
    $region32: #{tpu_custom_call.1} parent=1 // pred_region
      %s81 = ssub.s32 4096, 4096
      %82 = vsyncadd [#allocation9], %s81
      %s83 = sshll.u32 [#allocation10], 4
      %s84 = int_to_ptr.vmem [resolvable:$true] %s83
      %89 = dma.hbm_to_vmem [thread:$0]  %s7, 4096, %s84, [#allocation9], 128, 128, 8
    $region33: #{tpu_custom_call.1} parent=1 // pred_fallthru
      _
    // Predicated region
    $region34: #{tpu_custom_call.1} parent=1 // pred_check
      _
    $region35: #{tpu_custom_call.1} parent=1 // pred_check_branch
      %91 = sbr.rel (0) target = $region37
    $region36: #{tpu_custom_call.1} parent=1 // pred_region
      _
    $region37: #{tpu_custom_call.1} parent=1 // pred_fallthru
      _
    // Predicated region
    $region38: #{tpu_custom_call.1} parent=1 // pred_check
      _
    $region39: #{tpu_custom_call.1} parent=1 // pred_check_branch
      %93 = sbr.rel (0) target = $region41
    $region40: #{tpu_custom_call.1} parent=1 // pred_region
      %s95 = ssub.s32 4096, 4096
      %96 = vsyncadd [#allocation12], %s95
      %s97 = sshll.u32 [#allocation11], 4
      %s98 = int_to_ptr.vmem [resolvable:$true] %s97
      %103 = dma.hbm_to_vmem [thread:$0]  %s9, 4096, %s98, [#allocation12], 128, 128, 8
    $region41: #{tpu_custom_call.1} parent=1 // pred_fallthru
      _
    // Predicated region
    $region42: #{tpu_custom_call.1} parent=1 // pred_check
      _
    $region43: #{tpu_custom_call.1} parent=1 // pred_check_branch
      %105 = sbr.rel (0) target = $region45
    $region44: #{tpu_custom_call.1} parent=1 // pred_region
      _
    $region45: #{tpu_custom_call.1} parent=1 // pred_fallthru
      _
    // Predicated region
    $region46: #{tpu_custom_call.1} parent=1 // pred_check
      _
    $region47: #{tpu_custom_call.1} parent=1 // pred_check_branch
      %107 = sbr.rel (0) target = $region49
    $region48: #{tpu_custom_call.1} parent=1 // pred_region
      %s109 = ssub.s32 4096, 4096
      %110 = vsyncadd [#allocation12], %s109
      %s111 = sshll.u32 [#allocation13], 4
      %s112 = int_to_ptr.vmem [resolvable:$true] %s111
      %117 = dma.hbm_to_vmem [thread:$0]  %s11, 4096, %s112, [#allocation12], 128, 128, 8
    $region49: #{tpu_custom_call.1} parent=1 // pred_fallthru
      _
    // Predicated region
    $region50: #{tpu_custom_call.1} parent=1 // pred_check
      _
    $region51: #{tpu_custom_call.1} parent=1 // pred_check_branch
      %119 = sbr.rel (0) target = $region53
    $region52: #{tpu_custom_call.1} parent=1 // pred_region
      _
    $region53: #{tpu_custom_call.1} parent=1 // pred_fallthru
      _
    // Predicated region
    $region54: #{tpu_custom_call.1} parent=1 // pred_check
      _
    $region55: #{tpu_custom_call.1} parent=1 // pred_check_branch
      %121 = sbr.rel (0) target = $region57
    $region56: #{tpu_custom_call.1} parent=1 // pred_region
      %s123 = ssub.s32 2048, 2048
      %124 = vsyncadd [#allocation15], %s123
      %s125 = sshll.u32 [#allocation14], 4
      %s126 = int_to_ptr.vmem [resolvable:$true] %s125
      %131 = dma.hbm_to_vmem [thread:$0]  %s13, 2048, %s126, [#allocation15], 64, 64, 4
    $region57: #{tpu_custom_call.1} parent=1 // pred_fallthru
      _
    // Predicated region
    $region58: #{tpu_custom_call.1} parent=1 // pred_check
      _
    $region59: #{tpu_custom_call.1} parent=1 // pred_check_branch
      %133 = sbr.rel (0) target = $region61
    $region60: #{tpu_custom_call.1} parent=1 // pred_region
      _
    $region61: #{tpu_custom_call.1} parent=1 // pred_fallthru
      _
    // Predicated region
    $region62: #{tpu_custom_call.1} parent=1 // pred_check
      _
    $region63: #{tpu_custom_call.1} parent=1 // pred_check_branch
      %135 = sbr.rel (0) target = $region65
    $region64: #{tpu_custom_call.1} parent=1 // pred_region
      %136 = dma.done [#allocation3], 128
    $region65: #{tpu_custom_call.1} parent=1 // pred_fallthru
      _
    // Predicated region
    $region66: #{tpu_custom_call.1} parent=1 // pred_check
      _
    $region67: #{tpu_custom_call.1} parent=1 // pred_check_branch
      %138 = sbr.rel (0) target = $region69
    $region68: #{tpu_custom_call.1} parent=1 // pred_region
      %139 = dma.done [#allocation6], 2048
    $region69: #{tpu_custom_call.1} parent=1 // pred_fallthru
      _
    // Predicated region
    $region70: #{tpu_custom_call.1} parent=1 // pred_check
      _
    $region71: #{tpu_custom_call.1} parent=1 // pred_check_branch
      %141 = sbr.rel (0) target = $region73
    $region72: #{tpu_custom_call.1} parent=1 // pred_region
      %142 = dma.done [#allocation6], 4096
    $region73: #{tpu_custom_call.1} parent=1 // pred_fallthru
      _
    // Predicated region
    $region74: #{tpu_custom_call.1} parent=1 // pred_check
      _
    $region75: #{tpu_custom_call.1} parent=1 // pred_check_branch
      %144 = sbr.rel (0) target = $region77
    $region76: #{tpu_custom_call.1} parent=1 // pred_region
      %145 = dma.done [#allocation9], 4096
    $region77: #{tpu_custom_call.1} parent=1 // pred_fallthru
      _
    // Predicated region
    $region78: #{tpu_custom_call.1} parent=1 // pred_check
      _
    $region79: #{tpu_custom_call.1} parent=1 // pred_check_branch
      %147 = sbr.rel (0) target = $region81
    $region80: #{tpu_custom_call.1} parent=1 // pred_region
      %148 = dma.done [#allocation9], 4096
    $region81: #{tpu_custom_call.1} parent=1 // pred_fallthru
      _
    // Predicated region
    $region82: #{tpu_custom_call.1} parent=1 // pred_check
      _
    $region83: #{tpu_custom_call.1} parent=1 // pred_check_branch
      %150 = sbr.rel (0) target = $region85
    $region84: #{tpu_custom_call.1} parent=1 // pred_region
      %151 = dma.done [#allocation12], 4096
    $region85: #{tpu_custom_call.1} parent=1 // pred_fallthru
      _
    // Predicated region
    $region86: #{tpu_custom_call.1} parent=1 // pred_check
      _
    $region87: #{tpu_custom_call.1} parent=1 // pred_check_branch
      %153 = sbr.rel (0) target = $region89
    $region88: #{tpu_custom_call.1} parent=1 // pred_region
      %154 = dma.done [#allocation12], 4096
    $region89: #{tpu_custom_call.1} parent=1 // pred_fallthru
      _
    // Predicated region
    $region90: #{tpu_custom_call.1} parent=1 // pred_check
      _
    $region91: #{tpu_custom_call.1} parent=1 // pred_check_branch
      %156 = sbr.rel (0) target = $region93
    $region92: #{tpu_custom_call.1} parent=1 // pred_region
      %157 = dma.done [#allocation15], 2048
    $region93: #{tpu_custom_call.1} parent=1 // pred_fallthru
      _
    %v159 = vld [vmem:[#allocation2] sm:$0xff]
    %v160 = vpack.c.bf16 %v159, %v159
    %v161 = vld [vmem:[#allocation5] sm:$0xff]
    %v162 = vld [vmem:[#allocation5 + $0x8] sm:$0xff]
    %v163 = vld [vmem:[#allocation5 + $0x10] sm:$0xff]
    %v164 = vld [vmem:[#allocation5 + $0x18] sm:$0xff]
    %v165 = vld [vmem:[#allocation5 + $0x20] sm:$0xff]
    %v166 = vld [vmem:[#allocation5 + $0x28] sm:$0xff]
    %v167 = vld [vmem:[#allocation5 + $0x30] sm:$0xff]
    %v168 = vld [vmem:[#allocation5 + $0x38] sm:$0xff]
    %v169 = vld [vmem:[#allocation5 + $0x40] sm:$0xff]
    %v170 = vld [vmem:[#allocation5 + $0x48] sm:$0xff]
    %v171 = vld [vmem:[#allocation5 + $0x50] sm:$0xff]
    %v172 = vld [vmem:[#allocation5 + $0x58] sm:$0xff]
    %v173 = vld [vmem:[#allocation5 + $0x60] sm:$0xff]
    %v174 = vld [vmem:[#allocation5 + $0x68] sm:$0xff]
    %v175 = vld [vmem:[#allocation5 + $0x70] sm:$0xff]
    %v176 = vld [vmem:[#allocation5 + $0x78] sm:$0xff]
    %v193 = vunpack.c.l.b16 %v161
    %v194 = vunpack.c.h.b16 %v161
    %v195 = vunpack.c.l.b16 %v162
    %v196 = vunpack.c.h.b16 %v162
    %v197 = vunpack.c.l.b16 %v163
    %v198 = vunpack.c.h.b16 %v163
    %v199 = vunpack.c.l.b16 %v164
    %v200 = vunpack.c.h.b16 %v164
    %v201 = vunpack.c.l.b16 %v165
    %v202 = vunpack.c.h.b16 %v165
    %v203 = vunpack.c.l.b16 %v166
    %v204 = vunpack.c.h.b16 %v166
    %v205 = vunpack.c.l.b16 %v167
    %v206 = vunpack.c.h.b16 %v167
    %v207 = vunpack.c.l.b16 %v168
    %v208 = vunpack.c.h.b16 %v168
    %v209 = vunpack.c.l.b16 %v169
    %v210 = vunpack.c.h.b16 %v169
    %v211 = vunpack.c.l.b16 %v170
    %v212 = vunpack.c.h.b16 %v170
    %v213 = vunpack.c.l.b16 %v171
    %v214 = vunpack.c.h.b16 %v171
    %v215 = vunpack.c.l.b16 %v172
    %v216 = vunpack.c.h.b16 %v172
    %v217 = vunpack.c.l.b16 %v173
    %v218 = vunpack.c.h.b16 %v173
    %v219 = vunpack.c.l.b16 %v174
    %v220 = vunpack.c.h.b16 %v174
    %v221 = vunpack.c.l.b16 %v175
    %v222 = vunpack.c.h.b16 %v175
    %v223 = vunpack.c.l.b16 %v176
    %v224 = vunpack.c.h.b16 %v176
    %v225 = vpack.c.b16 %v195, %v193
    %v226 = vpack.c.b16 %v196, %v194
    %v227 = vpack.c.b16 %v199, %v197
    %v228 = vpack.c.b16 %v200, %v198
    %v229 = vpack.c.b16 %v203, %v201
    %v230 = vpack.c.b16 %v204, %v202
    %v231 = vpack.c.b16 %v207, %v205
    %v232 = vpack.c.b16 %v208, %v206
    %v233 = vpack.c.b16 %v211, %v209
    %v234 = vpack.c.b16 %v212, %v210
    %v235 = vpack.c.b16 %v215, %v213
    %v236 = vpack.c.b16 %v216, %v214
    %v237 = vpack.c.b16 %v219, %v217
    %v238 = vpack.c.b16 %v220, %v218
    %v239 = vpack.c.b16 %v223, %v221
    %v240 = vpack.c.b16 %v224, %v222
    %257 = vmatprep.subr.bf16.mxu0 %v226
    %258 = vmatpush1.bf16.msra.mxu0 %v225
    %259 = vmatprep.subr.bf16.mxu0 %v228
    %260 = vmatpush1.bf16.msra.mxu0 %v227
    %261 = vmatprep.subr.bf16.mxu0 %v230
    %262 = vmatpush1.bf16.msra.mxu0 %v229
    %263 = vmatprep.subr.bf16.mxu0 %v232
    %264 = vmatpush1.bf16.msra.mxu0 %v231
    %265 = vmatprep.subr.bf16.mxu0 %v234
    %266 = vmatpush1.bf16.msra.mxu0 %v233
    %267 = vmatprep.subr.bf16.mxu0 %v236
    %268 = vmatpush1.bf16.msra.mxu0 %v235
    %269 = vmatprep.subr.bf16.mxu0 %v238
    %270 = vmatpush1.bf16.msra.mxu0 %v237
    %271 = vmatprep.subr.bf16.mxu0 %v240
    %272 = vmatpush1.bf16.msra.mxu0 %v239
    %273 = vmatprep.subr.bf16.mxu0 0
    %274 = vmatpush1.bf16.msra.mxu0 0
    %275 = vmatprep.subr.bf16.mxu0 0
    %276 = vmatpush1.bf16.msra.mxu0 0
    %277 = vmatprep.subr.bf16.mxu0 0
    %278 = vmatpush1.bf16.msra.mxu0 0
    %279 = vmatprep.subr.bf16.mxu0 0
    %280 = vmatpush1.bf16.msra.mxu0 0
    %281 = vmatprep.subr.bf16.mxu0 0
    %282 = vmatpush1.bf16.msra.mxu0 0
    %283 = vmatprep.subr.bf16.mxu0 0
    %284 = vmatpush1.bf16.msra.mxu0 0
    %285 = vmatprep.subr.bf16.mxu0 0
    %286 = vmatpush1.bf16.msra.mxu0 0
    %287 = vmatprep.subr.bf16.mxu0 0
    %288 = vmatpush1.bf16.msra.mxu0 0
    %289 = vmatprep.mubr.bf16.mxu0 0
    %290 = vmatmul.mubr.bf16.gmra.mrb[0].mxu0 %v160
    %v291 = vpop.f32.mrb[0].mxu0
    %v292 = vadd.f32 0.0, %v291
    %v293 = vpop.f32.mrb[0].mxu0
    %v294 = vadd.f32 0.0, %v293
    %v295 = vpop.f32.mrb[0].mxu0
    %v296 = vpop.f32.mrb[0].mxu0
    %297 = vdwg.mxu0
    %v298 = vpack.c.bf16 %v292, %v292
    %v299 = vpack.c.bf16 %v294, %v294
    %v300 = vld [vmem:[%s2] sm:$0x3]
    %v303 = vunpack.c.l.s4 1966171168
    %v304 = vunpack.c.0.s8 %v303
    %v305 = vlaneseq
    %v306 = vshrl.u32 %v305, 7
    %v307 = vsub.s32 %v304, %v306
    %v308 = vrot.slane %v300, %v307
    %v309 = vcombine.high %v308, %v308
    %v311 = vunpack.c.l.s4 1966171168
    %v312 = vunpack.c.0.s8 %v311
    %v313 = vlaneseq
    %v314 = vshrl.u32 %v313, 7
    %v315 = vsub.s32 %v312, %v314
    %v316 = vrot.slane %v308, %v315
    %v318 = vunpack.c.l.s4 1966171168
    %v319 = vunpack.c.0.s8 %v318
    %v320 = vlaneseq
    %v321 = vshrl.u32 %v320, 7
    %v322 = vsub.s32 %v319, %v321
    %v323 = vrot.slane %v309, %v322
    %v325 = vpack.i.b16 %v316, %v316
    %v327 = vlaneseq
    %v328 = vshrl.u32 %v327, 7
    %v329 = vsub.s32 0, %v328
    %v330 = vrot.slane %v325, %v329
    %v332 = vpack.i.b16 %v323, %v323
    %v334 = vlaneseq
    %v335 = vshrl.u32 %v334, 7
    %v336 = vsub.s32 0, %v335
    %v337 = vrot.slane %v332, %v336
    %v338 = vadd.bf16 %v298, %v330
    %v339 = vadd.bf16 %v299, %v337
    %v340 = vmax.bf16 %v338, 0
    %v341 = vmax.bf16 %v339, 0
    %v342 = vld [vmem:[#allocation7] sm:$0xff]
    %v343 = vld [vmem:[#allocation7 + $0x8] sm:$0xff]
    %v344 = vld [vmem:[#allocation7 + $0x10] sm:$0xff]
    %v345 = vld [vmem:[#allocation7 + $0x18] sm:$0xff]
    %v346 = vld [vmem:[#allocation7 + $0x20] sm:$0xff]
    %v347 = vld [vmem:[#allocation7 + $0x28] sm:$0xff]
    %v348 = vld [vmem:[#allocation7 + $0x30] sm:$0xff]
    %v349 = vld [vmem:[#allocation7 + $0x38] sm:$0xff]
    %v350 = vld [vmem:[#allocation7 + $0x40] sm:$0xff]
    %v351 = vld [vmem:[#allocation7 + $0x48] sm:$0xff]
    %v352 = vld [vmem:[#allocation7 + $0x50] sm:$0xff]
    %v353 = vld [vmem:[#allocation7 + $0x58] sm:$0xff]
    %v354 = vld [vmem:[#allocation7 + $0x60] sm:$0xff]
    %v355 = vld [vmem:[#allocation7 + $0x68] sm:$0xff]
    %v356 = vld [vmem:[#allocation7 + $0x70] sm:$0xff]
    %v357 = vld [vmem:[#allocation7 + $0x78] sm:$0xff]
    %v358 = vld [vmem:[#allocation7 + $0x80] sm:$0xff]
    %v359 = vld [vmem:[#allocation7 + $0x88] sm:$0xff]
    %v360 = vld [vmem:[#allocation7 + $0x90] sm:$0xff]
    %v361 = vld [vmem:[#allocation7 + $0x98] sm:$0xff]
    %v362 = vld [vmem:[#allocation7 + $0xa0] sm:$0xff]
    %v363 = vld [vmem:[#allocation7 + $0xa8] sm:$0xff]
    %v364 = vld [vmem:[#allocation7 + $0xb0] sm:$0xff]
    %v365 = vld [vmem:[#allocation7 + $0xb8] sm:$0xff]
    %v366 = vld [vmem:[#allocation7 + $0xc0] sm:$0xff]
    %v367 = vld [vmem:[#allocation7 + $0xc8] sm:$0xff]
    %v368 = vld [vmem:[#allocation7 + $0xd0] sm:$0xff]
    %v369 = vld [vmem:[#allocation7 + $0xd8] sm:$0xff]
    %v370 = vld [vmem:[#allocation7 + $0xe0] sm:$0xff]
    %v371 = vld [vmem:[#allocation7 + $0xe8] sm:$0xff]
    %v372 = vld [vmem:[#allocation7 + $0xf0] sm:$0xff]
    %v373 = vld [vmem:[#allocation7 + $0xf8] sm:$0xff]
    %v406 = vunpack.c.l.b16 %v342
    %v407 = vunpack.c.h.b16 %v342
    %v408 = vunpack.c.l.b16 %v343
    %v409 = vunpack.c.h.b16 %v343
    %v410 = vunpack.c.l.b16 %v344
    %v411 = vunpack.c.h.b16 %v344
    %v412 = vunpack.c.l.b16 %v345
    %v413 = vunpack.c.h.b16 %v345
    %v414 = vunpack.c.l.b16 %v346
    %v415 = vunpack.c.h.b16 %v346
    %v416 = vunpack.c.l.b16 %v347
    %v417 = vunpack.c.h.b16 %v347
    %v418 = vunpack.c.l.b16 %v348
    %v419 = vunpack.c.h.b16 %v348
    %v420 = vunpack.c.l.b16 %v349
    %v421 = vunpack.c.h.b16 %v349
    %v422 = vunpack.c.l.b16 %v350
    %v423 = vunpack.c.h.b16 %v350
    %v424 = vunpack.c.l.b16 %v351
    %v425 = vunpack.c.h.b16 %v351
    %v426 = vunpack.c.l.b16 %v352
    %v427 = vunpack.c.h.b16 %v352
    %v428 = vunpack.c.l.b16 %v353
    %v429 = vunpack.c.h.b16 %v353
    %v430 = vunpack.c.l.b16 %v354
    %v431 = vunpack.c.h.b16 %v354
    %v432 = vunpack.c.l.b16 %v355
    %v433 = vunpack.c.h.b16 %v355
    %v434 = vunpack.c.l.b16 %v356
    %v435 = vunpack.c.h.b16 %v356
    %v436 = vunpack.c.l.b16 %v357
    %v437 = vunpack.c.h.b16 %v357
    %v438 = vunpack.c.l.b16 %v358
    %v439 = vunpack.c.h.b16 %v358
    %v440 = vunpack.c.l.b16 %v359
    %v441 = vunpack.c.h.b16 %v359
    %v442 = vunpack.c.l.b16 %v360
    %v443 = vunpack.c.h.b16 %v360
    %v444 = vunpack.c.l.b16 %v361
    %v445 = vunpack.c.h.b16 %v361
    %v446 = vunpack.c.l.b16 %v362
    %v447 = vunpack.c.h.b16 %v362
    %v448 = vunpack.c.l.b16 %v363
    %v449 = vunpack.c.h.b16 %v363
    %v450 = vunpack.c.l.b16 %v364
    %v451 = vunpack.c.h.b16 %v364
    %v452 = vunpack.c.l.b16 %v365
    %v453 = vunpack.c.h.b16 %v365
    %v454 = vunpack.c.l.b16 %v366
    %v455 = vunpack.c.h.b16 %v366
    %v456 = vunpack.c.l.b16 %v367
    %v457 = vunpack.c.h.b16 %v367
    %v458 = vunpack.c.l.b16 %v368
    %v459 = vunpack.c.h.b16 %v368
    %v460 = vunpack.c.l.b16 %v369
    %v461 = vunpack.c.h.b16 %v369
    %v462 = vunpack.c.l.b16 %v370
    %v463 = vunpack.c.h.b16 %v370
    %v464 = vunpack.c.l.b16 %v371
    %v465 = vunpack.c.h.b16 %v371
    %v466 = vunpack.c.l.b16 %v372
    %v467 = vunpack.c.h.b16 %v372
    %v468 = vunpack.c.l.b16 %v373
    %v469 = vunpack.c.h.b16 %v373
    %v470 = vpack.c.b16 %v408, %v406
    %v471 = vpack.c.b16 %v409, %v407
    %v472 = vpack.c.b16 %v412, %v410
    %v473 = vpack.c.b16 %v413, %v411
    %v474 = vpack.c.b16 %v416, %v414
    %v475 = vpack.c.b16 %v417, %v415
    %v476 = vpack.c.b16 %v420, %v418
    %v477 = vpack.c.b16 %v421, %v419
    %v478 = vpack.c.b16 %v424, %v422
    %v479 = vpack.c.b16 %v425, %v423
    %v480 = vpack.c.b16 %v428, %v426
    %v481 = vpack.c.b16 %v429, %v427
    %v482 = vpack.c.b16 %v432, %v430
    %v483 = vpack.c.b16 %v433, %v431
    %v484 = vpack.c.b16 %v436, %v434
    %v485 = vpack.c.b16 %v437, %v435
    %v486 = vpack.c.b16 %v440, %v438
    %v487 = vpack.c.b16 %v441, %v439
    %v488 = vpack.c.b16 %v444, %v442
    %v489 = vpack.c.b16 %v445, %v443
    %v490 = vpack.c.b16 %v448, %v446
    %v491 = vpack.c.b16 %v449, %v447
    %v492 = vpack.c.b16 %v452, %v450
    %v493 = vpack.c.b16 %v453, %v451
    %v494 = vpack.c.b16 %v456, %v454
    %v495 = vpack.c.b16 %v457, %v455
    %v496 = vpack.c.b16 %v460, %v458
    %v497 = vpack.c.b16 %v461, %v459
    %v498 = vpack.c.b16 %v464, %v462
    %v499 = vpack.c.b16 %v465, %v463
    %v500 = vpack.c.b16 %v468, %v466
    %v501 = vpack.c.b16 %v469, %v467
    %534 = vmatprep.subr.bf16.mxu0 %v471
    %535 = vmatpush1.bf16.msra.mxu0 %v470
    %536 = vmatprep.subr.bf16.mxu0 %v473
    %537 = vmatpush1.bf16.msra.mxu0 %v472
    %538 = vmatprep.subr.bf16.mxu0 %v475
    %539 = vmatpush1.bf16.msra.mxu0 %v474
    %540 = vmatprep.subr.bf16.mxu0 %v477
    %541 = vmatpush1.bf16.msra.mxu0 %v476
    %542 = vmatprep.subr.bf16.mxu0 %v479
    %543 = vmatpush1.bf16.msra.mxu0 %v478
    %544 = vmatprep.subr.bf16.mxu0 %v481
    %545 = vmatpush1.bf16.msra.mxu0 %v480
    %546 = vmatprep.subr.bf16.mxu0 %v483
    %547 = vmatpush1.bf16.msra.mxu0 %v482
    %548 = vmatprep.subr.bf16.mxu0 %v485
    %549 = vmatpush1.bf16.msra.mxu0 %v484
    %550 = vmatprep.subr.bf16.mxu0 %v487
    %551 = vmatpush1.bf16.msra.mxu0 %v486
    %552 = vmatprep.subr.bf16.mxu0 %v489
    %553 = vmatpush1.bf16.msra.mxu0 %v488
    %554 = vmatprep.subr.bf16.mxu0 %v491
    %555 = vmatpush1.bf16.msra.mxu0 %v490
    %556 = vmatprep.subr.bf16.mxu0 %v493
    %557 = vmatpush1.bf16.msra.mxu0 %v492
    %558 = vmatprep.subr.bf16.mxu0 %v495
    %559 = vmatpush1.bf16.msra.mxu0 %v494
    %560 = vmatprep.subr.bf16.mxu0 %v497
    %561 = vmatpush1.bf16.msra.mxu0 %v496
    %562 = vmatprep.subr.bf16.mxu0 %v499
    %563 = vmatpush1.bf16.msra.mxu0 %v498
    %564 = vmatprep.subr.bf16.mxu0 %v501
    %565 = vmatpush1.bf16.msra.mxu0 %v500
    %566 = vmatprep.mubr.bf16.mxu0 %v341
    %567 = vmatmul.mubr.bf16.gmra.mrb[0].mxu0 %v340
    %v568 = vpop.f32.mrb[0].mxu0
    %v569 = vadd.f32 0.0, %v568
    %v570 = vpop.f32.mrb[0].mxu0
    %v571 = vadd.f32 0.0, %v570
    %v572 = vpop.f32.mrb[0].mxu0
    %v573 = vpop.f32.mrb[0].mxu0
    %574 = vdwg.mxu0
    %v575 = vpack.c.bf16 %v569, %v569
    %v576 = vpack.c.bf16 %v571, %v571
    %v577 = vld [vmem:[%s4] sm:$0x3]
    %v580 = vunpack.c.l.s4 1966171168
    %v581 = vunpack.c.0.s8 %v580
    %v582 = vlaneseq
    %v583 = vshrl.u32 %v582, 7
    %v584 = vsub.s32 %v581, %v583
    %v585 = vrot.slane %v577, %v584
    %v586 = vcombine.high %v585, %v585
    %v588 = vunpack.c.l.s4 1966171168
    %v589 = vunpack.c.0.s8 %v588
    %v590 = vlaneseq
    %v591 = vshrl.u32 %v590, 7
    %v592 = vsub.s32 %v589, %v591
    %v593 = vrot.slane %v585, %v592
    %v595 = vunpack.c.l.s4 1966171168
    %v596 = vunpack.c.0.s8 %v595
    %v597 = vlaneseq
    %v598 = vshrl.u32 %v597, 7
    %v599 = vsub.s32 %v596, %v598
    %v600 = vrot.slane %v586, %v599
    %v602 = vpack.i.b16 %v593, %v593
    %v604 = vlaneseq
    %v605 = vshrl.u32 %v604, 7
    %v606 = vsub.s32 0, %v605
    %v607 = vrot.slane %v602, %v606
    %v609 = vpack.i.b16 %v600, %v600
    %v611 = vlaneseq
    %v612 = vshrl.u32 %v611, 7
    %v613 = vsub.s32 0, %v612
    %v614 = vrot.slane %v609, %v613
    %v615 = vadd.bf16 %v575, %v607
    %v616 = vadd.bf16 %v576, %v614
    %v617 = vmax.bf16 %v615, 0
    %v618 = vmax.bf16 %v616, 0
    %v619 = vld [vmem:[#allocation8] sm:$0xff]
    %v620 = vld [vmem:[#allocation8 + $0x8] sm:$0xff]
    %v621 = vld [vmem:[#allocation8 + $0x10] sm:$0xff]
    %v622 = vld [vmem:[#allocation8 + $0x18] sm:$0xff]
    %v623 = vld [vmem:[#allocation8 + $0x20] sm:$0xff]
    %v624 = vld [vmem:[#allocation8 + $0x28] sm:$0xff]
    %v625 = vld [vmem:[#allocation8 + $0x30] sm:$0xff]
    %v626 = vld [vmem:[#allocation8 + $0x38] sm:$0xff]
    %v627 = vld [vmem:[#allocation8 + $0x40] sm:$0xff]
    %v628 = vld [vmem:[#allocation8 + $0x48] sm:$0xff]
    %v629 = vld [vmem:[#allocation8 + $0x50] sm:$0xff]
    %v630 = vld [vmem:[#allocation8 + $0x58] sm:$0xff]
    %v631 = vld [vmem:[#allocation8 + $0x60] sm:$0xff]
    %v632 = vld [vmem:[#allocation8 + $0x68] sm:$0xff]
    %v633 = vld [vmem:[#allocation8 + $0x70] sm:$0xff]
    %v634 = vld [vmem:[#allocation8 + $0x78] sm:$0xff]
    %v635 = vld [vmem:[#allocation8 + $0x80] sm:$0xff]
    %v636 = vld [vmem:[#allocation8 + $0x88] sm:$0xff]
    %v637 = vld [vmem:[#allocation8 + $0x90] sm:$0xff]
    %v638 = vld [vmem:[#allocation8 + $0x98] sm:$0xff]
    %v639 = vld [vmem:[#allocation8 + $0xa0] sm:$0xff]
    %v640 = vld [vmem:[#allocation8 + $0xa8] sm:$0xff]
    %v641 = vld [vmem:[#allocation8 + $0xb0] sm:$0xff]
    %v642 = vld [vmem:[#allocation8 + $0xb8] sm:$0xff]
    %v643 = vld [vmem:[#allocation8 + $0xc0] sm:$0xff]
    %v644 = vld [vmem:[#allocation8 + $0xc8] sm:$0xff]
    %v645 = vld [vmem:[#allocation8 + $0xd0] sm:$0xff]
    %v646 = vld [vmem:[#allocation8 + $0xd8] sm:$0xff]
    %v647 = vld [vmem:[#allocation8 + $0xe0] sm:$0xff]
    %v648 = vld [vmem:[#allocation8 + $0xe8] sm:$0xff]
    %v649 = vld [vmem:[#allocation8 + $0xf0] sm:$0xff]
    %v650 = vld [vmem:[#allocation8 + $0xf8] sm:$0xff]
    %v683 = vunpack.c.l.b16 %v619
    %v684 = vunpack.c.h.b16 %v619
    %v685 = vunpack.c.l.b16 %v620
    %v686 = vunpack.c.h.b16 %v620
    %v687 = vunpack.c.l.b16 %v621
    %v688 = vunpack.c.h.b16 %v621
    %v689 = vunpack.c.l.b16 %v622
    %v690 = vunpack.c.h.b16 %v622
    %v691 = vunpack.c.l.b16 %v623
    %v692 = vunpack.c.h.b16 %v623
    %v693 = vunpack.c.l.b16 %v624
    %v694 = vunpack.c.h.b16 %v624
    %v695 = vunpack.c.l.b16 %v625
    %v696 = vunpack.c.h.b16 %v625
    %v697 = vunpack.c.l.b16 %v626
    %v698 = vunpack.c.h.b16 %v626
    %v699 = vunpack.c.l.b16 %v627
    %v700 = vunpack.c.h.b16 %v627
    %v701 = vunpack.c.l.b16 %v628
    %v702 = vunpack.c.h.b16 %v628
    %v703 = vunpack.c.l.b16 %v629
    %v704 = vunpack.c.h.b16 %v629
    %v705 = vunpack.c.l.b16 %v630
    %v706 = vunpack.c.h.b16 %v630
    %v707 = vunpack.c.l.b16 %v631
    %v708 = vunpack.c.h.b16 %v631
    %v709 = vunpack.c.l.b16 %v632
    %v710 = vunpack.c.h.b16 %v632
    %v711 = vunpack.c.l.b16 %v633
    %v712 = vunpack.c.h.b16 %v633
    %v713 = vunpack.c.l.b16 %v634
    %v714 = vunpack.c.h.b16 %v634
    %v715 = vunpack.c.l.b16 %v635
    %v716 = vunpack.c.h.b16 %v635
    %v717 = vunpack.c.l.b16 %v636
    %v718 = vunpack.c.h.b16 %v636
    %v719 = vunpack.c.l.b16 %v637
    %v720 = vunpack.c.h.b16 %v637
    %v721 = vunpack.c.l.b16 %v638
    %v722 = vunpack.c.h.b16 %v638
    %v723 = vunpack.c.l.b16 %v639
    %v724 = vunpack.c.h.b16 %v639
    %v725 = vunpack.c.l.b16 %v640
    %v726 = vunpack.c.h.b16 %v640
    %v727 = vunpack.c.l.b16 %v641
    %v728 = vunpack.c.h.b16 %v641
    %v729 = vunpack.c.l.b16 %v642
    %v730 = vunpack.c.h.b16 %v642
    %v731 = vunpack.c.l.b16 %v643
    %v732 = vunpack.c.h.b16 %v643
    %v733 = vunpack.c.l.b16 %v644
    %v734 = vunpack.c.h.b16 %v644
    %v735 = vunpack.c.l.b16 %v645
    %v736 = vunpack.c.h.b16 %v645
    %v737 = vunpack.c.l.b16 %v646
    %v738 = vunpack.c.h.b16 %v646
    %v739 = vunpack.c.l.b16 %v647
    %v740 = vunpack.c.h.b16 %v647
    %v741 = vunpack.c.l.b16 %v648
    %v742 = vunpack.c.h.b16 %v648
    %v743 = vunpack.c.l.b16 %v649
    %v744 = vunpack.c.h.b16 %v649
    %v745 = vunpack.c.l.b16 %v650
    %v746 = vunpack.c.h.b16 %v650
    %v747 = vpack.c.b16 %v685, %v683
    %v748 = vpack.c.b16 %v686, %v684
    %v749 = vpack.c.b16 %v689, %v687
    %v750 = vpack.c.b16 %v690, %v688
    %v751 = vpack.c.b16 %v693, %v691
    %v752 = vpack.c.b16 %v694, %v692
    %v753 = vpack.c.b16 %v697, %v695
    %v754 = vpack.c.b16 %v698, %v696
    %v755 = vpack.c.b16 %v701, %v699
    %v756 = vpack.c.b16 %v702, %v700
    %v757 = vpack.c.b16 %v705, %v703
    %v758 = vpack.c.b16 %v706, %v704
    %v759 = vpack.c.b16 %v709, %v707
    %v760 = vpack.c.b16 %v710, %v708
    %v761 = vpack.c.b16 %v713, %v711
    %v762 = vpack.c.b16 %v714, %v712
    %v763 = vpack.c.b16 %v717, %v715
    %v764 = vpack.c.b16 %v718, %v716
    %v765 = vpack.c.b16 %v721, %v719
    %v766 = vpack.c.b16 %v722, %v720
    %v767 = vpack.c.b16 %v725, %v723
    %v768 = vpack.c.b16 %v726, %v724
    %v769 = vpack.c.b16 %v729, %v727
    %v770 = vpack.c.b16 %v730, %v728
    %v771 = vpack.c.b16 %v733, %v731
    %v772 = vpack.c.b16 %v734, %v732
    %v773 = vpack.c.b16 %v737, %v735
    %v774 = vpack.c.b16 %v738, %v736
    %v775 = vpack.c.b16 %v741, %v739
    %v776 = vpack.c.b16 %v742, %v740
    %v777 = vpack.c.b16 %v745, %v743
    %v778 = vpack.c.b16 %v746, %v744
    %811 = vmatprep.subr.bf16.mxu0 %v748
    %812 = vmatpush1.bf16.msra.mxu0 %v747
    %813 = vmatprep.subr.bf16.mxu0 %v750
    %814 = vmatpush1.bf16.msra.mxu0 %v749
    %815 = vmatprep.subr.bf16.mxu0 %v752
    %816 = vmatpush1.bf16.msra.mxu0 %v751
    %817 = vmatprep.subr.bf16.mxu0 %v754
    %818 = vmatpush1.bf16.msra.mxu0 %v753
    %819 = vmatprep.subr.bf16.mxu0 %v756
    %820 = vmatpush1.bf16.msra.mxu0 %v755
    %821 = vmatprep.subr.bf16.mxu0 %v758
    %822 = vmatpush1.bf16.msra.mxu0 %v757
    %823 = vmatprep.subr.bf16.mxu0 %v760
    %824 = vmatpush1.bf16.msra.mxu0 %v759
    %825 = vmatprep.subr.bf16.mxu0 %v762
    %826 = vmatpush1.bf16.msra.mxu0 %v761
    %827 = vmatprep.subr.bf16.mxu0 %v764
    %828 = vmatpush1.bf16.msra.mxu0 %v763
    %829 = vmatprep.subr.bf16.mxu0 %v766
    %830 = vmatpush1.bf16.msra.mxu0 %v765
    %831 = vmatprep.subr.bf16.mxu0 %v768
    %832 = vmatpush1.bf16.msra.mxu0 %v767
    %833 = vmatprep.subr.bf16.mxu0 %v770
    %834 = vmatpush1.bf16.msra.mxu0 %v769
    %835 = vmatprep.subr.bf16.mxu0 %v772
    %836 = vmatpush1.bf16.msra.mxu0 %v771
    %837 = vmatprep.subr.bf16.mxu0 %v774
    %838 = vmatpush1.bf16.msra.mxu0 %v773
    %839 = vmatprep.subr.bf16.mxu0 %v776
    %840 = vmatpush1.bf16.msra.mxu0 %v775
    %841 = vmatprep.subr.bf16.mxu0 %v778
    %842 = vmatpush1.bf16.msra.mxu0 %v777
    %843 = vmatprep.mubr.bf16.mxu0 %v618
    %844 = vmatmul.mubr.bf16.gmra.mrb[0].mxu0 %v617
    %v845 = vpop.f32.mrb[0].mxu0
    %v846 = vadd.f32 0.0, %v845
    %v847 = vpop.f32.mrb[0].mxu0
    %v848 = vadd.f32 0.0, %v847
    %v849 = vpop.f32.mrb[0].mxu0
    %v850 = vpop.f32.mrb[0].mxu0
    %851 = vdwg.mxu0
    %v852 = vpack.c.bf16 %v846, %v846
    %v853 = vpack.c.bf16 %v848, %v848
    %v854 = vld [vmem:[%s6] sm:$0x3]
    %v857 = vunpack.c.l.s4 1966171168
    %v858 = vunpack.c.0.s8 %v857
    %v859 = vlaneseq
    %v860 = vshrl.u32 %v859, 7
    %v861 = vsub.s32 %v858, %v860
    %v862 = vrot.slane %v854, %v861
    %v863 = vcombine.high %v862, %v862
    %v865 = vunpack.c.l.s4 1966171168
    %v866 = vunpack.c.0.s8 %v865
    %v867 = vlaneseq
    %v868 = vshrl.u32 %v867, 7
    %v869 = vsub.s32 %v866, %v868
    %v870 = vrot.slane %v862, %v869
    %v872 = vunpack.c.l.s4 1966171168
    %v873 = vunpack.c.0.s8 %v872
    %v874 = vlaneseq
    %v875 = vshrl.u32 %v874, 7
    %v876 = vsub.s32 %v873, %v875
    %v877 = vrot.slane %v863, %v876
    %v879 = vpack.i.b16 %v870, %v870
    %v881 = vlaneseq
    %v882 = vshrl.u32 %v881, 7
    %v883 = vsub.s32 0, %v882
    %v884 = vrot.slane %v879, %v883
    %v886 = vpack.i.b16 %v877, %v877
    %v888 = vlaneseq
    %v889 = vshrl.u32 %v888, 7
    %v890 = vsub.s32 0, %v889
    %v891 = vrot.slane %v886, %v890
    %v892 = vadd.bf16 %v852, %v884
    %v893 = vadd.bf16 %v853, %v891
    %v894 = vmax.bf16 %v892, 0
    %v895 = vmax.bf16 %v893, 0
    %v896 = vld [vmem:[#allocation10] sm:$0xff]
    %v897 = vld [vmem:[#allocation10 + $0x8] sm:$0xff]
    %v898 = vld [vmem:[#allocation10 + $0x10] sm:$0xff]
    %v899 = vld [vmem:[#allocation10 + $0x18] sm:$0xff]
    %v900 = vld [vmem:[#allocation10 + $0x20] sm:$0xff]
    %v901 = vld [vmem:[#allocation10 + $0x28] sm:$0xff]
    %v902 = vld [vmem:[#allocation10 + $0x30] sm:$0xff]
    %v903 = vld [vmem:[#allocation10 + $0x38] sm:$0xff]
    %v904 = vld [vmem:[#allocation10 + $0x40] sm:$0xff]
    %v905 = vld [vmem:[#allocation10 + $0x48] sm:$0xff]
    %v906 = vld [vmem:[#allocation10 + $0x50] sm:$0xff]
    %v907 = vld [vmem:[#allocation10 + $0x58] sm:$0xff]
    %v908 = vld [vmem:[#allocation10 + $0x60] sm:$0xff]
    %v909 = vld [vmem:[#allocation10 + $0x68] sm:$0xff]
    %v910 = vld [vmem:[#allocation10 + $0x70] sm:$0xff]
    %v911 = vld [vmem:[#allocation10 + $0x78] sm:$0xff]
    %v912 = vld [vmem:[#allocation10 + $0x80] sm:$0xff]
    %v913 = vld [vmem:[#allocation10 + $0x88] sm:$0xff]
    %v914 = vld [vmem:[#allocation10 + $0x90] sm:$0xff]
    %v915 = vld [vmem:[#allocation10 + $0x98] sm:$0xff]
    %v916 = vld [vmem:[#allocation10 + $0xa0] sm:$0xff]
    %v917 = vld [vmem:[#allocation10 + $0xa8] sm:$0xff]
    %v918 = vld [vmem:[#allocation10 + $0xb0] sm:$0xff]
    %v919 = vld [vmem:[#allocation10 + $0xb8] sm:$0xff]
    %v920 = vld [vmem:[#allocation10 + $0xc0] sm:$0xff]
    %v921 = vld [vmem:[#allocation10 + $0xc8] sm:$0xff]
    %v922 = vld [vmem:[#allocation10 + $0xd0] sm:$0xff]
    %v923 = vld [vmem:[#allocation10 + $0xd8] sm:$0xff]
    %v924 = vld [vmem:[#allocation10 + $0xe0] sm:$0xff]
    %v925 = vld [vmem:[#allocation10 + $0xe8] sm:$0xff]
    %v926 = vld [vmem:[#allocation10 + $0xf0] sm:$0xff]
    %v927 = vld [vmem:[#allocation10 + $0xf8] sm:$0xff]
    %v960 = vunpack.c.l.b16 %v896
    %v961 = vunpack.c.h.b16 %v896
    %v962 = vunpack.c.l.b16 %v897
    %v963 = vunpack.c.h.b16 %v897
    %v964 = vunpack.c.l.b16 %v898
    %v965 = vunpack.c.h.b16 %v898
    %v966 = vunpack.c.l.b16 %v899
    %v967 = vunpack.c.h.b16 %v899
    %v968 = vunpack.c.l.b16 %v900
    %v969 = vunpack.c.h.b16 %v900
    %v970 = vunpack.c.l.b16 %v901
    %v971 = vunpack.c.h.b16 %v901
    %v972 = vunpack.c.l.b16 %v902
    %v973 = vunpack.c.h.b16 %v902
    %v974 = vunpack.c.l.b16 %v903
    %v975 = vunpack.c.h.b16 %v903
    %v976 = vunpack.c.l.b16 %v904
    %v977 = vunpack.c.h.b16 %v904
    %v978 = vunpack.c.l.b16 %v905
    %v979 = vunpack.c.h.b16 %v905
    %v980 = vunpack.c.l.b16 %v906
    %v981 = vunpack.c.h.b16 %v906
    %v982 = vunpack.c.l.b16 %v907
    %v983 = vunpack.c.h.b16 %v907
    %v984 = vunpack.c.l.b16 %v908
    %v985 = vunpack.c.h.b16 %v908
    %v986 = vunpack.c.l.b16 %v909
    %v987 = vunpack.c.h.b16 %v909
    %v988 = vunpack.c.l.b16 %v910
    %v989 = vunpack.c.h.b16 %v910
    %v990 = vunpack.c.l.b16 %v911
    %v991 = vunpack.c.h.b16 %v911
    %v992 = vunpack.c.l.b16 %v912
    %v993 = vunpack.c.h.b16 %v912
    %v994 = vunpack.c.l.b16 %v913
    %v995 = vunpack.c.h.b16 %v913
    %v996 = vunpack.c.l.b16 %v914
    %v997 = vunpack.c.h.b16 %v914
    %v998 = vunpack.c.l.b16 %v915
    %v999 = vunpack.c.h.b16 %v915
    %v1000 = vunpack.c.l.b16 %v916
    %v1001 = vunpack.c.h.b16 %v916
    %v1002 = vunpack.c.l.b16 %v917
    %v1003 = vunpack.c.h.b16 %v917
    %v1004 = vunpack.c.l.b16 %v918
    %v1005 = vunpack.c.h.b16 %v918
    %v1006 = vunpack.c.l.b16 %v919
    %v1007 = vunpack.c.h.b16 %v919
    %v1008 = vunpack.c.l.b16 %v920
    %v1009 = vunpack.c.h.b16 %v920
    %v1010 = vunpack.c.l.b16 %v921
    %v1011 = vunpack.c.h.b16 %v921
    %v1012 = vunpack.c.l.b16 %v922
    %v1013 = vunpack.c.h.b16 %v922
    %v1014 = vunpack.c.l.b16 %v923
    %v1015 = vunpack.c.h.b16 %v923
    %v1016 = vunpack.c.l.b16 %v924
    %v1017 = vunpack.c.h.b16 %v924
    %v1018 = vunpack.c.l.b16 %v925
    %v1019 = vunpack.c.h.b16 %v925
    %v1020 = vunpack.c.l.b16 %v926
    %v1021 = vunpack.c.h.b16 %v926
    %v1022 = vunpack.c.l.b16 %v927
    %v1023 = vunpack.c.h.b16 %v927
    %v1024 = vpack.c.b16 %v962, %v960
    %v1025 = vpack.c.b16 %v963, %v961
    %v1026 = vpack.c.b16 %v966, %v964
    %v1027 = vpack.c.b16 %v967, %v965
    %v1028 = vpack.c.b16 %v970, %v968
    %v1029 = vpack.c.b16 %v971, %v969
    %v1030 = vpack.c.b16 %v974, %v972
    %v1031 = vpack.c.b16 %v975, %v973
    %v1032 = vpack.c.b16 %v978, %v976
    %v1033 = vpack.c.b16 %v979, %v977
    %v1034 = vpack.c.b16 %v982, %v980
    %v1035 = vpack.c.b16 %v983, %v981
    %v1036 = vpack.c.b16 %v986, %v984
    %v1037 = vpack.c.b16 %v987, %v985
    %v1038 = vpack.c.b16 %v990, %v988
    %v1039 = vpack.c.b16 %v991, %v989
    %v1040 = vpack.c.b16 %v994, %v992
    %v1041 = vpack.c.b16 %v995, %v993
    %v1042 = vpack.c.b16 %v998, %v996
    %v1043 = vpack.c.b16 %v999, %v997
    %v1044 = vpack.c.b16 %v1002, %v1000
    %v1045 = vpack.c.b16 %v1003, %v1001
    %v1046 = vpack.c.b16 %v1006, %v1004
    %v1047 = vpack.c.b16 %v1007, %v1005
    %v1048 = vpack.c.b16 %v1010, %v1008
    %v1049 = vpack.c.b16 %v1011, %v1009
    %v1050 = vpack.c.b16 %v1014, %v1012
    %v1051 = vpack.c.b16 %v1015, %v1013
    %v1052 = vpack.c.b16 %v1018, %v1016
    %v1053 = vpack.c.b16 %v1019, %v1017
    %v1054 = vpack.c.b16 %v1022, %v1020
    %v1055 = vpack.c.b16 %v1023, %v1021
    %1088 = vmatprep.subr.bf16.mxu0 %v1025
    %1089 = vmatpush1.bf16.msra.mxu0 %v1024
    %1090 = vmatprep.subr.bf16.mxu0 %v1027
    %1091 = vmatpush1.bf16.msra.mxu0 %v1026
    %1092 = vmatprep.subr.bf16.mxu0 %v1029
    %1093 = vmatpush1.bf16.msra.mxu0 %v1028
    %1094 = vmatprep.subr.bf16.mxu0 %v1031
    %1095 = vmatpush1.bf16.msra.mxu0 %v1030
    %1096 = vmatprep.subr.bf16.mxu0 %v1033
    %1097 = vmatpush1.bf16.msra.mxu0 %v1032
    %1098 = vmatprep.subr.bf16.mxu0 %v1035
    %1099 = vmatpush1.bf16.msra.mxu0 %v1034
    %1100 = vmatprep.subr.bf16.mxu0 %v1037
    %1101 = vmatpush1.bf16.msra.mxu0 %v1036
    %1102 = vmatprep.subr.bf16.mxu0 %v1039
    %1103 = vmatpush1.bf16.msra.mxu0 %v1038
    %1104 = vmatprep.subr.bf16.mxu0 %v1041
    %1105 = vmatpush1.bf16.msra.mxu0 %v1040
    %1106 = vmatprep.subr.bf16.mxu0 %v1043
    %1107 = vmatpush1.bf16.msra.mxu0 %v1042
    %1108 = vmatprep.subr.bf16.mxu0 %v1045
    %1109 = vmatpush1.bf16.msra.mxu0 %v1044
    %1110 = vmatprep.subr.bf16.mxu0 %v1047
    %1111 = vmatpush1.bf16.msra.mxu0 %v1046
    %1112 = vmatprep.subr.bf16.mxu0 %v1049
    %1113 = vmatpush1.bf16.msra.mxu0 %v1048
    %1114 = vmatprep.subr.bf16.mxu0 %v1051
    %1115 = vmatpush1.bf16.msra.mxu0 %v1050
    %1116 = vmatprep.subr.bf16.mxu0 %v1053
    %1117 = vmatpush1.bf16.msra.mxu0 %v1052
    %1118 = vmatprep.subr.bf16.mxu0 %v1055
    %1119 = vmatpush1.bf16.msra.mxu0 %v1054
    %1120 = vmatprep.mubr.bf16.mxu0 %v895
    %1121 = vmatmul.mubr.bf16.gmra.mrb[0].mxu0 %v894
    %v1122 = vpop.f32.mrb[0].mxu0
    %v1123 = vadd.f32 0.0, %v1122
    %v1124 = vpop.f32.mrb[0].mxu0
    %v1125 = vadd.f32 0.0, %v1124
    %v1126 = vpop.f32.mrb[0].mxu0
    %v1127 = vpop.f32.mrb[0].mxu0
    %1128 = vdwg.mxu0
    %v1129 = vpack.c.bf16 %v1123, %v1123
    %v1130 = vpack.c.bf16 %v1125, %v1125
    %v1131 = vld [vmem:[%s8] sm:$0x3]
    %v1134 = vunpack.c.l.s4 1966171168
    %v1135 = vunpack.c.0.s8 %v1134
    %v1136 = vlaneseq
    %v1137 = vshrl.u32 %v1136, 7
    %v1138 = vsub.s32 %v1135, %v1137
    %v1139 = vrot.slane %v1131, %v1138
    %v1140 = vcombine.high %v1139, %v1139
    %v1142 = vunpack.c.l.s4 1966171168
    %v1143 = vunpack.c.0.s8 %v1142
    %v1144 = vlaneseq
    %v1145 = vshrl.u32 %v1144, 7
    %v1146 = vsub.s32 %v1143, %v1145
    %v1147 = vrot.slane %v1139, %v1146
    %v1149 = vunpack.c.l.s4 1966171168
    %v1150 = vunpack.c.0.s8 %v1149
    %v1151 = vlaneseq
    %v1152 = vshrl.u32 %v1151, 7
    %v1153 = vsub.s32 %v1150, %v1152
    %v1154 = vrot.slane %v1140, %v1153
    %v1156 = vpack.i.b16 %v1147, %v1147
    %v1158 = vlaneseq
    %v1159 = vshrl.u32 %v1158, 7
    %v1160 = vsub.s32 0, %v1159
    %v1161 = vrot.slane %v1156, %v1160
    %v1163 = vpack.i.b16 %v1154, %v1154
    %v1165 = vlaneseq
    %v1166 = vshrl.u32 %v1165, 7
    %v1167 = vsub.s32 0, %v1166
    %v1168 = vrot.slane %v1163, %v1167
    %v1169 = vadd.bf16 %v1129, %v1161
    %v1170 = vadd.bf16 %v1130, %v1168
    %v1171 = vmax.bf16 %v1169, 0
    %v1172 = vmax.bf16 %v1170, 0
    %v1173 = vld [vmem:[#allocation11] sm:$0xff]
    %v1174 = vld [vmem:[#allocation11 + $0x8] sm:$0xff]
    %v1175 = vld [vmem:[#allocation11 + $0x10] sm:$0xff]
    %v1176 = vld [vmem:[#allocation11 + $0x18] sm:$0xff]
    %v1177 = vld [vmem:[#allocation11 + $0x20] sm:$0xff]
    %v1178 = vld [vmem:[#allocation11 + $0x28] sm:$0xff]
    %v1179 = vld [vmem:[#allocation11 + $0x30] sm:$0xff]
    %v1180 = vld [vmem:[#allocation11 + $0x38] sm:$0xff]
    %v1181 = vld [vmem:[#allocation11 + $0x40] sm:$0xff]
    %v1182 = vld [vmem:[#allocation11 + $0x48] sm:$0xff]
    %v1183 = vld [vmem:[#allocation11 + $0x50] sm:$0xff]
    %v1184 = vld [vmem:[#allocation11 + $0x58] sm:$0xff]
    %v1185 = vld [vmem:[#allocation11 + $0x60] sm:$0xff]
    %v1186 = vld [vmem:[#allocation11 + $0x68] sm:$0xff]
    %v1187 = vld [vmem:[#allocation11 + $0x70] sm:$0xff]
    %v1188 = vld [vmem:[#allocation11 + $0x78] sm:$0xff]
    %v1189 = vld [vmem:[#allocation11 + $0x80] sm:$0xff]
    %v1190 = vld [vmem:[#allocation11 + $0x88] sm:$0xff]
    %v1191 = vld [vmem:[#allocation11 + $0x90] sm:$0xff]
    %v1192 = vld [vmem:[#allocation11 + $0x98] sm:$0xff]
    %v1193 = vld [vmem:[#allocation11 + $0xa0] sm:$0xff]
    %v1194 = vld [vmem:[#allocation11 + $0xa8] sm:$0xff]
    %v1195 = vld [vmem:[#allocation11 + $0xb0] sm:$0xff]
    %v1196 = vld [vmem:[#allocation11 + $0xb8] sm:$0xff]
    %v1197 = vld [vmem:[#allocation11 + $0xc0] sm:$0xff]
    %v1198 = vld [vmem:[#allocation11 + $0xc8] sm:$0xff]
    %v1199 = vld [vmem:[#allocation11 + $0xd0] sm:$0xff]
    %v1200 = vld [vmem:[#allocation11 + $0xd8] sm:$0xff]
    %v1201 = vld [vmem:[#allocation11 + $0xe0] sm:$0xff]
    %v1202 = vld [vmem:[#allocation11 + $0xe8] sm:$0xff]
    %v1203 = vld [vmem:[#allocation11 + $0xf0] sm:$0xff]
    %v1204 = vld [vmem:[#allocation11 + $0xf8] sm:$0xff]
    %v1237 = vunpack.c.l.b16 %v1173
    %v1238 = vunpack.c.h.b16 %v1173
    %v1239 = vunpack.c.l.b16 %v1174
    %v1240 = vunpack.c.h.b16 %v1174
    %v1241 = vunpack.c.l.b16 %v1175
    %v1242 = vunpack.c.h.b16 %v1175
    %v1243 = vunpack.c.l.b16 %v1176
    %v1244 = vunpack.c.h.b16 %v1176
    %v1245 = vunpack.c.l.b16 %v1177
    %v1246 = vunpack.c.h.b16 %v1177
    %v1247 = vunpack.c.l.b16 %v1178
    %v1248 = vunpack.c.h.b16 %v1178
    %v1249 = vunpack.c.l.b16 %v1179
    %v1250 = vunpack.c.h.b16 %v1179
    %v1251 = vunpack.c.l.b16 %v1180
    %v1252 = vunpack.c.h.b16 %v1180
    %v1253 = vunpack.c.l.b16 %v1181
    %v1254 = vunpack.c.h.b16 %v1181
    %v1255 = vunpack.c.l.b16 %v1182
    %v1256 = vunpack.c.h.b16 %v1182
    %v1257 = vunpack.c.l.b16 %v1183
    %v1258 = vunpack.c.h.b16 %v1183
    %v1259 = vunpack.c.l.b16 %v1184
    %v1260 = vunpack.c.h.b16 %v1184
    %v1261 = vunpack.c.l.b16 %v1185
    %v1262 = vunpack.c.h.b16 %v1185
    %v1263 = vunpack.c.l.b16 %v1186
    %v1264 = vunpack.c.h.b16 %v1186
    %v1265 = vunpack.c.l.b16 %v1187
    %v1266 = vunpack.c.h.b16 %v1187
    %v1267 = vunpack.c.l.b16 %v1188
    %v1268 = vunpack.c.h.b16 %v1188
    %v1269 = vunpack.c.l.b16 %v1189
    %v1270 = vunpack.c.h.b16 %v1189
    %v1271 = vunpack.c.l.b16 %v1190
    %v1272 = vunpack.c.h.b16 %v1190
    %v1273 = vunpack.c.l.b16 %v1191
    %v1274 = vunpack.c.h.b16 %v1191
    %v1275 = vunpack.c.l.b16 %v1192
    %v1276 = vunpack.c.h.b16 %v1192
    %v1277 = vunpack.c.l.b16 %v1193
    %v1278 = vunpack.c.h.b16 %v1193
    %v1279 = vunpack.c.l.b16 %v1194
    %v1280 = vunpack.c.h.b16 %v1194
    %v1281 = vunpack.c.l.b16 %v1195
    %v1282 = vunpack.c.h.b16 %v1195
    %v1283 = vunpack.c.l.b16 %v1196
    %v1284 = vunpack.c.h.b16 %v1196
    %v1285 = vunpack.c.l.b16 %v1197
    %v1286 = vunpack.c.h.b16 %v1197
    %v1287 = vunpack.c.l.b16 %v1198
    %v1288 = vunpack.c.h.b16 %v1198
    %v1289 = vunpack.c.l.b16 %v1199
    %v1290 = vunpack.c.h.b16 %v1199
    %v1291 = vunpack.c.l.b16 %v1200
    %v1292 = vunpack.c.h.b16 %v1200
    %v1293 = vunpack.c.l.b16 %v1201
    %v1294 = vunpack.c.h.b16 %v1201
    %v1295 = vunpack.c.l.b16 %v1202
    %v1296 = vunpack.c.h.b16 %v1202
    %v1297 = vunpack.c.l.b16 %v1203
    %v1298 = vunpack.c.h.b16 %v1203
    %v1299 = vunpack.c.l.b16 %v1204
    %v1300 = vunpack.c.h.b16 %v1204
    %v1301 = vpack.c.b16 %v1239, %v1237
    %v1302 = vpack.c.b16 %v1240, %v1238
    %v1303 = vpack.c.b16 %v1243, %v1241
    %v1304 = vpack.c.b16 %v1244, %v1242
    %v1305 = vpack.c.b16 %v1247, %v1245
    %v1306 = vpack.c.b16 %v1248, %v1246
    %v1307 = vpack.c.b16 %v1251, %v1249
    %v1308 = vpack.c.b16 %v1252, %v1250
    %v1309 = vpack.c.b16 %v1255, %v1253
    %v1310 = vpack.c.b16 %v1256, %v1254
    %v1311 = vpack.c.b16 %v1259, %v1257
    %v1312 = vpack.c.b16 %v1260, %v1258
    %v1313 = vpack.c.b16 %v1263, %v1261
    %v1314 = vpack.c.b16 %v1264, %v1262
    %v1315 = vpack.c.b16 %v1267, %v1265
    %v1316 = vpack.c.b16 %v1268, %v1266
    %v1317 = vpack.c.b16 %v1271, %v1269
    %v1318 = vpack.c.b16 %v1272, %v1270
    %v1319 = vpack.c.b16 %v1275, %v1273
    %v1320 = vpack.c.b16 %v1276, %v1274
    %v1321 = vpack.c.b16 %v1279, %v1277
    %v1322 = vpack.c.b16 %v1280, %v1278
    %v1323 = vpack.c.b16 %v1283, %v1281
    %v1324 = vpack.c.b16 %v1284, %v1282
    %v1325 = vpack.c.b16 %v1287, %v1285
    %v1326 = vpack.c.b16 %v1288, %v1286
    %v1327 = vpack.c.b16 %v1291, %v1289
    %v1328 = vpack.c.b16 %v1292, %v1290
    %v1329 = vpack.c.b16 %v1295, %v1293
    %v1330 = vpack.c.b16 %v1296, %v1294
    %v1331 = vpack.c.b16 %v1299, %v1297
    %v1332 = vpack.c.b16 %v1300, %v1298
    %1365 = vmatprep.subr.bf16.mxu0 %v1302
    %1366 = vmatpush1.bf16.msra.mxu0 %v1301
    %1367 = vmatprep.subr.bf16.mxu0 %v1304
    %1368 = vmatpush1.bf16.msra.mxu0 %v1303
    %1369 = vmatprep.subr.bf16.mxu0 %v1306
    %1370 = vmatpush1.bf16.msra.mxu0 %v1305
    %1371 = vmatprep.subr.bf16.mxu0 %v1308
    %1372 = vmatpush1.bf16.msra.mxu0 %v1307
    %1373 = vmatprep.subr.bf16.mxu0 %v1310
    %1374 = vmatpush1.bf16.msra.mxu0 %v1309
    %1375 = vmatprep.subr.bf16.mxu0 %v1312
    %1376 = vmatpush1.bf16.msra.mxu0 %v1311
    %1377 = vmatprep.subr.bf16.mxu0 %v1314
    %1378 = vmatpush1.bf16.msra.mxu0 %v1313
    %1379 = vmatprep.subr.bf16.mxu0 %v1316
    %1380 = vmatpush1.bf16.msra.mxu0 %v1315
    %1381 = vmatprep.subr.bf16.mxu0 %v1318
    %1382 = vmatpush1.bf16.msra.mxu0 %v1317
    %1383 = vmatprep.subr.bf16.mxu0 %v1320
    %1384 = vmatpush1.bf16.msra.mxu0 %v1319
    %1385 = vmatprep.subr.bf16.mxu0 %v1322
    %1386 = vmatpush1.bf16.msra.mxu0 %v1321
    %1387 = vmatprep.subr.bf16.mxu0 %v1324
    %1388 = vmatpush1.bf16.msra.mxu0 %v1323
    %1389 = vmatprep.subr.bf16.mxu0 %v1326
    %1390 = vmatpush1.bf16.msra.mxu0 %v1325
    %1391 = vmatprep.subr.bf16.mxu0 %v1328
    %1392 = vmatpush1.bf16.msra.mxu0 %v1327
    %1393 = vmatprep.subr.bf16.mxu0 %v1330
    %1394 = vmatpush1.bf16.msra.mxu0 %v1329
    %1395 = vmatprep.subr.bf16.mxu0 %v1332
    %1396 = vmatpush1.bf16.msra.mxu0 %v1331
    %1397 = vmatprep.mubr.bf16.mxu0 %v1172
    %1398 = vmatmul.mubr.bf16.gmra.mrb[0].mxu0 %v1171
    %v1399 = vpop.f32.mrb[0].mxu0
    %v1400 = vadd.f32 0.0, %v1399
    %v1401 = vpop.f32.mrb[0].mxu0
    %v1402 = vadd.f32 0.0, %v1401
    %v1403 = vpop.f32.mrb[0].mxu0
    %v1404 = vpop.f32.mrb[0].mxu0
    %1405 = vdwg.mxu0
    %v1406 = vpack.c.bf16 %v1400, %v1400
    %v1407 = vpack.c.bf16 %v1402, %v1402
    %v1408 = vld [vmem:[%s10] sm:$0x3]
    %v1411 = vunpack.c.l.s4 1966171168
    %v1412 = vunpack.c.0.s8 %v1411
    %v1413 = vlaneseq
    %v1414 = vshrl.u32 %v1413, 7
    %v1415 = vsub.s32 %v1412, %v1414
    %v1416 = vrot.slane %v1408, %v1415
    %v1417 = vcombine.high %v1416, %v1416
    %v1419 = vunpack.c.l.s4 1966171168
    %v1420 = vunpack.c.0.s8 %v1419
    %v1421 = vlaneseq
    %v1422 = vshrl.u32 %v1421, 7
    %v1423 = vsub.s32 %v1420, %v1422
    %v1424 = vrot.slane %v1416, %v1423
    %v1426 = vunpack.c.l.s4 1966171168
    %v1427 = vunpack.c.0.s8 %v1426
    %v1428 = vlaneseq
    %v1429 = vshrl.u32 %v1428, 7
    %v1430 = vsub.s32 %v1427, %v1429
    %v1431 = vrot.slane %v1417, %v1430
    %v1433 = vpack.i.b16 %v1424, %v1424
    %v1435 = vlaneseq
    %v1436 = vshrl.u32 %v1435, 7
    %v1437 = vsub.s32 0, %v1436
    %v1438 = vrot.slane %v1433, %v1437
    %v1440 = vpack.i.b16 %v1431, %v1431
    %v1442 = vlaneseq
    %v1443 = vshrl.u32 %v1442, 7
    %v1444 = vsub.s32 0, %v1443
    %v1445 = vrot.slane %v1440, %v1444
    %v1446 = vadd.bf16 %v1406, %v1438
    %v1447 = vadd.bf16 %v1407, %v1445
    %v1448 = vmax.bf16 %v1446, 0
    %v1449 = vmax.bf16 %v1447, 0
    %v1450 = vld [vmem:[#allocation13] sm:$0xff]
    %v1451 = vld [vmem:[#allocation13 + $0x8] sm:$0xff]
    %v1452 = vld [vmem:[#allocation13 + $0x10] sm:$0xff]
    %v1453 = vld [vmem:[#allocation13 + $0x18] sm:$0xff]
    %v1454 = vld [vmem:[#allocation13 + $0x20] sm:$0xff]
    %v1455 = vld [vmem:[#allocation13 + $0x28] sm:$0xff]
    %v1456 = vld [vmem:[#allocation13 + $0x30] sm:$0xff]
    %v1457 = vld [vmem:[#allocation13 + $0x38] sm:$0xff]
    %v1458 = vld [vmem:[#allocation13 + $0x40] sm:$0xff]
    %v1459 = vld [vmem:[#allocation13 + $0x48] sm:$0xff]
    %v1460 = vld [vmem:[#allocation13 + $0x50] sm:$0xff]
    %v1461 = vld [vmem:[#allocation13 + $0x58] sm:$0xff]
    %v1462 = vld [vmem:[#allocation13 + $0x60] sm:$0xff]
    %v1463 = vld [vmem:[#allocation13 + $0x68] sm:$0xff]
    %v1464 = vld [vmem:[#allocation13 + $0x70] sm:$0xff]
    %v1465 = vld [vmem:[#allocation13 + $0x78] sm:$0xff]
    %v1466 = vld [vmem:[#allocation13 + $0x80] sm:$0xff]
    %v1467 = vld [vmem:[#allocation13 + $0x88] sm:$0xff]
    %v1468 = vld [vmem:[#allocation13 + $0x90] sm:$0xff]
    %v1469 = vld [vmem:[#allocation13 + $0x98] sm:$0xff]
    %v1470 = vld [vmem:[#allocation13 + $0xa0] sm:$0xff]
    %v1471 = vld [vmem:[#allocation13 + $0xa8] sm:$0xff]
    %v1472 = vld [vmem:[#allocation13 + $0xb0] sm:$0xff]
    %v1473 = vld [vmem:[#allocation13 + $0xb8] sm:$0xff]
    %v1474 = vld [vmem:[#allocation13 + $0xc0] sm:$0xff]
    %v1475 = vld [vmem:[#allocation13 + $0xc8] sm:$0xff]
    %v1476 = vld [vmem:[#allocation13 + $0xd0] sm:$0xff]
    %v1477 = vld [vmem:[#allocation13 + $0xd8] sm:$0xff]
    %v1478 = vld [vmem:[#allocation13 + $0xe0] sm:$0xff]
    %v1479 = vld [vmem:[#allocation13 + $0xe8] sm:$0xff]
    %v1480 = vld [vmem:[#allocation13 + $0xf0] sm:$0xff]
    %v1481 = vld [vmem:[#allocation13 + $0xf8] sm:$0xff]
    %v1514 = vunpack.c.l.b16 %v1450
    %v1515 = vunpack.c.h.b16 %v1450
    %v1516 = vunpack.c.l.b16 %v1451
    %v1517 = vunpack.c.h.b16 %v1451
    %v1518 = vunpack.c.l.b16 %v1452
    %v1519 = vunpack.c.h.b16 %v1452
    %v1520 = vunpack.c.l.b16 %v1453
    %v1521 = vunpack.c.h.b16 %v1453
    %v1522 = vunpack.c.l.b16 %v1454
    %v1523 = vunpack.c.h.b16 %v1454
    %v1524 = vunpack.c.l.b16 %v1455
    %v1525 = vunpack.c.h.b16 %v1455
    %v1526 = vunpack.c.l.b16 %v1456
    %v1527 = vunpack.c.h.b16 %v1456
    %v1528 = vunpack.c.l.b16 %v1457
    %v1529 = vunpack.c.h.b16 %v1457
    %v1530 = vunpack.c.l.b16 %v1458
    %v1531 = vunpack.c.h.b16 %v1458
    %v1532 = vunpack.c.l.b16 %v1459
    %v1533 = vunpack.c.h.b16 %v1459
    %v1534 = vunpack.c.l.b16 %v1460
    %v1535 = vunpack.c.h.b16 %v1460
    %v1536 = vunpack.c.l.b16 %v1461
    %v1537 = vunpack.c.h.b16 %v1461
    %v1538 = vunpack.c.l.b16 %v1462
    %v1539 = vunpack.c.h.b16 %v1462
    %v1540 = vunpack.c.l.b16 %v1463
    %v1541 = vunpack.c.h.b16 %v1463
    %v1542 = vunpack.c.l.b16 %v1464
    %v1543 = vunpack.c.h.b16 %v1464
    %v1544 = vunpack.c.l.b16 %v1465
    %v1545 = vunpack.c.h.b16 %v1465
    %v1546 = vunpack.c.l.b16 %v1466
    %v1547 = vunpack.c.h.b16 %v1466
    %v1548 = vunpack.c.l.b16 %v1467
    %v1549 = vunpack.c.h.b16 %v1467
    %v1550 = vunpack.c.l.b16 %v1468
    %v1551 = vunpack.c.h.b16 %v1468
    %v1552 = vunpack.c.l.b16 %v1469
    %v1553 = vunpack.c.h.b16 %v1469
    %v1554 = vunpack.c.l.b16 %v1470
    %v1555 = vunpack.c.h.b16 %v1470
    %v1556 = vunpack.c.l.b16 %v1471
    %v1557 = vunpack.c.h.b16 %v1471
    %v1558 = vunpack.c.l.b16 %v1472
    %v1559 = vunpack.c.h.b16 %v1472
    %v1560 = vunpack.c.l.b16 %v1473
    %v1561 = vunpack.c.h.b16 %v1473
    %v1562 = vunpack.c.l.b16 %v1474
    %v1563 = vunpack.c.h.b16 %v1474
    %v1564 = vunpack.c.l.b16 %v1475
    %v1565 = vunpack.c.h.b16 %v1475
    %v1566 = vunpack.c.l.b16 %v1476
    %v1567 = vunpack.c.h.b16 %v1476
    %v1568 = vunpack.c.l.b16 %v1477
    %v1569 = vunpack.c.h.b16 %v1477
    %v1570 = vunpack.c.l.b16 %v1478
    %v1571 = vunpack.c.h.b16 %v1478
    %v1572 = vunpack.c.l.b16 %v1479
    %v1573 = vunpack.c.h.b16 %v1479
    %v1574 = vunpack.c.l.b16 %v1480
    %v1575 = vunpack.c.h.b16 %v1480
    %v1576 = vunpack.c.l.b16 %v1481
    %v1577 = vunpack.c.h.b16 %v1481
    %v1578 = vpack.c.b16 %v1516, %v1514
    %v1579 = vpack.c.b16 %v1517, %v1515
    %v1580 = vpack.c.b16 %v1520, %v1518
    %v1581 = vpack.c.b16 %v1521, %v1519
    %v1582 = vpack.c.b16 %v1524, %v1522
    %v1583 = vpack.c.b16 %v1525, %v1523
    %v1584 = vpack.c.b16 %v1528, %v1526
    %v1585 = vpack.c.b16 %v1529, %v1527
    %v1586 = vpack.c.b16 %v1532, %v1530
    %v1587 = vpack.c.b16 %v1533, %v1531
    %v1588 = vpack.c.b16 %v1536, %v1534
    %v1589 = vpack.c.b16 %v1537, %v1535
    %v1590 = vpack.c.b16 %v1540, %v1538
    %v1591 = vpack.c.b16 %v1541, %v1539
    %v1592 = vpack.c.b16 %v1544, %v1542
    %v1593 = vpack.c.b16 %v1545, %v1543
    %v1594 = vpack.c.b16 %v1548, %v1546
    %v1595 = vpack.c.b16 %v1549, %v1547
    %v1596 = vpack.c.b16 %v1552, %v1550
    %v1597 = vpack.c.b16 %v1553, %v1551
    %v1598 = vpack.c.b16 %v1556, %v1554
    %v1599 = vpack.c.b16 %v1557, %v1555
    %v1600 = vpack.c.b16 %v1560, %v1558
    %v1601 = vpack.c.b16 %v1561, %v1559
    %v1602 = vpack.c.b16 %v1564, %v1562
    %v1603 = vpack.c.b16 %v1565, %v1563
    %v1604 = vpack.c.b16 %v1568, %v1566
    %v1605 = vpack.c.b16 %v1569, %v1567
    %v1606 = vpack.c.b16 %v1572, %v1570
    %v1607 = vpack.c.b16 %v1573, %v1571
    %v1608 = vpack.c.b16 %v1576, %v1574
    %v1609 = vpack.c.b16 %v1577, %v1575
    %1642 = vmatprep.subr.bf16.mxu0 %v1579
    %1643 = vmatpush1.bf16.msra.mxu0 %v1578
    %1644 = vmatprep.subr.bf16.mxu0 %v1581
    %1645 = vmatpush1.bf16.msra.mxu0 %v1580
    %1646 = vmatprep.subr.bf16.mxu0 %v1583
    %1647 = vmatpush1.bf16.msra.mxu0 %v1582
    %1648 = vmatprep.subr.bf16.mxu0 %v1585
    %1649 = vmatpush1.bf16.msra.mxu0 %v1584
    %1650 = vmatprep.subr.bf16.mxu0 %v1587
    %1651 = vmatpush1.bf16.msra.mxu0 %v1586
    %1652 = vmatprep.subr.bf16.mxu0 %v1589
    %1653 = vmatpush1.bf16.msra.mxu0 %v1588
    %1654 = vmatprep.subr.bf16.mxu0 %v1591
    %1655 = vmatpush1.bf16.msra.mxu0 %v1590
    %1656 = vmatprep.subr.bf16.mxu0 %v1593
    %1657 = vmatpush1.bf16.msra.mxu0 %v1592
    %1658 = vmatprep.subr.bf16.mxu0 %v1595
    %1659 = vmatpush1.bf16.msra.mxu0 %v1594
    %1660 = vmatprep.subr.bf16.mxu0 %v1597
    %1661 = vmatpush1.bf16.msra.mxu0 %v1596
    %1662 = vmatprep.subr.bf16.mxu0 %v1599
    %1663 = vmatpush1.bf16.msra.mxu0 %v1598
    %1664 = vmatprep.subr.bf16.mxu0 %v1601
    %1665 = vmatpush1.bf16.msra.mxu0 %v1600
    %1666 = vmatprep.subr.bf16.mxu0 %v1603
    %1667 = vmatpush1.bf16.msra.mxu0 %v1602
    %1668 = vmatprep.subr.bf16.mxu0 %v1605
    %1669 = vmatpush1.bf16.msra.mxu0 %v1604
    %1670 = vmatprep.subr.bf16.mxu0 %v1607
    %1671 = vmatpush1.bf16.msra.mxu0 %v1606
    %1672 = vmatprep.subr.bf16.mxu0 %v1609
    %1673 = vmatpush1.bf16.msra.mxu0 %v1608
    %1674 = vmatprep.mubr.bf16.mxu0 %v1449
    %1675 = vmatmul.mubr.bf16.gmra.mrb[0].mxu0 %v1448
    %v1676 = vpop.f32.mrb[0].mxu0
    %v1677 = vadd.f32 0.0, %v1676
    %v1678 = vpop.f32.mrb[0].mxu0
    %v1679 = vadd.f32 0.0, %v1678
    %v1680 = vpop.f32.mrb[0].mxu0
    %v1681 = vpop.f32.mrb[0].mxu0
    %1682 = vdwg.mxu0
    %v1683 = vpack.c.bf16 %v1677, %v1677
    %v1684 = vpack.c.bf16 %v1679, %v1679
    %v1685 = vld [vmem:[%s12] sm:$0x3]
    %v1688 = vunpack.c.l.s4 1966171168
    %v1689 = vunpack.c.0.s8 %v1688
    %v1690 = vlaneseq
    %v1691 = vshrl.u32 %v1690, 7
    %v1692 = vsub.s32 %v1689, %v1691
    %v1693 = vrot.slane %v1685, %v1692
    %v1694 = vcombine.high %v1693, %v1693
    %v1696 = vunpack.c.l.s4 1966171168
    %v1697 = vunpack.c.0.s8 %v1696
    %v1698 = vlaneseq
    %v1699 = vshrl.u32 %v1698, 7
    %v1700 = vsub.s32 %v1697, %v1699
    %v1701 = vrot.slane %v1693, %v1700
    %v1703 = vunpack.c.l.s4 1966171168
    %v1704 = vunpack.c.0.s8 %v1703
    %v1705 = vlaneseq
    %v1706 = vshrl.u32 %v1705, 7
    %v1707 = vsub.s32 %v1704, %v1706
    %v1708 = vrot.slane %v1694, %v1707
    %v1710 = vpack.i.b16 %v1701, %v1701
    %v1712 = vlaneseq
    %v1713 = vshrl.u32 %v1712, 7
    %v1714 = vsub.s32 0, %v1713
    %v1715 = vrot.slane %v1710, %v1714
    %v1717 = vpack.i.b16 %v1708, %v1708
    %v1719 = vlaneseq
    %v1720 = vshrl.u32 %v1719, 7
    %v1721 = vsub.s32 0, %v1720
    %v1722 = vrot.slane %v1717, %v1721
    %v1723 = vadd.bf16 %v1683, %v1715
    %v1724 = vadd.bf16 %v1684, %v1722
    %v1725 = vmax.bf16 %v1723, 0
    %v1726 = vmax.bf16 %v1724, 0
    %v1727 = vld [vmem:[#allocation14] sm:$0xf]
    %v1728 = vld [vmem:[#allocation14 + $0x4] sm:$0xf]
    %v1729 = vld [vmem:[#allocation14 + $0x8] sm:$0xf]
    %v1730 = vld [vmem:[#allocation14 + $0xc] sm:$0xf]
    %v1731 = vld [vmem:[#allocation14 + $0x10] sm:$0xf]
    %v1732 = vld [vmem:[#allocation14 + $0x14] sm:$0xf]
    %v1733 = vld [vmem:[#allocation14 + $0x18] sm:$0xf]
    %v1734 = vld [vmem:[#allocation14 + $0x1c] sm:$0xf]
    %v1735 = vld [vmem:[#allocation14 + $0x20] sm:$0xf]
    %v1736 = vld [vmem:[#allocation14 + $0x24] sm:$0xf]
    %v1737 = vld [vmem:[#allocation14 + $0x28] sm:$0xf]
    %v1738 = vld [vmem:[#allocation14 + $0x2c] sm:$0xf]
    %v1739 = vld [vmem:[#allocation14 + $0x30] sm:$0xf]
    %v1740 = vld [vmem:[#allocation14 + $0x34] sm:$0xf]
    %v1741 = vld [vmem:[#allocation14 + $0x38] sm:$0xf]
    %v1742 = vld [vmem:[#allocation14 + $0x3c] sm:$0xf]
    %v1743 = vld [vmem:[#allocation14 + $0x40] sm:$0xf]
    %v1744 = vld [vmem:[#allocation14 + $0x44] sm:$0xf]
    %v1745 = vld [vmem:[#allocation14 + $0x48] sm:$0xf]
    %v1746 = vld [vmem:[#allocation14 + $0x4c] sm:$0xf]
    %v1747 = vld [vmem:[#allocation14 + $0x50] sm:$0xf]
    %v1748 = vld [vmem:[#allocation14 + $0x54] sm:$0xf]
    %v1749 = vld [vmem:[#allocation14 + $0x58] sm:$0xf]
    %v1750 = vld [vmem:[#allocation14 + $0x5c] sm:$0xf]
    %v1751 = vld [vmem:[#allocation14 + $0x60] sm:$0xf]
    %v1752 = vld [vmem:[#allocation14 + $0x64] sm:$0xf]
    %v1753 = vld [vmem:[#allocation14 + $0x68] sm:$0xf]
    %v1754 = vld [vmem:[#allocation14 + $0x6c] sm:$0xf]
    %v1755 = vld [vmem:[#allocation14 + $0x70] sm:$0xf]
    %v1756 = vld [vmem:[#allocation14 + $0x74] sm:$0xf]
    %v1757 = vld [vmem:[#allocation14 + $0x78] sm:$0xf]
    %v1758 = vld [vmem:[#allocation14 + $0x7c] sm:$0xf]
    %v1791 = vunpack.c.l.b16 %v1727
    %v1792 = vunpack.c.l.b16 %v1728
    %v1793 = vunpack.c.l.b16 %v1729
    %v1794 = vunpack.c.l.b16 %v1730
    %v1795 = vunpack.c.l.b16 %v1731
    %v1796 = vunpack.c.l.b16 %v1732
    %v1797 = vunpack.c.l.b16 %v1733
    %v1798 = vunpack.c.l.b16 %v1734
    %v1799 = vunpack.c.l.b16 %v1735
    %v1800 = vunpack.c.l.b16 %v1736
    %v1801 = vunpack.c.l.b16 %v1737
    %v1802 = vunpack.c.l.b16 %v1738
    %v1803 = vunpack.c.l.b16 %v1739
    %v1804 = vunpack.c.l.b16 %v1740
    %v1805 = vunpack.c.l.b16 %v1741
    %v1806 = vunpack.c.l.b16 %v1742
    %v1807 = vunpack.c.l.b16 %v1743
    %v1808 = vunpack.c.l.b16 %v1744
    %v1809 = vunpack.c.l.b16 %v1745
    %v1810 = vunpack.c.l.b16 %v1746
    %v1811 = vunpack.c.l.b16 %v1747
    %v1812 = vunpack.c.l.b16 %v1748
    %v1813 = vunpack.c.l.b16 %v1749
    %v1814 = vunpack.c.l.b16 %v1750
    %v1815 = vunpack.c.l.b16 %v1751
    %v1816 = vunpack.c.l.b16 %v1752
    %v1817 = vunpack.c.l.b16 %v1753
    %v1818 = vunpack.c.l.b16 %v1754
    %v1819 = vunpack.c.l.b16 %v1755
    %v1820 = vunpack.c.l.b16 %v1756
    %v1821 = vunpack.c.l.b16 %v1757
    %v1822 = vunpack.c.l.b16 %v1758
    %v1823 = vpack.c.b16 %v1792, %v1791
    %v1824 = vpack.c.b16 %v1794, %v1793
    %v1825 = vpack.c.b16 %v1796, %v1795
    %v1826 = vpack.c.b16 %v1798, %v1797
    %v1827 = vpack.c.b16 %v1800, %v1799
    %v1828 = vpack.c.b16 %v1802, %v1801
    %v1829 = vpack.c.b16 %v1804, %v1803
    %v1830 = vpack.c.b16 %v1806, %v1805
    %v1831 = vpack.c.b16 %v1808, %v1807
    %v1832 = vpack.c.b16 %v1810, %v1809
    %v1833 = vpack.c.b16 %v1812, %v1811
    %v1834 = vpack.c.b16 %v1814, %v1813
    %v1835 = vpack.c.b16 %v1816, %v1815
    %v1836 = vpack.c.b16 %v1818, %v1817
    %v1837 = vpack.c.b16 %v1820, %v1819
    %v1838 = vpack.c.b16 %v1822, %v1821
    %1855 = vmatprep.subr.bf16.mxu0 0
    %1856 = vmatpush1.bf16.msra.mxu0 %v1823
    %1857 = vmatprep.subr.bf16.mxu0 0
    %1858 = vmatpush1.bf16.msra.mxu0 %v1824
    %1859 = vmatprep.subr.bf16.mxu0 0
    %1860 = vmatpush1.bf16.msra.mxu0 %v1825
    %1861 = vmatprep.subr.bf16.mxu0 0
    %1862 = vmatpush1.bf16.msra.mxu0 %v1826
    %1863 = vmatprep.subr.bf16.mxu0 0
    %1864 = vmatpush1.bf16.msra.mxu0 %v1827
    %1865 = vmatprep.subr.bf16.mxu0 0
    %1866 = vmatpush1.bf16.msra.mxu0 %v1828
    %1867 = vmatprep.subr.bf16.mxu0 0
    %1868 = vmatpush1.bf16.msra.mxu0 %v1829
    %1869 = vmatprep.subr.bf16.mxu0 0
    %1870 = vmatpush1.bf16.msra.mxu0 %v1830
    %1871 = vmatprep.subr.bf16.mxu0 0
    %1872 = vmatpush1.bf16.msra.mxu0 %v1831
    %1873 = vmatprep.subr.bf16.mxu0 0
    %1874 = vmatpush1.bf16.msra.mxu0 %v1832
    %1875 = vmatprep.subr.bf16.mxu0 0
    %1876 = vmatpush1.bf16.msra.mxu0 %v1833
    %1877 = vmatprep.subr.bf16.mxu0 0
    %1878 = vmatpush1.bf16.msra.mxu0 %v1834
    %1879 = vmatprep.subr.bf16.mxu0 0
    %1880 = vmatpush1.bf16.msra.mxu0 %v1835
    %1881 = vmatprep.subr.bf16.mxu0 0
    %1882 = vmatpush1.bf16.msra.mxu0 %v1836
    %1883 = vmatprep.subr.bf16.mxu0 0
    %1884 = vmatpush1.bf16.msra.mxu0 %v1837
    %1885 = vmatprep.subr.bf16.mxu0 0
    %1886 = vmatpush1.bf16.msra.mxu0 %v1838
    %1887 = vmatprep.mubr.bf16.mxu0 %v1726
    %1888 = vmatmul.mubr.bf16.gmra.mrb[0].mxu0 %v1725
    %v1889 = vpop.f32.mrb[0].mxu0
    %v1890 = vadd.f32 0.0, %v1889
    %v1891 = vpop.f32.mrb[0].mxu0
    %v1892 = vpop.f32.mrb[0].mxu0
    %v1893 = vpop.f32.mrb[0].mxu0
    %1894 = vdwg.mxu0
    %v1895 = vpack.c.bf16 %v1890, %v1890
    %v1896 = vld [vmem:[%s14] sm:$0x1]
    %v1898 = vpack.i.b16 %v1896, %v1896
    %v1900 = vlaneseq
    %v1901 = vshrl.u32 %v1900, 7
    %v1902 = vsub.s32 0, %v1901
    %v1903 = vrot.slane %v1898, %v1902
    %v1904 = vadd.bf16 %v1895, %v1903
    %v1905 = vmax.bf16 %v1904, 0
    %v1906 = vunpack.c.l.bf16 %v1905
    %v1907 = vlaneseq
    %v1908 = vand.u32 %v1907, 127
    %vm1909 = vcmp.lt.s32.totalorder %v1908, 2
    %v1910 = vsel %vm1909, %v1906, -inf
    %1911 = vmax.xlane.f32.xlu0 %v1910
    %v1912 = vpop.xlane.xlu0 %1911
    %v1913 = vsub.f32 %v1910, %v1912
    %v1914 = vmul.f32 %v1913, 1.442695
    %v1915 = vpow.pop %v1914
    %1916 = vadd.xlane.f32.xlu0 %v1915
    %v1917 = vpop.xlane.xlu0 %1916
    %v1918 = vrcp.pop %v1917
    %v1919 = vmul.f32 %v1915, %v1918
    %v1920 = vpack.c.bf16 %v1919, %v1919
    %1921 = vst [vmem:[#allocation16] sm:$0xf] %v1920
    // Predicated region
    $region94: #{tpu_custom_call.1} parent=1 // pred_check
      _
    $region95: #{tpu_custom_call.1} parent=1 // pred_check_branch
      %1923 = sbr.rel (0) target = $region97
    $region96: #{tpu_custom_call.1} parent=1 // pred_region
      %s1925 = ssub.s32 64, 64
      %1926 = vsyncadd [#allocation4], %s1925
      %s1928 = sshll.u32 [#allocation16], 4
      %s1929 = int_to_ptr.vmem [resolvable:$true] %s1928
      %1931 = dma.vmem_to_hbm [thread:$0]  %s1929, 64, %s15, [#allocation4]
    $region97: #{tpu_custom_call.1} parent=1 // pred_fallthru
      _
    // Predicated region
    $region98: #{tpu_custom_call.1} parent=1 // pred_check
      _
    $region99: #{tpu_custom_call.1} parent=1 // pred_check_branch
      %1933 = sbr.rel (0) target = $region101
    $region100: #{tpu_custom_call.1} parent=1 // pred_region
      %1934 = dma.done [#allocation4], 64
    $region101: #{tpu_custom_call.1} parent=1 // pred_fallthru
      _
    %1935 = vsyncpa [#allocation3], 1
    %1936 = vsyncpa [#allocation6], 1
    %1937 = vsyncpa [#allocation9], 1
    %1938 = vsyncpa [#allocation12], 1
    %1939 = vsyncpa [#allocation15], 1
    %1940 = vsyncpa [#allocation4], 1

// kernel: tpu_custom_call.1
$region0: #{tpu_custom_call.1}
  #allocation0 [shape = 'u32[]', space=smem, size = 0x4, offset = 0x4, fixed_abs, tag = 'smem constant byte address 0x4 - core index']
  #allocation1 [shape = 'u32[144,128]{1,0:T(1,128)}', space=vmem, size = 0x12000, scoped, tag = 'internal scratch']
  %s0 = inlined_call_operand.hbm [shape: f32[8,128], index: 0, kind: input, shape index: {}]
  %s1 = inlined_call_operand.hbm [shape: bf16[128,256], index: 1, kind: input, shape index: {}]
  %s2 = inlined_call_operand.vmem [shape: bf16[1,256], index: 2, kind: input, shape index: {}]
  %s3 = inlined_call_operand.hbm [shape: bf16[256,256], index: 3, kind: input, shape index: {}]
  %s4 = inlined_call_operand.vmem [shape: bf16[1,256], index: 4, kind: input, shape index: {}]
  %s5 = inlined_call_operand.hbm [shape: bf16[256,256], index: 5, kind: input, shape index: {}]
  %s6 = inlined_call_operand.vmem [shape: bf16[1,256], index: 6, kind: input, shape index: {}]
  %s7 = inlined_call_operand.hbm [shape: bf16[256,256], index: 7, kind: input, shape index: {}]
  %s8 = inlined_call_operand.vmem [shape: bf16[1,256], index: 8, kind: input, shape index: {}]
  %s9 = inlined_call_operand.hbm [shape: bf16[256,256], index: 9, kind: input, shape index: {}]
  %s10 = inlined_call_operand.vmem [shape: bf16[1,256], index: 10, kind: input, shape index: {}]
  %s11 = inlined_call_operand.hbm [shape: bf16[256,256], index: 11, kind: input, shape index: {}]
  %s12 = inlined_call_operand.vmem [shape: bf16[1,256], index: 12, kind: input, shape index: {}]
  %s13 = inlined_call_operand.hbm [shape: bf16[256,128], index: 13, kind: input, shape index: {}]
  %s14 = inlined_call_operand.vmem [shape: bf16[1,128], index: 14, kind: input, shape index: {}]
  %s15 = inlined_call_operand.hbm [shape: bf16[8,128], index: 15, kind: output, shape index: {}]
  %s16 = sld [smem:[#allocation0]]
  $region102: #{tpu_custom_call.1} parent=0
    _
  %s18 = ssub.s32 1, %s16
  %s19 = scalar_select 0, %s18, %s16
  $region1: #{tpu_custom_call.1} parent=0
    #allocation2 [shape = 'u8[4096]{0}', space=vmem, size = 0x1000, scoped, tag = 'input window, operand 0, single buffered']
    #allocation3 [shape = 's32[1]{0}', space=sflag, size = 0x4, scoped, tag = 'scoped memory for tpu_custom_call.1']
    #allocation4 [shape = 's32[1]{0}', space=sflag, size = 0x4, scoped, tag = 'scoped memory for tpu_custom_call.1']
    #allocation5 [shape = 'u8[65536]{0}', space=vmem, size = 0x10000, scoped, tag = 'input window, operand 1, single buffered']
    #allocation6 [shape = 's32[1]{0}', space=sflag, size = 0x4, scoped, tag = 'scoped memory for tpu_custom_call.1']
    #allocation7 [shape = 'u8[131072]{0}', space=vmem, size = 0x20000, scoped, tag = 'input window, operand 3, single buffered']
    #allocation8 [shape = 'u8[131072]{0}', space=vmem, size = 0x20000, scoped, tag = 'input window, operand 5, single buffered']
    #allocation9 [shape = 's32[1]{0}', space=sflag, size = 0x4, scoped, tag = 'scoped memory for tpu_custom_call.1']
    #allocation10 [shape = 'u8[131072]{0}', space=vmem, size = 0x20000, scoped, tag = 'input window, operand 7, single buffered']
    #allocation11 [shape = 'u8[131072]{0}', space=vmem, size = 0x20000, scoped, tag = 'input window, operand 9, single buffered']
    #allocation12 [shape = 's32[1]{0}', space=sflag, size = 0x4, scoped, tag = 'scoped memory for tpu_custom_call.1']
    #allocation13 [shape = 'u8[131072]{0}', space=vmem, size = 0x20000, scoped, tag = 'input window, operand 11, single buffered']
    #allocation14 [shape = 'u8[65536]{0}', space=vmem, size = 0x10000, scoped, tag = 'input window, operand 13, single buffered']
    #allocation15 [shape = 's32[1]{0}', space=sflag, size = 0x4, scoped, tag = 'scoped memory for tpu_custom_call.1']
    #allocation16 [shape = 'u8[2048]{0}', space=vmem, size = 0x800, scoped, tag = 'output window, operand 0, single buffered']
    %20 = vsyncpa [#allocation3], 0
    %21 = vsyncpa [#allocation6], 0
    %22 = vsyncpa [#allocation9], 0
    %23 = vsyncpa [#allocation12], 0
    %24 = vsyncpa [#allocation15], 0
    %25 = vsyncpa [#allocation4], 0
    // Predicated region
    $region2: #{tpu_custom_call.1} parent=1 // pred_check
      _
    $region3: #{tpu_custom_call.1} parent=1 // pred_check_branch
      %27 = sbr.rel (0) target = $region5
    $region4: #{tpu_custom_call.1} parent=1 // pred_region
      %s29 = ssub.s32 128, 128
      %30 = vsyncadd [#allocation3], %s29
      %s32 = sshll.u32 [#allocation2], 4
      %s33 = int_to_ptr.vmem [resolvable:$true] %s32
      %35 = dma.hbm_to_vmem [thread:$0]  %s0, 128, %s33, [#allocation3]
    $region5: #{tpu_custom_call.1} parent=1 // pred_fallthru
      _
    // Predicated region
    $region6: #{tpu_custom_call.1} parent=1 // pred_check
      _
    $region7: #{tpu_custom_call.1} parent=1 // pred_check_branch
      %37 = sbr.rel (0) target = $region9
    $region8: #{tpu_custom_call.1} parent=1 // pred_region
      %s39 = ssub.s32 2048, 2048
      %40 = vsyncadd [#allocation6], %s39
      %s41 = sshll.u32 [#allocation5], 4
      %s42 = int_to_ptr.vmem [resolvable:$true] %s41
      %47 = dma.hbm_to_vmem [thread:$0]  %s1, 2048, %s42, [#allocation6], 128, 128, 8
    $region9: #{tpu_custom_call.1} parent=1 // pred_fallthru
      _
    // Predicated region
    $region10: #{tpu_custom_call.1} parent=1 // pred_check
      _
    $region11: #{tpu_custom_call.1} parent=1 // pred_check_branch
      %49 = sbr.rel (0) target = $region13
    $region12: #{tpu_custom_call.1} parent=1 // pred_region
      _
    $region13: #{tpu_custom_call.1} parent=1 // pred_fallthru
      _
    // Predicated region
    $region14: #{tpu_custom_call.1} parent=1 // pred_check
      _
    $region15: #{tpu_custom_call.1} parent=1 // pred_check_branch
      %51 = sbr.rel (0) target = $region17
    $region16: #{tpu_custom_call.1} parent=1 // pred_region
      %s53 = ssub.s32 4096, 4096
      %54 = vsyncadd [#allocation6], %s53
      %s55 = sshll.u32 [#allocation7], 4
      %s56 = int_to_ptr.vmem [resolvable:$true] %s55
      %61 = dma.hbm_to_vmem [thread:$0]  %s3, 4096, %s56, [#allocation6], 128, 128, 8
    $region17: #{tpu_custom_call.1} parent=1 // pred_fallthru
      _
    // Predicated region
    $region18: #{tpu_custom_call.1} parent=1 // pred_check
      _
    $region19: #{tpu_custom_call.1} parent=1 // pred_check_branch
      %63 = sbr.rel (0) target = $region21
    $region20: #{tpu_custom_call.1} parent=1 // pred_region
      _
    $region21: #{tpu_custom_call.1} parent=1 // pred_fallthru
      _
    // Predicated region
    $region22: #{tpu_custom_call.1} parent=1 // pred_check
      _
    $region23: #{tpu_custom_call.1} parent=1 // pred_check_branch
      %65 = sbr.rel (0) target = $region25
    $region24: #{tpu_custom_call.1} parent=1 // pred_region
      %s67 = ssub.s32 4096, 4096
      %68 = vsyncadd [#allocation9], %s67
      %s69 = sshll.u32 [#allocation8], 4
      %s70 = int_to_ptr.vmem [resolvable:$true] %s69
      %75 = dma.hbm_to_vmem [thread:$0]  %s5, 4096, %s70, [#allocation9], 128, 128, 8
    $region25: #{tpu_custom_call.1} parent=1 // pred_fallthru
      _
    // Predicated region
    $region26: #{tpu_custom_call.1} parent=1 // pred_check
      _
    $region27: #{tpu_custom_call.1} parent=1 // pred_check_branch
      %77 = sbr.rel (0) target = $region29
    $region28: #{tpu_custom_call.1} parent=1 // pred_region
      _
    $region29: #{tpu_custom_call.1} parent=1 // pred_fallthru
      _
    // Predicated region
    $region30: #{tpu_custom_call.1} parent=1 // pred_check
      _
    $region31: #{tpu_custom_call.1} parent=1 // pred_check_branch
      %79 = sbr.rel (0) target = $region33
    $region32: #{tpu_custom_call.1} parent=1 // pred_region
      %s81 = ssub.s32 4096, 4096
      %82 = vsyncadd [#allocation9], %s81
      %s83 = sshll.u32 [#allocation10], 4
      %s84 = int_to_ptr.vmem [resolvable:$true] %s83
      %89 = dma.hbm_to_vmem [thread:$0]  %s7, 4096, %s84, [#allocation9], 128, 128, 8
    $region33: #{tpu_custom_call.1} parent=1 // pred_fallthru
      _
    // Predicated region
    $region34: #{tpu_custom_call.1} parent=1 // pred_check
      _
    $region35: #{tpu_custom_call.1} parent=1 // pred_check_branch
      %91 = sbr.rel (0) target = $region37
    $region36: #{tpu_custom_call.1} parent=1 // pred_region
      _
    $region37: #{tpu_custom_call.1} parent=1 // pred_fallthru
      _
    // Predicated region
    $region38: #{tpu_custom_call.1} parent=1 // pred_check
      _
    $region39: #{tpu_custom_call.1} parent=1 // pred_check_branch
      %93 = sbr.rel (0) target = $region41
    $region40: #{tpu_custom_call.1} parent=1 // pred_region
      %s95 = ssub.s32 4096, 4096
      %96 = vsyncadd [#allocation12], %s95
      %s97 = sshll.u32 [#allocation11], 4
      %s98 = int_to_ptr.vmem [resolvable:$true] %s97
      %103 = dma.hbm_to_vmem [thread:$0]  %s9, 4096, %s98, [#allocation12], 128, 128, 8
    $region41: #{tpu_custom_call.1} parent=1 // pred_fallthru
      _
    // Predicated region
    $region42: #{tpu_custom_call.1} parent=1 // pred_check
      _
    $region43: #{tpu_custom_call.1} parent=1 // pred_check_branch
      %105 = sbr.rel (0) target = $region45
    $region44: #{tpu_custom_call.1} parent=1 // pred_region
      _
    $region45: #{tpu_custom_call.1} parent=1 // pred_fallthru
      _
    // Predicated region
    $region46: #{tpu_custom_call.1} parent=1 // pred_check
      _
    $region47: #{tpu_custom_call.1} parent=1 // pred_check_branch
      %107 = sbr.rel (0) target = $region49
    $region48: #{tpu_custom_call.1} parent=1 // pred_region
      %s109 = ssub.s32 4096, 4096
      %110 = vsyncadd [#allocation12], %s109
      %s111 = sshll.u32 [#allocation13], 4
      %s112 = int_to_ptr.vmem [resolvable:$true] %s111
      %117 = dma.hbm_to_vmem [thread:$0]  %s11, 4096, %s112, [#allocation12], 128, 128, 8
    $region49: #{tpu_custom_call.1} parent=1 // pred_fallthru
      _
    // Predicated region
    $region50: #{tpu_custom_call.1} parent=1 // pred_check
      _
    $region51: #{tpu_custom_call.1} parent=1 // pred_check_branch
      %119 = sbr.rel (0) target = $region53
    $region52: #{tpu_custom_call.1} parent=1 // pred_region
      _
    $region53: #{tpu_custom_call.1} parent=1 // pred_fallthru
      _
    // Predicated region
    $region54: #{tpu_custom_call.1} parent=1 // pred_check
      _
    $region55: #{tpu_custom_call.1} parent=1 // pred_check_branch
      %121 = sbr.rel (0) target = $region57
    $region56: #{tpu_custom_call.1} parent=1 // pred_region
      %s123 = ssub.s32 2048, 2048
      %124 = vsyncadd [#allocation15], %s123
      %s125 = sshll.u32 [#allocation14], 4
      %s126 = int_to_ptr.vmem [resolvable:$true] %s125
      %131 = dma.hbm_to_vmem [thread:$0]  %s13, 2048, %s126, [#allocation15], 64, 64, 4
    $region57: #{tpu_custom_call.1} parent=1 // pred_fallthru
      _
    // Predicated region
    $region58: #{tpu_custom_call.1} parent=1 // pred_check
      _
    $region59: #{tpu_custom_call.1} parent=1 // pred_check_branch
      %133 = sbr.rel (0) target = $region61
    $region60: #{tpu_custom_call.1} parent=1 // pred_region
      _
    $region61: #{tpu_custom_call.1} parent=1 // pred_fallthru
      _
    // Predicated region
    $region62: #{tpu_custom_call.1} parent=1 // pred_check
      _
    $region63: #{tpu_custom_call.1} parent=1 // pred_check_branch
      %135 = sbr.rel (0) target = $region65
    $region64: #{tpu_custom_call.1} parent=1 // pred_region
      %136 = dma.done [#allocation3], 128
    $region65: #{tpu_custom_call.1} parent=1 // pred_fallthru
      _
    // Predicated region
    $region66: #{tpu_custom_call.1} parent=1 // pred_check
      _
    $region67: #{tpu_custom_call.1} parent=1 // pred_check_branch
      %138 = sbr.rel (0) target = $region69
    $region68: #{tpu_custom_call.1} parent=1 // pred_region
      %139 = dma.done [#allocation6], 2048
    $region69: #{tpu_custom_call.1} parent=1 // pred_fallthru
      _
    // Predicated region
    $region70: #{tpu_custom_call.1} parent=1 // pred_check
      _
    $region71: #{tpu_custom_call.1} parent=1 // pred_check_branch
      %141 = sbr.rel (0) target = $region73
    $region72: #{tpu_custom_call.1} parent=1 // pred_region
      %142 = dma.done [#allocation6], 4096
    $region73: #{tpu_custom_call.1} parent=1 // pred_fallthru
      _
    // Predicated region
    $region74: #{tpu_custom_call.1} parent=1 // pred_check
      _
    $region75: #{tpu_custom_call.1} parent=1 // pred_check_branch
      %144 = sbr.rel (0) target = $region77
    $region76: #{tpu_custom_call.1} parent=1 // pred_region
      %145 = dma.done [#allocation9], 4096
    $region77: #{tpu_custom_call.1} parent=1 // pred_fallthru
      _
    // Predicated region
    $region78: #{tpu_custom_call.1} parent=1 // pred_check
      _
    $region79: #{tpu_custom_call.1} parent=1 // pred_check_branch
      %147 = sbr.rel (0) target = $region81
    $region80: #{tpu_custom_call.1} parent=1 // pred_region
      %148 = dma.done [#allocation9], 4096
    $region81: #{tpu_custom_call.1} parent=1 // pred_fallthru
      _
    // Predicated region
    $region82: #{tpu_custom_call.1} parent=1 // pred_check
      _
    $region83: #{tpu_custom_call.1} parent=1 // pred_check_branch
      %150 = sbr.rel (0) target = $region85
    $region84: #{tpu_custom_call.1} parent=1 // pred_region
      %151 = dma.done [#allocation12], 4096
    $region85: #{tpu_custom_call.1} parent=1 // pred_fallthru
      _
    // Predicated region
    $region86: #{tpu_custom_call.1} parent=1 // pred_check
      _
    $region87: #{tpu_custom_call.1} parent=1 // pred_check_branch
      %153 = sbr.rel (0) target = $region89
    $region88: #{tpu_custom_call.1} parent=1 // pred_region
      %154 = dma.done [#allocation12], 4096
    $region89: #{tpu_custom_call.1} parent=1 // pred_fallthru
      _
    // Predicated region
    $region90: #{tpu_custom_call.1} parent=1 // pred_check
      _
    $region91: #{tpu_custom_call.1} parent=1 // pred_check_branch
      %156 = sbr.rel (0) target = $region93
    $region92: #{tpu_custom_call.1} parent=1 // pred_region
      %157 = dma.done [#allocation15], 2048
    $region93: #{tpu_custom_call.1} parent=1 // pred_fallthru
      _
    %v159 = vld [vmem:[#allocation2] sm:$0xff]
    %v160 = vpack.c.bf16 %v159, %v159
    %v161 = vld [vmem:[#allocation5] sm:$0xff]
    %v162 = vld [vmem:[#allocation5 + $0x8] sm:$0xff]
    %v163 = vld [vmem:[#allocation5 + $0x10] sm:$0xff]
    %v164 = vld [vmem:[#allocation5 + $0x18] sm:$0xff]
    %v165 = vld [vmem:[#allocation5 + $0x20] sm:$0xff]
    %v166 = vld [vmem:[#allocation5 + $0x28] sm:$0xff]
    %v167 = vld [vmem:[#allocation5 + $0x30] sm:$0xff]
    %v168 = vld [vmem:[#allocation5 + $0x38] sm:$0xff]
    %v169 = vld [vmem:[#allocation5 + $0x40] sm:$0xff]
    %v170 = vld [vmem:[#allocation5 + $0x48] sm:$0xff]
    %v171 = vld [vmem:[#allocation5 + $0x50] sm:$0xff]
    %v172 = vld [vmem:[#allocation5 + $0x58] sm:$0xff]
    %v173 = vld [vmem:[#allocation5 + $0x60] sm:$0xff]
    %v174 = vld [vmem:[#allocation5 + $0x68] sm:$0xff]
    %v175 = vld [vmem:[#allocation5 + $0x70] sm:$0xff]
    %v176 = vld [vmem:[#allocation5 + $0x78] sm:$0xff]
    %v193 = vunpack.c.l.b16 %v161
    %v194 = vunpack.c.h.b16 %v161
    %v195 = vunpack.c.l.b16 %v162
    %v196 = vunpack.c.h.b16 %v162
    %v197 = vunpack.c.l.b16 %v163
    %v198 = vunpack.c.h.b16 %v163
    %v199 = vunpack.c.l.b16 %v164
    %v200 = vunpack.c.h.b16 %v164
    %v201 = vunpack.c.l.b16 %v165
    %v202 = vunpack.c.h.b16 %v165
    %v203 = vunpack.c.l.b16 %v166
    %v204 = vunpack.c.h.b16 %v166
    %v205 = vunpack.c.l.b16 %v167
    %v206 = vunpack.c.h.b16 %v167
    %v207 = vunpack.c.l.b16 %v168
    %v208 = vunpack.c.h.b16 %v168
    %v209 = vunpack.c.l.b16 %v169
    %v210 = vunpack.c.h.b16 %v169
    %v211 = vunpack.c.l.b16 %v170
    %v212 = vunpack.c.h.b16 %v170
    %v213 = vunpack.c.l.b16 %v171
    %v214 = vunpack.c.h.b16 %v171
    %v215 = vunpack.c.l.b16 %v172
    %v216 = vunpack.c.h.b16 %v172
    %v217 = vunpack.c.l.b16 %v173
    %v218 = vunpack.c.h.b16 %v173
    %v219 = vunpack.c.l.b16 %v174
    %v220 = vunpack.c.h.b16 %v174
    %v221 = vunpack.c.l.b16 %v175
    %v222 = vunpack.c.h.b16 %v175
    %v223 = vunpack.c.l.b16 %v176
    %v224 = vunpack.c.h.b16 %v176
    %v225 = vpack.c.b16 %v195, %v193
    %v226 = vpack.c.b16 %v196, %v194
    %v227 = vpack.c.b16 %v199, %v197
    %v228 = vpack.c.b16 %v200, %v198
    %v229 = vpack.c.b16 %v203, %v201
    %v230 = vpack.c.b16 %v204, %v202
    %v231 = vpack.c.b16 %v207, %v205
    %v232 = vpack.c.b16 %v208, %v206
    %v233 = vpack.c.b16 %v211, %v209
    %v234 = vpack.c.b16 %v212, %v210
    %v235 = vpack.c.b16 %v215, %v213
    %v236 = vpack.c.b16 %v216, %v214
    %v237 = vpack.c.b16 %v219, %v217
    %v238 = vpack.c.b16 %v220, %v218
    %v239 = vpack.c.b16 %v223, %v221
    %v240 = vpack.c.b16 %v224, %v222
    %257 = vmatprep.subr.bf16.mxu0 %v226
    %258 = vmatpush1.bf16.msra.mxu0 %v225
    %259 = vmatprep.subr.bf16.mxu0 %v228
    %260 = vmatpush1.bf16.msra.mxu0 %v227
    %261 = vmatprep.subr.bf16.mxu0 %v230
    %262 = vmatpush1.bf16.msra.mxu0 %v229
    %263 = vmatprep.subr.bf16.mxu0 %v232
    %264 = vmatpush1.bf16.msra.mxu0 %v231
    %265 = vmatprep.subr.bf16.mxu0 %v234
    %266 = vmatpush1.bf16.msra.mxu0 %v233
    %267 = vmatprep.subr.bf16.mxu0 %v236
    %268 = vmatpush1.bf16.msra.mxu0 %v235
    %269 = vmatprep.subr.bf16.mxu0 %v238
    %270 = vmatpush1.bf16.msra.mxu0 %v237
    %271 = vmatprep.subr.bf16.mxu0 %v240
    %272 = vmatpush1.bf16.msra.mxu0 %v239
    %273 = vmatprep.subr.bf16.mxu0 0
    %274 = vmatpush1.bf16.msra.mxu0 0
    %275 = vmatprep.subr.bf16.mxu0 0
    %276 = vmatpush1.bf16.msra.mxu0 0
    %277 = vmatprep.subr.bf16.mxu0 0
    %278 = vmatpush1.bf16.msra.mxu0 0
    %279 = vmatprep.subr.bf16.mxu0 0
    %280 = vmatpush1.bf16.msra.mxu0 0
    %281 = vmatprep.subr.bf16.mxu0 0
    %282 = vmatpush1.bf16.msra.mxu0 0
    %283 = vmatprep.subr.bf16.mxu0 0
    %284 = vmatpush1.bf16.msra.mxu0 0
    %285 = vmatprep.subr.bf16.mxu0 0
    %286 = vmatpush1.bf16.msra.mxu0 0
    %287 = vmatprep.subr.bf16.mxu0 0
    %288 = vmatpush1.bf16.msra.mxu0 0
    %289 = vmatprep.mubr.bf16.mxu0 0
    %290 = vmatmul.mubr.bf16.gmra.mrb[0].mxu0 %v160
    %v291 = vpop.f32.mrb[0].mxu0
    %v292 = vadd.f32 0.0, %v291
    %v293 = vpop.f32.mrb[0].mxu0
    %v294 = vadd.f32 0.0, %v293
    %v295 = vpop.f32.mrb[0].mxu0
    %v296 = vpop.f32.mrb[0].mxu0
    %297 = vdwg.mxu0
    %v298 = vpack.c.bf16 %v292, %v292
    %v299 = vpack.c.bf16 %v294, %v294
    %v300 = vld [vmem:[%s2] sm:$0x3]
    %v303 = vunpack.c.l.s4 1966171168
    %v304 = vunpack.c.0.s8 %v303
    %v305 = vlaneseq
    %v306 = vshrl.u32 %v305, 7
    %v307 = vsub.s32 %v304, %v306
    %v308 = vrot.slane %v300, %v307
    %v309 = vcombine.high %v308, %v308
    %v311 = vunpack.c.l.s4 1966171168
    %v312 = vunpack.c.0.s8 %v311
    %v313 = vlaneseq
    %v314 = vshrl.u32 %v313, 7
    %v315 = vsub.s32 %v312, %v314
    %v316 = vrot.slane %v308, %v315
    %v318 = vunpack.c.l.s4 1966171168
    %v319 = vunpack.c.0.s8 %v318
    %v320 = vlaneseq
    %v321 = vshrl.u32 %v320, 7
    %v322 = vsub.s32 %v319, %v321
    %v323 = vrot.slane %v309, %v322
    %v325 = vpack.i.b16 %v316, %v316
    %v327 = vlaneseq
    %v328 = vshrl.u32 %v327, 7
    %v329 = vsub.s32 0, %v328
    %v330 = vrot.slane %v325, %v329
    %v332 = vpack.i.b16 %v323, %v323
    %v334 = vlaneseq
    %v335 = vshrl.u32 %v334, 7
    %v336 = vsub.s32 0, %v335
    %v337 = vrot.slane %v332, %v336
    %v338 = vadd.bf16 %v298, %v330
    %v339 = vadd.bf16 %v299, %v337
    %v340 = vmax.bf16 %v338, 0
    %v341 = vmax.bf16 %v339, 0
    %v342 = vld [vmem:[#allocation7] sm:$0xff]
    %v343 = vld [vmem:[#allocation7 + $0x8] sm:$0xff]
    %v344 = vld [vmem:[#allocation7 + $0x10] sm:$0xff]
    %v345 = vld [vmem:[#allocation7 + $0x18] sm:$0xff]
    %v346 = vld [vmem:[#allocation7 + $0x20] sm:$0xff]
    %v347 = vld [vmem:[#allocation7 + $0x28] sm:$0xff]
    %v348 = vld [vmem:[#allocation7 + $0x30] sm:$0xff]
    %v349 = vld [vmem:[#allocation7 + $0x38] sm:$0xff]
    %v350 = vld [vmem:[#allocation7 + $0x40] sm:$0xff]
    %v351 = vld [vmem:[#allocation7 + $0x48] sm:$0xff]
    %v352 = vld [vmem:[#allocation7 + $0x50] sm:$0xff]
    %v353 = vld [vmem:[#allocation7 + $0x58] sm:$0xff]
    %v354 = vld [vmem:[#allocation7 + $0x60] sm:$0xff]
    %v355 = vld [vmem:[#allocation7 + $0x68] sm:$0xff]
    %v356 = vld [vmem:[#allocation7 + $0x70] sm:$0xff]
    %v357 = vld [vmem:[#allocation7 + $0x78] sm:$0xff]
    %v358 = vld [vmem:[#allocation7 + $0x80] sm:$0xff]
    %v359 = vld [vmem:[#allocation7 + $0x88] sm:$0xff]
    %v360 = vld [vmem:[#allocation7 + $0x90] sm:$0xff]
    %v361 = vld [vmem:[#allocation7 + $0x98] sm:$0xff]
    %v362 = vld [vmem:[#allocation7 + $0xa0] sm:$0xff]
    %v363 = vld [vmem:[#allocation7 + $0xa8] sm:$0xff]
    %v364 = vld [vmem:[#allocation7 + $0xb0] sm:$0xff]
    %v365 = vld [vmem:[#allocation7 + $0xb8] sm:$0xff]
    %v366 = vld [vmem:[#allocation7 + $0xc0] sm:$0xff]
    %v367 = vld [vmem:[#allocation7 + $0xc8] sm:$0xff]
    %v368 = vld [vmem:[#allocation7 + $0xd0] sm:$0xff]
    %v369 = vld [vmem:[#allocation7 + $0xd8] sm:$0xff]
    %v370 = vld [vmem:[#allocation7 + $0xe0] sm:$0xff]
    %v371 = vld [vmem:[#allocation7 + $0xe8] sm:$0xff]
    %v372 = vld [vmem:[#allocation7 + $0xf0] sm:$0xff]
    %v373 = vld [vmem:[#allocation7 + $0xf8] sm:$0xff]
    %v406 = vunpack.c.l.b16 %v342
    %v407 = vunpack.c.h.b16 %v342
    %v408 = vunpack.c.l.b16 %v343
    %v409 = vunpack.c.h.b16 %v343
    %v410 = vunpack.c.l.b16 %v344
    %v411 = vunpack.c.h.b16 %v344
    %v412 = vunpack.c.l.b16 %v345
    %v413 = vunpack.c.h.b16 %v345
    %v414 = vunpack.c.l.b16 %v346
    %v415 = vunpack.c.h.b16 %v346
    %v416 = vunpack.c.l.b16 %v347
    %v417 = vunpack.c.h.b16 %v347
    %v418 = vunpack.c.l.b16 %v348
    %v419 = vunpack.c.h.b16 %v348
    %v420 = vunpack.c.l.b16 %v349
    %v421 = vunpack.c.h.b16 %v349
    %v422 = vunpack.c.l.b16 %v350
    %v423 = vunpack.c.h.b16 %v350
    %v424 = vunpack.c.l.b16 %v351
    %v425 = vunpack.c.h.b16 %v351
    %v426 = vunpack.c.l.b16 %v352
    %v427 = vunpack.c.h.b16 %v352
    %v428 = vunpack.c.l.b16 %v353
    %v429 = vunpack.c.h.b16 %v353
    %v430 = vunpack.c.l.b16 %v354
    %v431 = vunpack.c.h.b16 %v354
    %v432 = vunpack.c.l.b16 %v355
    %v433 = vunpack.c.h.b16 %v355
    %v434 = vunpack.c.l.b16 %v356
    %v435 = vunpack.c.h.b16 %v356
    %v436 = vunpack.c.l.b16 %v357
    %v437 = vunpack.c.h.b16 %v357
    %v438 = vunpack.c.l.b16 %v358
    %v439 = vunpack.c.h.b16 %v358
    %v440 = vunpack.c.l.b16 %v359
    %v441 = vunpack.c.h.b16 %v359
    %v442 = vunpack.c.l.b16 %v360
    %v443 = vunpack.c.h.b16 %v360
    %v444 = vunpack.c.l.b16 %v361
    %v445 = vunpack.c.h.b16 %v361
    %v446 = vunpack.c.l.b16 %v362
    %v447 = vunpack.c.h.b16 %v362
    %v448 = vunpack.c.l.b16 %v363
    %v449 = vunpack.c.h.b16 %v363
    %v450 = vunpack.c.l.b16 %v364
    %v451 = vunpack.c.h.b16 %v364
    %v452 = vunpack.c.l.b16 %v365
    %v453 = vunpack.c.h.b16 %v365
    %v454 = vunpack.c.l.b16 %v366
    %v455 = vunpack.c.h.b16 %v366
    %v456 = vunpack.c.l.b16 %v367
    %v457 = vunpack.c.h.b16 %v367
    %v458 = vunpack.c.l.b16 %v368
    %v459 = vunpack.c.h.b16 %v368
    %v460 = vunpack.c.l.b16 %v369
    %v461 = vunpack.c.h.b16 %v369
    %v462 = vunpack.c.l.b16 %v370
    %v463 = vunpack.c.h.b16 %v370
    %v464 = vunpack.c.l.b16 %v371
    %v465 = vunpack.c.h.b16 %v371
    %v466 = vunpack.c.l.b16 %v372
    %v467 = vunpack.c.h.b16 %v372
    %v468 = vunpack.c.l.b16 %v373
    %v469 = vunpack.c.h.b16 %v373
    %v470 = vpack.c.b16 %v408, %v406
    %v471 = vpack.c.b16 %v409, %v407
    %v472 = vpack.c.b16 %v412, %v410
    %v473 = vpack.c.b16 %v413, %v411
    %v474 = vpack.c.b16 %v416, %v414
    %v475 = vpack.c.b16 %v417, %v415
    %v476 = vpack.c.b16 %v420, %v418
    %v477 = vpack.c.b16 %v421, %v419
    %v478 = vpack.c.b16 %v424, %v422
    %v479 = vpack.c.b16 %v425, %v423
    %v480 = vpack.c.b16 %v428, %v426
    %v481 = vpack.c.b16 %v429, %v427
    %v482 = vpack.c.b16 %v432, %v430
    %v483 = vpack.c.b16 %v433, %v431
    %v484 = vpack.c.b16 %v436, %v434
    %v485 = vpack.c.b16 %v437, %v435
    %v486 = vpack.c.b16 %v440, %v438
    %v487 = vpack.c.b16 %v441, %v439
    %v488 = vpack.c.b16 %v444, %v442
    %v489 = vpack.c.b16 %v445, %v443
    %v490 = vpack.c.b16 %v448, %v446
    %v491 = vpack.c.b16 %v449, %v447
    %v492 = vpack.c.b16 %v452, %v450
    %v493 = vpack.c.b16 %v453, %v451
    %v494 = vpack.c.b16 %v456, %v454
    %v495 = vpack.c.b16 %v457, %v455
    %v496 = vpack.c.b16 %v460, %v458
    %v497 = vpack.c.b16 %v461, %v459
    %v498 = vpack.c.b16 %v464, %v462
    %v499 = vpack.c.b16 %v465, %v463
    %v500 = vpack.c.b16 %v468, %v466
    %v501 = vpack.c.b16 %v469, %v467
    %534 = vmatprep.subr.bf16.mxu0 %v471
    %535 = vmatpush1.bf16.msra.mxu0 %v470
    %536 = vmatprep.subr.bf16.mxu0 %v473
    %537 = vmatpush1.bf16.msra.mxu0 %v472
    %538 = vmatprep.subr.bf16.mxu0 %v475
    %539 = vmatpush1.bf16.msra.mxu0 %v474
    %540 = vmatprep.subr.bf16.mxu0 %v477
    %541 = vmatpush1.bf16.msra.mxu0 %v476
    %542 = vmatprep.subr.bf16.mxu0 %v479
    %543 = vmatpush1.bf16.msra.mxu0 %v478
    %544 = vmatprep.subr.bf16.mxu0 %v481
    %545 = vmatpush1.bf16.msra.mxu0 %v480
    %546 = vmatprep.subr.bf16.mxu0 %v483
    %547 = vmatpush1.bf16.msra.mxu0 %v482
    %548 = vmatprep.subr.bf16.mxu0 %v485
    %549 = vmatpush1.bf16.msra.mxu0 %v484
    %550 = vmatprep.subr.bf16.mxu0 %v487
    %551 = vmatpush1.bf16.msra.mxu0 %v486
    %552 = vmatprep.subr.bf16.mxu0 %v489
    %553 = vmatpush1.bf16.msra.mxu0 %v488
    %554 = vmatprep.subr.bf16.mxu0 %v491
    %555 = vmatpush1.bf16.msra.mxu0 %v490
    %556 = vmatprep.subr.bf16.mxu0 %v493
    %557 = vmatpush1.bf16.msra.mxu0 %v492
    %558 = vmatprep.subr.bf16.mxu0 %v495
    %559 = vmatpush1.bf16.msra.mxu0 %v494
    %560 = vmatprep.subr.bf16.mxu0 %v497
    %561 = vmatpush1.bf16.msra.mxu0 %v496
    %562 = vmatprep.subr.bf16.mxu0 %v499
    %563 = vmatpush1.bf16.msra.mxu0 %v498
    %564 = vmatprep.subr.bf16.mxu0 %v501
    %565 = vmatpush1.bf16.msra.mxu0 %v500
    %566 = vmatprep.mubr.bf16.mxu0 %v341
    %567 = vmatmul.mubr.bf16.gmra.mrb[0].mxu0 %v340
    %v568 = vpop.f32.mrb[0].mxu0
    %v569 = vadd.f32 0.0, %v568
    %v570 = vpop.f32.mrb[0].mxu0
    %v571 = vadd.f32 0.0, %v570
    %v572 = vpop.f32.mrb[0].mxu0
    %v573 = vpop.f32.mrb[0].mxu0
    %574 = vdwg.mxu0
    %v575 = vpack.c.bf16 %v569, %v569
    %v576 = vpack.c.bf16 %v571, %v571
    %v577 = vld [vmem:[%s4] sm:$0x3]
    %v580 = vunpack.c.l.s4 1966171168
    %v581 = vunpack.c.0.s8 %v580
    %v582 = vlaneseq
    %v583 = vshrl.u32 %v582, 7
    %v584 = vsub.s32 %v581, %v583
    %v585 = vrot.slane %v577, %v584
    %v586 = vcombine.high %v585, %v585
    %v588 = vunpack.c.l.s4 1966171168
    %v589 = vunpack.c.0.s8 %v588
    %v590 = vlaneseq
    %v591 = vshrl.u32 %v590, 7
    %v592 = vsub.s32 %v589, %v591
    %v593 = vrot.slane %v585, %v592
    %v595 = vunpack.c.l.s4 1966171168
    %v596 = vunpack.c.0.s8 %v595
    %v597 = vlaneseq
    %v598 = vshrl.u32 %v597, 7
    %v599 = vsub.s32 %v596, %v598
    %v600 = vrot.slane %v586, %v599
    %v602 = vpack.i.b16 %v593, %v593
    %v604 = vlaneseq
    %v605 = vshrl.u32 %v604, 7
    %v606 = vsub.s32 0, %v605
    %v607 = vrot.slane %v602, %v606
    %v609 = vpack.i.b16 %v600, %v600
    %v611 = vlaneseq
    %v612 = vshrl.u32 %v611, 7
    %v613 = vsub.s32 0, %v612
    %v614 = vrot.slane %v609, %v613
    %v615 = vadd.bf16 %v575, %v607
    %v616 = vadd.bf16 %v576, %v614
    %v617 = vmax.bf16 %v615, 0
    %v618 = vmax.bf16 %v616, 0
    %v619 = vld [vmem:[#allocation8] sm:$0xff]
    %v620 = vld [vmem:[#allocation8 + $0x8] sm:$0xff]
    %v621 = vld [vmem:[#allocation8 + $0x10] sm:$0xff]
    %v622 = vld [vmem:[#allocation8 + $0x18] sm:$0xff]
    %v623 = vld [vmem:[#allocation8 + $0x20] sm:$0xff]
    %v624 = vld [vmem:[#allocation8 + $0x28] sm:$0xff]
    %v625 = vld [vmem:[#allocation8 + $0x30] sm:$0xff]
    %v626 = vld [vmem:[#allocation8 + $0x38] sm:$0xff]
    %v627 = vld [vmem:[#allocation8 + $0x40] sm:$0xff]
    %v628 = vld [vmem:[#allocation8 + $0x48] sm:$0xff]
    %v629 = vld [vmem:[#allocation8 + $0x50] sm:$0xff]
    %v630 = vld [vmem:[#allocation8 + $0x58] sm:$0xff]
    %v631 = vld [vmem:[#allocation8 + $0x60] sm:$0xff]
    %v632 = vld [vmem:[#allocation8 + $0x68] sm:$0xff]
    %v633 = vld [vmem:[#allocation8 + $0x70] sm:$0xff]
    %v634 = vld [vmem:[#allocation8 + $0x78] sm:$0xff]
    %v635 = vld [vmem:[#allocation8 + $0x80] sm:$0xff]
    %v636 = vld [vmem:[#allocation8 + $0x88] sm:$0xff]
    %v637 = vld [vmem:[#allocation8 + $0x90] sm:$0xff]
    %v638 = vld [vmem:[#allocation8 + $0x98] sm:$0xff]
    %v639 = vld [vmem:[#allocation8 + $0xa0] sm:$0xff]
    %v640 = vld [vmem:[#allocation8 + $0xa8] sm:$0xff]
    %v641 = vld [vmem:[#allocation8 + $0xb0] sm:$0xff]
    %v642 = vld [vmem:[#allocation8 + $0xb8] sm:$0xff]
    %v643 = vld [vmem:[#allocation8 + $0xc0] sm:$0xff]
    %v644 = vld [vmem:[#allocation8 + $0xc8] sm:$0xff]
    %v645 = vld [vmem:[#allocation8 + $0xd0] sm:$0xff]
    %v646 = vld [vmem:[#allocation8 + $0xd8] sm:$0xff]
    %v647 = vld [vmem:[#allocation8 + $0xe0] sm:$0xff]
    %v648 = vld [vmem:[#allocation8 + $0xe8] sm:$0xff]
    %v649 = vld [vmem:[#allocation8 + $0xf0] sm:$0xff]
    %v650 = vld [vmem:[#allocation8 + $0xf8] sm:$0xff]
    %v683 = vunpack.c.l.b16 %v619
    %v684 = vunpack.c.h.b16 %v619
    %v685 = vunpack.c.l.b16 %v620
    %v686 = vunpack.c.h.b16 %v620
    %v687 = vunpack.c.l.b16 %v621
    %v688 = vunpack.c.h.b16 %v621
    %v689 = vunpack.c.l.b16 %v622
    %v690 = vunpack.c.h.b16 %v622
    %v691 = vunpack.c.l.b16 %v623
    %v692 = vunpack.c.h.b16 %v623
    %v693 = vunpack.c.l.b16 %v624
    %v694 = vunpack.c.h.b16 %v624
    %v695 = vunpack.c.l.b16 %v625
    %v696 = vunpack.c.h.b16 %v625
    %v697 = vunpack.c.l.b16 %v626
    %v698 = vunpack.c.h.b16 %v626
    %v699 = vunpack.c.l.b16 %v627
    %v700 = vunpack.c.h.b16 %v627
    %v701 = vunpack.c.l.b16 %v628
    %v702 = vunpack.c.h.b16 %v628
    %v703 = vunpack.c.l.b16 %v629
    %v704 = vunpack.c.h.b16 %v629
    %v705 = vunpack.c.l.b16 %v630
    %v706 = vunpack.c.h.b16 %v630
    %v707 = vunpack.c.l.b16 %v631
    %v708 = vunpack.c.h.b16 %v631
    %v709 = vunpack.c.l.b16 %v632
    %v710 = vunpack.c.h.b16 %v632
    %v711 = vunpack.c.l.b16 %v633
    %v712 = vunpack.c.h.b16 %v633
    %v713 = vunpack.c.l.b16 %v634
    %v714 = vunpack.c.h.b16 %v634
    %v715 = vunpack.c.l.b16 %v635
    %v716 = vunpack.c.h.b16 %v635
    %v717 = vunpack.c.l.b16 %v636
    %v718 = vunpack.c.h.b16 %v636
    %v719 = vunpack.c.l.b16 %v637
    %v720 = vunpack.c.h.b16 %v637
    %v721 = vunpack.c.l.b16 %v638
    %v722 = vunpack.c.h.b16 %v638
    %v723 = vunpack.c.l.b16 %v639
    %v724 = vunpack.c.h.b16 %v639
    %v725 = vunpack.c.l.b16 %v640
    %v726 = vunpack.c.h.b16 %v640
    %v727 = vunpack.c.l.b16 %v641
    %v728 = vunpack.c.h.b16 %v641
    %v729 = vunpack.c.l.b16 %v642
    %v730 = vunpack.c.h.b16 %v642
    %v731 = vunpack.c.l.b16 %v643
    %v732 = vunpack.c.h.b16 %v643
    %v733 = vunpack.c.l.b16 %v644
    %v734 = vunpack.c.h.b16 %v644
    %v735 = vunpack.c.l.b16 %v645
    %v736 = vunpack.c.h.b16 %v645
    %v737 = vunpack.c.l.b16 %v646
    %v738 = vunpack.c.h.b16 %v646
    %v739 = vunpack.c.l.b16 %v647
    %v740 = vunpack.c.h.b16 %v647
    %v741 = vunpack.c.l.b16 %v648
    %v742 = vunpack.c.h.b16 %v648
    %v743 = vunpack.c.l.b16 %v649
    %v744 = vunpack.c.h.b16 %v649
    %v745 = vunpack.c.l.b16 %v650
    %v746 = vunpack.c.h.b16 %v650
    %v747 = vpack.c.b16 %v685, %v683
    %v748 = vpack.c.b16 %v686, %v684
    %v749 = vpack.c.b16 %v689, %v687
    %v750 = vpack.c.b16 %v690, %v688
    %v751 = vpack.c.b16 %v693, %v691
    %v752 = vpack.c.b16 %v694, %v692
    %v753 = vpack.c.b16 %v697, %v695
    %v754 = vpack.c.b16 %v698, %v696
    %v755 = vpack.c.b16 %v701, %v699
    %v756 = vpack.c.b16 %v702, %v700
    %v757 = vpack.c.b16 %v705, %v703
    %v758 = vpack.c.b16 %v706, %v704
    %v759 = vpack.c.b16 %v709, %v707
    %v760 = vpack.c.b16 %v710, %v708
    %v761 = vpack.c.b16 %v713, %v711
    %v762 = vpack.c.b16 %v714, %v712
    %v763 = vpack.c.b16 %v717, %v715
    %v764 = vpack.c.b16 %v718, %v716
    %v765 = vpack.c.b16 %v721, %v719
    %v766 = vpack.c.b16 %v722, %v720
    %v767 = vpack.c.b16 %v725, %v723
    %v768 = vpack.c.b16 %v726, %v724
    %v769 = vpack.c.b16 %v729, %v727
    %v770 = vpack.c.b16 %v730, %v728
    %v771 = vpack.c.b16 %v733, %v731
    %v772 = vpack.c.b16 %v734, %v732
    %v773 = vpack.c.b16 %v737, %v735
    %v774 = vpack.c.b16 %v738, %v736
    %v775 = vpack.c.b16 %v741, %v739
    %v776 = vpack.c.b16 %v742, %v740
    %v777 = vpack.c.b16 %v745, %v743
    %v778 = vpack.c.b16 %v746, %v744
    %811 = vmatprep.subr.bf16.mxu0 %v748
    %812 = vmatpush1.bf16.msra.mxu0 %v747
    %813 = vmatprep.subr.bf16.mxu0 %v750
    %814 = vmatpush1.bf16.msra.mxu0 %v749
    %815 = vmatprep.subr.bf16.mxu0 %v752
    %816 = vmatpush1.bf16.msra.mxu0 %v751
    %817 = vmatprep.subr.bf16.mxu0 %v754
    %818 = vmatpush1.bf16.msra.mxu0 %v753
    %819 = vmatprep.subr.bf16.mxu0 %v756
    %820 = vmatpush1.bf16.msra.mxu0 %v755
    %821 = vmatprep.subr.bf16.mxu0 %v758
    %822 = vmatpush1.bf16.msra.mxu0 %v757
    %823 = vmatprep.subr.bf16.mxu0 %v760
    %824 = vmatpush1.bf16.msra.mxu0 %v759
    %825 = vmatprep.subr.bf16.mxu0 %v762
    %826 = vmatpush1.bf16.msra.mxu0 %v761
    %827 = vmatprep.subr.bf16.mxu0 %v764
    %828 = vmatpush1.bf16.msra.mxu0 %v763
    %829 = vmatprep.subr.bf16.mxu0 %v766
    %830 = vmatpush1.bf16.msra.mxu0 %v765
    %831 = vmatprep.subr.bf16.mxu0 %v768
    %832 = vmatpush1.bf16.msra.mxu0 %v767
    %833 = vmatprep.subr.bf16.mxu0 %v770
    %834 = vmatpush1.bf16.msra.mxu0 %v769
    %835 = vmatprep.subr.bf16.mxu0 %v772
    %836 = vmatpush1.bf16.msra.mxu0 %v771
    %837 = vmatprep.subr.bf16.mxu0 %v774
    %838 = vmatpush1.bf16.msra.mxu0 %v773
    %839 = vmatprep.subr.bf16.mxu0 %v776
    %840 = vmatpush1.bf16.msra.mxu0 %v775
    %841 = vmatprep.subr.bf16.mxu0 %v778
    %842 = vmatpush1.bf16.msra.mxu0 %v777
    %843 = vmatprep.mubr.bf16.mxu0 %v618
    %844 = vmatmul.mubr.bf16.gmra.mrb[0].mxu0 %v617
    %v845 = vpop.f32.mrb[0].mxu0
    %v846 = vadd.f32 0.0, %v845
    %v847 = vpop.f32.mrb[0].mxu0
    %v848 = vadd.f32 0.0, %v847
    %v849 = vpop.f32.mrb[0].mxu0
    %v850 = vpop.f32.mrb[0].mxu0
    %851 = vdwg.mxu0
    %v852 = vpack.c.bf16 %v846, %v846
    %v853 = vpack.c.bf16 %v848, %v848
    %v854 = vld [vmem:[%s6] sm:$0x3]
    %v857 = vunpack.c.l.s4 1966171168
    %v858 = vunpack.c.0.s8 %v857
    %v859 = vlaneseq
    %v860 = vshrl.u32 %v859, 7
    %v861 = vsub.s32 %v858, %v860
    %v862 = vrot.slane %v854, %v861
    %v863 = vcombine.high %v862, %v862
    %v865 = vunpack.c.l.s4 1966171168
    %v866 = vunpack.c.0.s8 %v865
    %v867 = vlaneseq
    %v868 = vshrl.u32 %v867, 7
    %v869 = vsub.s32 %v866, %v868
    %v870 = vrot.slane %v862, %v869
    %v872 = vunpack.c.l.s4 1966171168
    %v873 = vunpack.c.0.s8 %v872
    %v874 = vlaneseq
    %v875 = vshrl.u32 %v874, 7
    %v876 = vsub.s32 %v873, %v875
    %v877 = vrot.slane %v863, %v876
    %v879 = vpack.i.b16 %v870, %v870
    %v881 = vlaneseq
    %v882 = vshrl.u32 %v881, 7
    %v883 = vsub.s32 0, %v882
    %v884 = vrot.slane %v879, %v883
    %v886 = vpack.i.b16 %v877, %v877
    %v888 = vlaneseq
    %v889 = vshrl.u32 %v888, 7
    %v890 = vsub.s32 0, %v889
    %v891 = vrot.slane %v886, %v890
    %v892 = vadd.bf16 %v852, %v884
    %v893 = vadd.bf16 %v853, %v891
    %v894 = vmax.bf16 %v892, 0
    %v895 = vmax.bf16 %v893, 0
    %v896 = vld [vmem:[#allocation10] sm:$0xff]
    %v897 = vld [vmem:[#allocation10 + $0x8] sm:$0xff]
    %v898 = vld [vmem:[#allocation10 + $0x10] sm:$0xff]
    %v899 = vld [vmem:[#allocation10 + $0x18] sm:$0xff]
    %v900 = vld [vmem:[#allocation10 + $0x20] sm:$0xff]
    %v901 = vld [vmem:[#allocation10 + $0x28] sm:$0xff]
    %v902 = vld [vmem:[#allocation10 + $0x30] sm:$0xff]
    %v903 = vld [vmem:[#allocation10 + $0x38] sm:$0xff]
    %v904 = vld [vmem:[#allocation10 + $0x40] sm:$0xff]
    %v905 = vld [vmem:[#allocation10 + $0x48] sm:$0xff]
    %v906 = vld [vmem:[#allocation10 + $0x50] sm:$0xff]
    %v907 = vld [vmem:[#allocation10 + $0x58] sm:$0xff]
    %v908 = vld [vmem:[#allocation10 + $0x60] sm:$0xff]
    %v909 = vld [vmem:[#allocation10 + $0x68] sm:$0xff]
    %v910 = vld [vmem:[#allocation10 + $0x70] sm:$0xff]
    %v911 = vld [vmem:[#allocation10 + $0x78] sm:$0xff]
    %v912 = vld [vmem:[#allocation10 + $0x80] sm:$0xff]
    %v913 = vld [vmem:[#allocation10 + $0x88] sm:$0xff]
    %v914 = vld [vmem:[#allocation10 + $0x90] sm:$0xff]
    %v915 = vld [vmem:[#allocation10 + $0x98] sm:$0xff]
    %v916 = vld [vmem:[#allocation10 + $0xa0] sm:$0xff]
    %v917 = vld [vmem:[#allocation10 + $0xa8] sm:$0xff]
    %v918 = vld [vmem:[#allocation10 + $0xb0] sm:$0xff]
    %v919 = vld [vmem:[#allocation10 + $0xb8] sm:$0xff]
    %v920 = vld [vmem:[#allocation10 + $0xc0] sm:$0xff]
    %v921 = vld [vmem:[#allocation10 + $0xc8] sm:$0xff]
    %v922 = vld [vmem:[#allocation10 + $0xd0] sm:$0xff]
    %v923 = vld [vmem:[#allocation10 + $0xd8] sm:$0xff]
    %v924 = vld [vmem:[#allocation10 + $0xe0] sm:$0xff]
    %v925 = vld [vmem:[#allocation10 + $0xe8] sm:$0xff]
    %v926 = vld [vmem:[#allocation10 + $0xf0] sm:$0xff]
    %v927 = vld [vmem:[#allocation10 + $0xf8] sm:$0xff]
    %v960 = vunpack.c.l.b16 %v896
    %v961 = vunpack.c.h.b16 %v896
    %v962 = vunpack.c.l.b16 %v897
    %v963 = vunpack.c.h.b16 %v897
    %v964 = vunpack.c.l.b16 %v898
    %v965 = vunpack.c.h.b16 %v898
    %v966 = vunpack.c.l.b16 %v899
    %v967 = vunpack.c.h.b16 %v899
    %v968 = vunpack.c.l.b16 %v900
    %v969 = vunpack.c.h.b16 %v900
    %v970 = vunpack.c.l.b16 %v901
    %v971 = vunpack.c.h.b16 %v901
    %v972 = vunpack.c.l.b16 %v902
    %v973 = vunpack.c.h.b16 %v902
    %v974 = vunpack.c.l.b16 %v903
    %v975 = vunpack.c.h.b16 %v903
    %v976 = vunpack.c.l.b16 %v904
    %v977 = vunpack.c.h.b16 %v904
    %v978 = vunpack.c.l.b16 %v905
    %v979 = vunpack.c.h.b16 %v905
    %v980 = vunpack.c.l.b16 %v906
    %v981 = vunpack.c.h.b16 %v906
    %v982 = vunpack.c.l.b16 %v907
    %v983 = vunpack.c.h.b16 %v907
    %v984 = vunpack.c.l.b16 %v908
    %v985 = vunpack.c.h.b16 %v908
    %v986 = vunpack.c.l.b16 %v909
    %v987 = vunpack.c.h.b16 %v909
    %v988 = vunpack.c.l.b16 %v910
    %v989 = vunpack.c.h.b16 %v910
    %v990 = vunpack.c.l.b16 %v911
    %v991 = vunpack.c.h.b16 %v911
    %v992 = vunpack.c.l.b16 %v912
    %v993 = vunpack.c.h.b16 %v912
    %v994 = vunpack.c.l.b16 %v913
    %v995 = vunpack.c.h.b16 %v913
    %v996 = vunpack.c.l.b16 %v914
    %v997 = vunpack.c.h.b16 %v914
    %v998 = vunpack.c.l.b16 %v915
    %v999 = vunpack.c.h.b16 %v915
    %v1000 = vunpack.c.l.b16 %v916
    %v1001 = vunpack.c.h.b16 %v916
    %v1002 = vunpack.c.l.b16 %v917
    %v1003 = vunpack.c.h.b16 %v917
    %v1004 = vunpack.c.l.b16 %v918
    %v1005 = vunpack.c.h.b16 %v918
    %v1006 = vunpack.c.l.b16 %v919
    %v1007 = vunpack.c.h.b16 %v919
    %v1008 = vunpack.c.l.b16 %v920
    %v1009 = vunpack.c.h.b16 %v920
    %v1010 = vunpack.c.l.b16 %v921
    %v1011 = vunpack.c.h.b16 %v921
    %v1012 = vunpack.c.l.b16 %v922
    %v1013 = vunpack.c.h.b16 %v922
    %v1014 = vunpack.c.l.b16 %v923
    %v1015 = vunpack.c.h.b16 %v923
    %v1016 = vunpack.c.l.b16 %v924
    %v1017 = vunpack.c.h.b16 %v924
    %v1018 = vunpack.c.l.b16 %v925
    %v1019 = vunpack.c.h.b16 %v925
    %v1020 = vunpack.c.l.b16 %v926
    %v1021 = vunpack.c.h.b16 %v926
    %v1022 = vunpack.c.l.b16 %v927
    %v1023 = vunpack.c.h.b16 %v927
    %v1024 = vpack.c.b16 %v962, %v960
    %v1025 = vpack.c.b16 %v963, %v961
    %v1026 = vpack.c.b16 %v966, %v964
    %v1027 = vpack.c.b16 %v967, %v965
    %v1028 = vpack.c.b16 %v970, %v968
    %v1029 = vpack.c.b16 %v971, %v969
    %v1030 = vpack.c.b16 %v974, %v972
    %v1031 = vpack.c.b16 %v975, %v973
    %v1032 = vpack.c.b16 %v978, %v976
    %v1033 = vpack.c.b16 %v979, %v977
    %v1034 = vpack.c.b16 %v982, %v980
    %v1035 = vpack.c.b16 %v983, %v981
    %v1036 = vpack.c.b16 %v986, %v984
    %v1037 = vpack.c.b16 %v987, %v985
    %v1038 = vpack.c.b16 %v990, %v988
    %v1039 = vpack.c.b16 %v991, %v989
    %v1040 = vpack.c.b16 %v994, %v992
    %v1041 = vpack.c.b16 %v995, %v993
    %v1042 = vpack.c.b16 %v998, %v996
    %v1043 = vpack.c.b16 %v999, %v997
    %v1044 = vpack.c.b16 %v1002, %v1000
    %v1045 = vpack.c.b16 %v1003, %v1001
    %v1046 = vpack.c.b16 %v1006, %v1004
    %v1047 = vpack.c.b16 %v1007, %v1005
    %v1048 = vpack.c.b16 %v1010, %v1008
    %v1049 = vpack.c.b16 %v1011, %v1009
    %v1050 = vpack.c.b16 %v1014, %v1012
    %v1051 = vpack.c.b16 %v1015, %v1013
    %v1052 = vpack.c.b16 %v1018, %v1016
    %v1053 = vpack.c.b16 %v1019, %v1017
    %v1054 = vpack.c.b16 %v1022, %v1020
    %v1055 = vpack.c.b16 %v1023, %v1021
    %1088 = vmatprep.subr.bf16.mxu0 %v1025
    %1089 = vmatpush1.bf16.msra.mxu0 %v1024
    %1090 = vmatprep.subr.bf16.mxu0 %v1027
    %1091 = vmatpush1.bf16.msra.mxu0 %v1026
    %1092 = vmatprep.subr.bf16.mxu0 %v1029
    %1093 = vmatpush1.bf16.msra.mxu0 %v1028
    %1094 = vmatprep.subr.bf16.mxu0 %v1031
    %1095 = vmatpush1.bf16.msra.mxu0 %v1030
    %1096 = vmatprep.subr.bf16.mxu0 %v1033
    %1097 = vmatpush1.bf16.msra.mxu0 %v1032
    %1098 = vmatprep.subr.bf16.mxu0 %v1035
    %1099 = vmatpush1.bf16.msra.mxu0 %v1034
    %1100 = vmatprep.subr.bf16.mxu0 %v1037
    %1101 = vmatpush1.bf16.msra.mxu0 %v1036
    %1102 = vmatprep.subr.bf16.mxu0 %v1039
    %1103 = vmatpush1.bf16.msra.mxu0 %v1038
    %1104 = vmatprep.subr.bf16.mxu0 %v1041
    %1105 = vmatpush1.bf16.msra.mxu0 %v1040
    %1106 = vmatprep.subr.bf16.mxu0 %v1043
    %1107 = vmatpush1.bf16.msra.mxu0 %v1042
    %1108 = vmatprep.subr.bf16.mxu0 %v1045
    %1109 = vmatpush1.bf16.msra.mxu0 %v1044
    %1110 = vmatprep.subr.bf16.mxu0 %v1047
    %1111 = vmatpush1.bf16.msra.mxu0 %v1046
    %1112 = vmatprep.subr.bf16.mxu0 %v1049
    %1113 = vmatpush1.bf16.msra.mxu0 %v1048
    %1114 = vmatprep.subr.bf16.mxu0 %v1051
    %1115 = vmatpush1.bf16.msra.mxu0 %v1050
    %1116 = vmatprep.subr.bf16.mxu0 %v1053
    %1117 = vmatpush1.bf16.msra.mxu0 %v1052
    %1118 = vmatprep.subr.bf16.mxu0 %v1055
    %1119 = vmatpush1.bf16.msra.mxu0 %v1054
    %1120 = vmatprep.mubr.bf16.mxu0 %v895
    %1121 = vmatmul.mubr.bf16.gmra.mrb[0].mxu0 %v894
    %v1122 = vpop.f32.mrb[0].mxu0
    %v1123 = vadd.f32 0.0, %v1122
    %v1124 = vpop.f32.mrb[0].mxu0
    %v1125 = vadd.f32 0.0, %v1124
    %v1126 = vpop.f32.mrb[0].mxu0
    %v1127 = vpop.f32.mrb[0].mxu0
    %1128 = vdwg.mxu0
    %v1129 = vpack.c.bf16 %v1123, %v1123
    %v1130 = vpack.c.bf16 %v1125, %v1125
    %v1131 = vld [vmem:[%s8] sm:$0x3]
    %v1134 = vunpack.c.l.s4 1966171168
    %v1135 = vunpack.c.0.s8 %v1134
    %v1136 = vlaneseq
    %v1137 = vshrl.u32 %v1136, 7
    %v1138 = vsub.s32 %v1135, %v1137
    %v1139 = vrot.slane %v1131, %v1138
    %v1140 = vcombine.high %v1139, %v1139
    %v1142 = vunpack.c.l.s4 1966171168
    %v1143 = vunpack.c.0.s8 %v1142
    %v1144 = vlaneseq
    %v1145 = vshrl.u32 %v1144, 7
    %v1146 = vsub.s32 %v1143, %v1145
    %v1147 = vrot.slane %v1139, %v1146
    %v1149 = vunpack.c.l.s4 1966171168
    %v1150 = vunpack.c.0.s8 %v1149
    %v1151 = vlaneseq
    %v1152 = vshrl.u32 %v1151, 7
    %v1153 = vsub.s32 %v1150, %v1152
    %v1154 = vrot.slane %v1140, %v1153
    %v1156 = vpack.i.b16 %v1147, %v1147
    %v1158 = vlaneseq
    %v1159 = vshrl.u32 %v1158, 7
    %v1160 = vsub.s32 0, %v1159
    %v1161 = vrot.slane %v1156, %v1160
    %v1163 = vpack.i.b16 %v1154, %v1154
    %v1165 = vlaneseq
    %v1166 = vshrl.u32 %v1165, 7
    %v1167 = vsub.s32 0, %v1166
    %v1168 = vrot.slane %v1163, %v1167
    %v1169 = vadd.bf16 %v1129, %v1161
    %v1170 = vadd.bf16 %v1130, %v1168
    %v1171 = vmax.bf16 %v1169, 0
    %v1172 = vmax.bf16 %v1170, 0
    %v1173 = vld [vmem:[#allocation11] sm:$0xff]
    %v1174 = vld [vmem:[#allocation11 + $0x8] sm:$0xff]
    %v1175 = vld [vmem:[#allocation11 + $0x10] sm:$0xff]
    %v1176 = vld [vmem:[#allocation11 + $0x18] sm:$0xff]
    %v1177 = vld [vmem:[#allocation11 + $0x20] sm:$0xff]
    %v1178 = vld [vmem:[#allocation11 + $0x28] sm:$0xff]
    %v1179 = vld [vmem:[#allocation11 + $0x30] sm:$0xff]
    %v1180 = vld [vmem:[#allocation11 + $0x38] sm:$0xff]
    %v1181 = vld [vmem:[#allocation11 + $0x40] sm:$0xff]
    %v1182 = vld [vmem:[#allocation11 + $0x48] sm:$0xff]
    %v1183 = vld [vmem:[#allocation11 + $0x50] sm:$0xff]
    %v1184 = vld [vmem:[#allocation11 + $0x58] sm:$0xff]
    %v1185 = vld [vmem:[#allocation11 + $0x60] sm:$0xff]
    %v1186 = vld [vmem:[#allocation11 + $0x68] sm:$0xff]
    %v1187 = vld [vmem:[#allocation11 + $0x70] sm:$0xff]
    %v1188 = vld [vmem:[#allocation11 + $0x78] sm:$0xff]
    %v1189 = vld [vmem:[#allocation11 + $0x80] sm:$0xff]
    %v1190 = vld [vmem:[#allocation11 + $0x88] sm:$0xff]
    %v1191 = vld [vmem:[#allocation11 + $0x90] sm:$0xff]
    %v1192 = vld [vmem:[#allocation11 + $0x98] sm:$0xff]
    %v1193 = vld [vmem:[#allocation11 + $0xa0] sm:$0xff]
    %v1194 = vld [vmem:[#allocation11 + $0xa8] sm:$0xff]
    %v1195 = vld [vmem:[#allocation11 + $0xb0] sm:$0xff]
    %v1196 = vld [vmem:[#allocation11 + $0xb8] sm:$0xff]
    %v1197 = vld [vmem:[#allocation11 + $0xc0] sm:$0xff]
    %v1198 = vld [vmem:[#allocation11 + $0xc8] sm:$0xff]
    %v1199 = vld [vmem:[#allocation11 + $0xd0] sm:$0xff]
    %v1200 = vld [vmem:[#allocation11 + $0xd8] sm:$0xff]
    %v1201 = vld [vmem:[#allocation11 + $0xe0] sm:$0xff]
    %v1202 = vld [vmem:[#allocation11 + $0xe8] sm:$0xff]
    %v1203 = vld [vmem:[#allocation11 + $0xf0] sm:$0xff]
    %v1204 = vld [vmem:[#allocation11 + $0xf8] sm:$0xff]
    %v1237 = vunpack.c.l.b16 %v1173
    %v1238 = vunpack.c.h.b16 %v1173
    %v1239 = vunpack.c.l.b16 %v1174
    %v1240 = vunpack.c.h.b16 %v1174
    %v1241 = vunpack.c.l.b16 %v1175
    %v1242 = vunpack.c.h.b16 %v1175
    %v1243 = vunpack.c.l.b16 %v1176
    %v1244 = vunpack.c.h.b16 %v1176
    %v1245 = vunpack.c.l.b16 %v1177
    %v1246 = vunpack.c.h.b16 %v1177
    %v1247 = vunpack.c.l.b16 %v1178
    %v1248 = vunpack.c.h.b16 %v1178
    %v1249 = vunpack.c.l.b16 %v1179
    %v1250 = vunpack.c.h.b16 %v1179
    %v1251 = vunpack.c.l.b16 %v1180
    %v1252 = vunpack.c.h.b16 %v1180
    %v1253 = vunpack.c.l.b16 %v1181
    %v1254 = vunpack.c.h.b16 %v1181
    %v1255 = vunpack.c.l.b16 %v1182
    %v1256 = vunpack.c.h.b16 %v1182
    %v1257 = vunpack.c.l.b16 %v1183
    %v1258 = vunpack.c.h.b16 %v1183
    %v1259 = vunpack.c.l.b16 %v1184
    %v1260 = vunpack.c.h.b16 %v1184
    %v1261 = vunpack.c.l.b16 %v1185
    %v1262 = vunpack.c.h.b16 %v1185
    %v1263 = vunpack.c.l.b16 %v1186
    %v1264 = vunpack.c.h.b16 %v1186
    %v1265 = vunpack.c.l.b16 %v1187
    %v1266 = vunpack.c.h.b16 %v1187
    %v1267 = vunpack.c.l.b16 %v1188
    %v1268 = vunpack.c.h.b16 %v1188
    %v1269 = vunpack.c.l.b16 %v1189
    %v1270 = vunpack.c.h.b16 %v1189
    %v1271 = vunpack.c.l.b16 %v1190
    %v1272 = vunpack.c.h.b16 %v1190
    %v1273 = vunpack.c.l.b16 %v1191
    %v1274 = vunpack.c.h.b16 %v1191
    %v1275 = vunpack.c.l.b16 %v1192
    %v1276 = vunpack.c.h.b16 %v1192
    %v1277 = vunpack.c.l.b16 %v1193
    %v1278 = vunpack.c.h.b16 %v1193
    %v1279 = vunpack.c.l.b16 %v1194
    %v1280 = vunpack.c.h.b16 %v1194
    %v1281 = vunpack.c.l.b16 %v1195
    %v1282 = vunpack.c.h.b16 %v1195
    %v1283 = vunpack.c.l.b16 %v1196
    %v1284 = vunpack.c.h.b16 %v1196
    %v1285 = vunpack.c.l.b16 %v1197
    %v1286 = vunpack.c.h.b16 %v1197
    %v1287 = vunpack.c.l.b16 %v1198
    %v1288 = vunpack.c.h.b16 %v1198
    %v1289 = vunpack.c.l.b16 %v1199
    %v1290 = vunpack.c.h.b16 %v1199
    %v1291 = vunpack.c.l.b16 %v1200
    %v1292 = vunpack.c.h.b16 %v1200
    %v1293 = vunpack.c.l.b16 %v1201
    %v1294 = vunpack.c.h.b16 %v1201
    %v1295 = vunpack.c.l.b16 %v1202
    %v1296 = vunpack.c.h.b16 %v1202
    %v1297 = vunpack.c.l.b16 %v1203
    %v1298 = vunpack.c.h.b16 %v1203
    %v1299 = vunpack.c.l.b16 %v1204
    %v1300 = vunpack.c.h.b16 %v1204
    %v1301 = vpack.c.b16 %v1239, %v1237
    %v1302 = vpack.c.b16 %v1240, %v1238
    %v1303 = vpack.c.b16 %v1243, %v1241
    %v1304 = vpack.c.b16 %v1244, %v1242
    %v1305 = vpack.c.b16 %v1247, %v1245
    %v1306 = vpack.c.b16 %v1248, %v1246
    %v1307 = vpack.c.b16 %v1251, %v1249
    %v1308 = vpack.c.b16 %v1252, %v1250
    %v1309 = vpack.c.b16 %v1255, %v1253
    %v1310 = vpack.c.b16 %v1256, %v1254
    %v1311 = vpack.c.b16 %v1259, %v1257
    %v1312 = vpack.c.b16 %v1260, %v1258
    %v1313 = vpack.c.b16 %v1263, %v1261
    %v1314 = vpack.c.b16 %v1264, %v1262
    %v1315 = vpack.c.b16 %v1267, %v1265
    %v1316 = vpack.c.b16 %v1268, %v1266
    %v1317 = vpack.c.b16 %v1271, %v1269
    %v1318 = vpack.c.b16 %v1272, %v1270
    %v1319 = vpack.c.b16 %v1275, %v1273
    %v1320 = vpack.c.b16 %v1276, %v1274
    %v1321 = vpack.c.b16 %v1279, %v1277
    %v1322 = vpack.c.b16 %v1280, %v1278
    %v1323 = vpack.c.b16 %v1283, %v1281
    %v1324 = vpack.c.b16 %v1284, %v1282
    %v1325 = vpack.c.b16 %v1287, %v1285
    %v1326 = vpack.c.b16 %v1288, %v1286
    %v1327 = vpack.c.b16 %v1291, %v1289
    %v1328 = vpack.c.b16 %v1292, %v1290
    %v1329 = vpack.c.b16 %v1295, %v1293
    %v1330 = vpack.c.b16 %v1296, %v1294
    %v1331 = vpack.c.b16 %v1299, %v1297
    %v1332 = vpack.c.b16 %v1300, %v1298
    %1365 = vmatprep.subr.bf16.mxu0 %v1302
    %1366 = vmatpush1.bf16.msra.mxu0 %v1301
    %1367 = vmatprep.subr.bf16.mxu0 %v1304
    %1368 = vmatpush1.bf16.msra.mxu0 %v1303
    %1369 = vmatprep.subr.bf16.mxu0 %v1306
    %1370 = vmatpush1.bf16.msra.mxu0 %v1305
    %1371 = vmatprep.subr.bf16.mxu0 %v1308
    %1372 = vmatpush1.bf16.msra.mxu0 %v1307
    %1373 = vmatprep.subr.bf16.mxu0 %v1310
    %1374 = vmatpush1.bf16.msra.mxu0 %v1309
    %1375 = vmatprep.subr.bf16.mxu0 %v1312
    %1376 = vmatpush1.bf16.msra.mxu0 %v1311
    %1377 = vmatprep.subr.bf16.mxu0 %v1314
    %1378 = vmatpush1.bf16.msra.mxu0 %v1313
    %1379 = vmatprep.subr.bf16.mxu0 %v1316
    %1380 = vmatpush1.bf16.msra.mxu0 %v1315
    %1381 = vmatprep.subr.bf16.mxu0 %v1318
    %1382 = vmatpush1.bf16.msra.mxu0 %v1317
    %1383 = vmatprep.subr.bf16.mxu0 %v1320
    %1384 = vmatpush1.bf16.msra.mxu0 %v1319
    %1385 = vmatprep.subr.bf16.mxu0 %v1322
    %1386 = vmatpush1.bf16.msra.mxu0 %v1321
    %1387 = vmatprep.subr.bf16.mxu0 %v1324
    %1388 = vmatpush1.bf16.msra.mxu0 %v1323
    %1389 = vmatprep.subr.bf16.mxu0 %v1326
    %1390 = vmatpush1.bf16.msra.mxu0 %v1325
    %1391 = vmatprep.subr.bf16.mxu0 %v1328
    %1392 = vmatpush1.bf16.msra.mxu0 %v1327
    %1393 = vmatprep.subr.bf16.mxu0 %v1330
    %1394 = vmatpush1.bf16.msra.mxu0 %v1329
    %1395 = vmatprep.subr.bf16.mxu0 %v1332
    %1396 = vmatpush1.bf16.msra.mxu0 %v1331
    %1397 = vmatprep.mubr.bf16.mxu0 %v1172
    %1398 = vmatmul.mubr.bf16.gmra.mrb[0].mxu0 %v1171
    %v1399 = vpop.f32.mrb[0].mxu0
    %v1400 = vadd.f32 0.0, %v1399
    %v1401 = vpop.f32.mrb[0].mxu0
    %v1402 = vadd.f32 0.0, %v1401
    %v1403 = vpop.f32.mrb[0].mxu0
    %v1404 = vpop.f32.mrb[0].mxu0
    %1405 = vdwg.mxu0
    %v1406 = vpack.c.bf16 %v1400, %v1400
    %v1407 = vpack.c.bf16 %v1402, %v1402
    %v1408 = vld [vmem:[%s10] sm:$0x3]
    %v1411 = vunpack.c.l.s4 1966171168
    %v1412 = vunpack.c.0.s8 %v1411
    %v1413 = vlaneseq
    %v1414 = vshrl.u32 %v1413, 7
    %v1415 = vsub.s32 %v1412, %v1414
    %v1416 = vrot.slane %v1408, %v1415
    %v1417 = vcombine.high %v1416, %v1416
    %v1419 = vunpack.c.l.s4 1966171168
    %v1420 = vunpack.c.0.s8 %v1419
    %v1421 = vlaneseq
    %v1422 = vshrl.u32 %v1421, 7
    %v1423 = vsub.s32 %v1420, %v1422
    %v1424 = vrot.slane %v1416, %v1423
    %v1426 = vunpack.c.l.s4 1966171168
    %v1427 = vunpack.c.0.s8 %v1426
    %v1428 = vlaneseq
    %v1429 = vshrl.u32 %v1428, 7
    %v1430 = vsub.s32 %v1427, %v1429
    %v1431 = vrot.slane %v1417, %v1430
    %v1433 = vpack.i.b16 %v1424, %v1424
    %v1435 = vlaneseq
    %v1436 = vshrl.u32 %v1435, 7
    %v1437 = vsub.s32 0, %v1436
    %v1438 = vrot.slane %v1433, %v1437
    %v1440 = vpack.i.b16 %v1431, %v1431
    %v1442 = vlaneseq
    %v1443 = vshrl.u32 %v1442, 7
    %v1444 = vsub.s32 0, %v1443
    %v1445 = vrot.slane %v1440, %v1444
    %v1446 = vadd.bf16 %v1406, %v1438
    %v1447 = vadd.bf16 %v1407, %v1445
    %v1448 = vmax.bf16 %v1446, 0
    %v1449 = vmax.bf16 %v1447, 0
    %v1450 = vld [vmem:[#allocation13] sm:$0xff]
    %v1451 = vld [vmem:[#allocation13 + $0x8] sm:$0xff]
    %v1452 = vld [vmem:[#allocation13 + $0x10] sm:$0xff]
    %v1453 = vld [vmem:[#allocation13 + $0x18] sm:$0xff]
    %v1454 = vld [vmem:[#allocation13 + $0x20] sm:$0xff]
    %v1455 = vld [vmem:[#allocation13 + $0x28] sm:$0xff]
    %v1456 = vld [vmem:[#allocation13 + $0x30] sm:$0xff]
    %v1457 = vld [vmem:[#allocation13 + $0x38] sm:$0xff]
    %v1458 = vld [vmem:[#allocation13 + $0x40] sm:$0xff]
    %v1459 = vld [vmem:[#allocation13 + $0x48] sm:$0xff]
    %v1460 = vld [vmem:[#allocation13 + $0x50] sm:$0xff]
    %v1461 = vld [vmem:[#allocation13 + $0x58] sm:$0xff]
    %v1462 = vld [vmem:[#allocation13 + $0x60] sm:$0xff]
    %v1463 = vld [vmem:[#allocation13 + $0x68] sm:$0xff]
    %v1464 = vld [vmem:[#allocation13 + $0x70] sm:$0xff]
    %v1465 = vld [vmem:[#allocation13 + $0x78] sm:$0xff]
    %v1466 = vld [vmem:[#allocation13 + $0x80] sm:$0xff]
    %v1467 = vld [vmem:[#allocation13 + $0x88] sm:$0xff]
    %v1468 = vld [vmem:[#allocation13 + $0x90] sm:$0xff]
    %v1469 = vld [vmem:[#allocation13 + $0x98] sm:$0xff]
    %v1470 = vld [vmem:[#allocation13 + $0xa0] sm:$0xff]
    %v1471 = vld [vmem:[#allocation13 + $0xa8] sm:$0xff]
    %v1472 = vld [vmem:[#allocation13 + $0xb0] sm:$0xff]
    %v1473 = vld [vmem:[#allocation13 + $0xb8] sm:$0xff]
    %v1474 = vld [vmem:[#allocation13 + $0xc0] sm:$0xff]
    %v1475 = vld [vmem:[#allocation13 + $0xc8] sm:$0xff]
    %v1476 = vld [vmem:[#allocation13 + $0xd0] sm:$0xff]
    %v1477 = vld [vmem:[#allocation13 + $0xd8] sm:$0xff]
    %v1478 = vld [vmem:[#allocation13 + $0xe0] sm:$0xff]
    %v1479 = vld [vmem:[#allocation13 + $0xe8] sm:$0xff]
    %v1480 = vld [vmem:[#allocation13 + $0xf0] sm:$0xff]
    %v1481 = vld [vmem:[#allocation13 + $0xf8] sm:$0xff]
    %v1514 = vunpack.c.l.b16 %v1450
    %v1515 = vunpack.c.h.b16 %v1450
    %v1516 = vunpack.c.l.b16 %v1451
    %v1517 = vunpack.c.h.b16 %v1451
    %v1518 = vunpack.c.l.b16 %v1452
    %v1519 = vunpack.c.h.b16 %v1452
    %v1520 = vunpack.c.l.b16 %v1453
    %v1521 = vunpack.c.h.b16 %v1453
    %v1522 = vunpack.c.l.b16 %v1454
    %v1523 = vunpack.c.h.b16 %v1454
    %v1524 = vunpack.c.l.b16 %v1455
    %v1525 = vunpack.c.h.b16 %v1455
    %v1526 = vunpack.c.l.b16 %v1456
    %v1527 = vunpack.c.h.b16 %v1456
    %v1528 = vunpack.c.l.b16 %v1457
    %v1529 = vunpack.c.h.b16 %v1457
    %v1530 = vunpack.c.l.b16 %v1458
    %v1531 = vunpack.c.h.b16 %v1458
    %v1532 = vunpack.c.l.b16 %v1459
    %v1533 = vunpack.c.h.b16 %v1459
    %v1534 = vunpack.c.l.b16 %v1460
    %v1535 = vunpack.c.h.b16 %v1460
    %v1536 = vunpack.c.l.b16 %v1461
    %v1537 = vunpack.c.h.b16 %v1461
    %v1538 = vunpack.c.l.b16 %v1462
    %v1539 = vunpack.c.h.b16 %v1462
    %v1540 = vunpack.c.l.b16 %v1463
    %v1541 = vunpack.c.h.b16 %v1463
    %v1542 = vunpack.c.l.b16 %v1464
    %v1543 = vunpack.c.h.b16 %v1464
    %v1544 = vunpack.c.l.b16 %v1465
    %v1545 = vunpack.c.h.b16 %v1465
    %v1546 = vunpack.c.l.b16 %v1466
    %v1547 = vunpack.c.h.b16 %v1466
    %v1548 = vunpack.c.l.b16 %v1467
    %v1549 = vunpack.c.h.b16 %v1467
    %v1550 = vunpack.c.l.b16 %v1468
    %v1551 = vunpack.c.h.b16 %v1468
    %v1552 = vunpack.c.l.b16 %v1469
    %v1553 = vunpack.c.h.b16 %v1469
    %v1554 = vunpack.c.l.b16 %v1470
    %v1555 = vunpack.c.h.b16 %v1470
    %v1556 = vunpack.c.l.b16 %v1471
    %v1557 = vunpack.c.h.b16 %v1471
    %v1558 = vunpack.c.l.b16 %v1472
    %v1559 = vunpack.c.h.b16 %v1472
    %v1560 = vunpack.c.l.b16 %v1473
    %v1561 = vunpack.c.h.b16 %v1473
    %v1562 = vunpack.c.l.b16 %v1474
    %v1563 = vunpack.c.h.b16 %v1474
    %v1564 = vunpack.c.l.b16 %v1475
    %v1565 = vunpack.c.h.b16 %v1475
    %v1566 = vunpack.c.l.b16 %v1476
    %v1567 = vunpack.c.h.b16 %v1476
    %v1568 = vunpack.c.l.b16 %v1477
    %v1569 = vunpack.c.h.b16 %v1477
    %v1570 = vunpack.c.l.b16 %v1478
    %v1571 = vunpack.c.h.b16 %v1478
    %v1572 = vunpack.c.l.b16 %v1479
    %v1573 = vunpack.c.h.b16 %v1479
    %v1574 = vunpack.c.l.b16 %v1480
    %v1575 = vunpack.c.h.b16 %v1480
    %v1576 = vunpack.c.l.b16 %v1481
    %v1577 = vunpack.c.h.b16 %v1481
    %v1578 = vpack.c.b16 %v1516, %v1514
    %v1579 = vpack.c.b16 %v1517, %v1515
    %v1580 = vpack.c.b16 %v1520, %v1518
    %v1581 = vpack.c.b16 %v1521, %v1519
    %v1582 = vpack.c.b16 %v1524, %v1522
    %v1583 = vpack.c.b16 %v1525, %v1523
    %v1584 = vpack.c.b16 %v1528, %v1526
    %v1585 = vpack.c.b16 %v1529, %v1527
    %v1586 = vpack.c.b16 %v1532, %v1530
    %v1587 = vpack.c.b16 %v1533, %v1531
    %v1588 = vpack.c.b16 %v1536, %v1534
    %v1589 = vpack.c.b16 %v1537, %v1535
    %v1590 = vpack.c.b16 %v1540, %v1538
    %v1591 = vpack.c.b16 %v1541, %v1539
    %v1592 = vpack.c.b16 %v1544, %v1542
    %v1593 = vpack.c.b16 %v1545, %v1543
    %v1594 = vpack.c.b16 %v1548, %v1546
    %v1595 = vpack.c.b16 %v1549, %v1547
    %v1596 = vpack.c.b16 %v1552, %v1550
    %v1597 = vpack.c.b16 %v1553, %v1551
    %v1598 = vpack.c.b16 %v1556, %v1554
    %v1599 = vpack.c.b16 %v1557, %v1555
    %v1600 = vpack.c.b16 %v1560, %v1558
    %v1601 = vpack.c.b16 %v1561, %v1559
    %v1602 = vpack.c.b16 %v1564, %v1562
    %v1603 = vpack.c.b16 %v1565, %v1563
    %v1604 = vpack.c.b16 %v1568, %v1566
    %v1605 = vpack.c.b16 %v1569, %v1567
    %v1606 = vpack.c.b16 %v1572, %v1570
    %v1607 = vpack.c.b16 %v1573, %v1571
    %v1608 = vpack.c.b16 %v1576, %v1574
    %v1609 = vpack.c.b16 %v1577, %v1575
    %1642 = vmatprep.subr.bf16.mxu0 %v1579
    %1643 = vmatpush1.bf16.msra.mxu0 %v1578
    %1644 = vmatprep.subr.bf16.mxu0 %v1581
    %1645 = vmatpush1.bf16.msra.mxu0 %v1580
    %1646 = vmatprep.subr.bf16.mxu0 %v1583
    %1647 = vmatpush1.bf16.msra.mxu0 %v1582
    %1648 = vmatprep.subr.bf16.mxu0 %v1585
    %1649 = vmatpush1.bf16.msra.mxu0 %v1584
    %1650 = vmatprep.subr.bf16.mxu0 %v1587
    %1651 = vmatpush1.bf16.msra.mxu0 %v1586
    %1652 = vmatprep.subr.bf16.mxu0 %v1589
    %1653 = vmatpush1.bf16.msra.mxu0 %v1588
    %1654 = vmatprep.subr.bf16.mxu0 %v1591
    %1655 = vmatpush1.bf16.msra.mxu0 %v1590
    %1656 = vmatprep.subr.bf16.mxu0 %v1593
    %1657 = vmatpush1.bf16.msra.mxu0 %v1592
    %1658 = vmatprep.subr.bf16.mxu0 %v1595
    %1659 = vmatpush1.bf16.msra.mxu0 %v1594
    %1660 = vmatprep.subr.bf16.mxu0 %v1597
    %1661 = vmatpush1.bf16.msra.mxu0 %v1596
    %1662 = vmatprep.subr.bf16.mxu0 %v1599
    %1663 = vmatpush1.bf16.msra.mxu0 %v1598
    %1664 = vmatprep.subr.bf16.mxu0 %v1601
    %1665 = vmatpush1.bf16.msra.mxu0 %v1600
    %1666 = vmatprep.subr.bf16.mxu0 %v1603
    %1667 = vmatpush1.bf16.msra.mxu0 %v1602
    %1668 = vmatprep.subr.bf16.mxu0 %v1605
    %1669 = vmatpush1.bf16.msra.mxu0 %v1604
    %1670 = vmatprep.subr.bf16.mxu0 %v1607
    %1671 = vmatpush1.bf16.msra.mxu0 %v1606
    %1672 = vmatprep.subr.bf16.mxu0 %v1609
    %1673 = vmatpush1.bf16.msra.mxu0 %v1608
    %1674 = vmatprep.mubr.bf16.mxu0 %v1449
    %1675 = vmatmul.mubr.bf16.gmra.mrb[0].mxu0 %v1448
    %v1676 = vpop.f32.mrb[0].mxu0
    %v1677 = vadd.f32 0.0, %v1676
    %v1678 = vpop.f32.mrb[0].mxu0
    %v1679 = vadd.f32 0.0, %v1678
    %v1680 = vpop.f32.mrb[0].mxu0
    %v1681 = vpop.f32.mrb[0].mxu0
    %1682 = vdwg.mxu0
    %v1683 = vpack.c.bf16 %v1677, %v1677
    %v1684 = vpack.c.bf16 %v1679, %v1679
    %v1685 = vld [vmem:[%s12] sm:$0x3]
    %v1688 = vunpack.c.l.s4 1966171168
    %v1689 = vunpack.c.0.s8 %v1688
    %v1690 = vlaneseq
    %v1691 = vshrl.u32 %v1690, 7
    %v1692 = vsub.s32 %v1689, %v1691
    %v1693 = vrot.slane %v1685, %v1692
    %v1694 = vcombine.high %v1693, %v1693
    %v1696 = vunpack.c.l.s4 1966171168
    %v1697 = vunpack.c.0.s8 %v1696
    %v1698 = vlaneseq
    %v1699 = vshrl.u32 %v1698, 7
    %v1700 = vsub.s32 %v1697, %v1699
    %v1701 = vrot.slane %v1693, %v1700
    %v1703 = vunpack.c.l.s4 1966171168
    %v1704 = vunpack.c.0.s8 %v1703
    %v1705 = vlaneseq
    %v1706 = vshrl.u32 %v1705, 7
    %v1707 = vsub.s32 %v1704, %v1706
    %v1708 = vrot.slane %v1694, %v1707
    %v1710 = vpack.i.b16 %v1701, %v1701
    %v1712 = vlaneseq
    %v1713 = vshrl.u32 %v1712, 7
    %v1714 = vsub.s32 0, %v1713
    %v1715 = vrot.slane %v1710, %v1714
    %v1717 = vpack.i.b16 %v1708, %v1708
    %v1719 = vlaneseq
    %v1720 = vshrl.u32 %v1719, 7
    %v1721 = vsub.s32 0, %v1720
    %v1722 = vrot.slane %v1717, %v1721
    %v1723 = vadd.bf16 %v1683, %v1715
    %v1724 = vadd.bf16 %v1684, %v1722
    %v1725 = vmax.bf16 %v1723, 0
    %v1726 = vmax.bf16 %v1724, 0
    %v1727 = vld [vmem:[#allocation14] sm:$0xf]
    %v1728 = vld [vmem:[#allocation14 + $0x4] sm:$0xf]
    %v1729 = vld [vmem:[#allocation14 + $0x8] sm:$0xf]
    %v1730 = vld [vmem:[#allocation14 + $0xc] sm:$0xf]
    %v1731 = vld [vmem:[#allocation14 + $0x10] sm:$0xf]
    %v1732 = vld [vmem:[#allocation14 + $0x14] sm:$0xf]
    %v1733 = vld [vmem:[#allocation14 + $0x18] sm:$0xf]
    %v1734 = vld [vmem:[#allocation14 + $0x1c] sm:$0xf]
    %v1735 = vld [vmem:[#allocation14 + $0x20] sm:$0xf]
    %v1736 = vld [vmem:[#allocation14 + $0x24] sm:$0xf]
    %v1737 = vld [vmem:[#allocation14 + $0x28] sm:$0xf]
    %v1738 = vld [vmem:[#allocation14 + $0x2c] sm:$0xf]
    %v1739 = vld [vmem:[#allocation14 + $0x30] sm:$0xf]
    %v1740 = vld [vmem:[#allocation14 + $0x34] sm:$0xf]
    %v1741 = vld [vmem:[#allocation14 + $0x38] sm:$0xf]
    %v1742 = vld [vmem:[#allocation14 + $0x3c] sm:$0xf]
    %v1743 = vld [vmem:[#allocation14 + $0x40] sm:$0xf]
    %v1744 = vld [vmem:[#allocation14 + $0x44] sm:$0xf]
    %v1745 = vld [vmem:[#allocation14 + $0x48] sm:$0xf]
    %v1746 = vld [vmem:[#allocation14 + $0x4c] sm:$0xf]
    %v1747 = vld [vmem:[#allocation14 + $0x50] sm:$0xf]
    %v1748 = vld [vmem:[#allocation14 + $0x54] sm:$0xf]
    %v1749 = vld [vmem:[#allocation14 + $0x58] sm:$0xf]
    %v1750 = vld [vmem:[#allocation14 + $0x5c] sm:$0xf]
    %v1751 = vld [vmem:[#allocation14 + $0x60] sm:$0xf]
    %v1752 = vld [vmem:[#allocation14 + $0x64] sm:$0xf]
    %v1753 = vld [vmem:[#allocation14 + $0x68] sm:$0xf]
    %v1754 = vld [vmem:[#allocation14 + $0x6c] sm:$0xf]
    %v1755 = vld [vmem:[#allocation14 + $0x70] sm:$0xf]
    %v1756 = vld [vmem:[#allocation14 + $0x74] sm:$0xf]
    %v1757 = vld [vmem:[#allocation14 + $0x78] sm:$0xf]
    %v1758 = vld [vmem:[#allocation14 + $0x7c] sm:$0xf]
    %v1791 = vunpack.c.l.b16 %v1727
    %v1792 = vunpack.c.l.b16 %v1728
    %v1793 = vunpack.c.l.b16 %v1729
    %v1794 = vunpack.c.l.b16 %v1730
    %v1795 = vunpack.c.l.b16 %v1731
    %v1796 = vunpack.c.l.b16 %v1732
    %v1797 = vunpack.c.l.b16 %v1733
    %v1798 = vunpack.c.l.b16 %v1734
    %v1799 = vunpack.c.l.b16 %v1735
    %v1800 = vunpack.c.l.b16 %v1736
    %v1801 = vunpack.c.l.b16 %v1737
    %v1802 = vunpack.c.l.b16 %v1738
    %v1803 = vunpack.c.l.b16 %v1739
    %v1804 = vunpack.c.l.b16 %v1740
    %v1805 = vunpack.c.l.b16 %v1741
    %v1806 = vunpack.c.l.b16 %v1742
    %v1807 = vunpack.c.l.b16 %v1743
    %v1808 = vunpack.c.l.b16 %v1744
    %v1809 = vunpack.c.l.b16 %v1745
    %v1810 = vunpack.c.l.b16 %v1746
    %v1811 = vunpack.c.l.b16 %v1747
    %v1812 = vunpack.c.l.b16 %v1748
    %v1813 = vunpack.c.l.b16 %v1749
    %v1814 = vunpack.c.l.b16 %v1750
    %v1815 = vunpack.c.l.b16 %v1751
    %v1816 = vunpack.c.l.b16 %v1752
    %v1817 = vunpack.c.l.b16 %v1753
    %v1818 = vunpack.c.l.b16 %v1754
    %v1819 = vunpack.c.l.b16 %v1755
    %v1820 = vunpack.c.l.b16 %v1756
    %v1821 = vunpack.c.l.b16 %v1757
    %v1822 = vunpack.c.l.b16 %v1758
    %v1823 = vpack.c.b16 %v1792, %v1791
    %v1824 = vpack.c.b16 %v1794, %v1793
    %v1825 = vpack.c.b16 %v1796, %v1795
    %v1826 = vpack.c.b16 %v1798, %v1797
    %v1827 = vpack.c.b16 %v1800, %v1799
    %v1828 = vpack.c.b16 %v1802, %v1801
    %v1829 = vpack.c.b16 %v1804, %v1803
    %v1830 = vpack.c.b16 %v1806, %v1805
    %v1831 = vpack.c.b16 %v1808, %v1807
    %v1832 = vpack.c.b16 %v1810, %v1809
    %v1833 = vpack.c.b16 %v1812, %v1811
    %v1834 = vpack.c.b16 %v1814, %v1813
    %v1835 = vpack.c.b16 %v1816, %v1815
    %v1836 = vpack.c.b16 %v1818, %v1817
    %v1837 = vpack.c.b16 %v1820, %v1819
    %v1838 = vpack.c.b16 %v1822, %v1821
    %1855 = vmatprep.subr.bf16.mxu0 0
    %1856 = vmatpush1.bf16.msra.mxu0 %v1823
    %1857 = vmatprep.subr.bf16.mxu0 0
    %1858 = vmatpush1.bf16.msra.mxu0 %v1824
    %1859 = vmatprep.subr.bf16.mxu0 0
    %1860 = vmatpush1.bf16.msra.mxu0 %v1825
    %1861 = vmatprep.subr.bf16.mxu0 0
    %1862 = vmatpush1.bf16.msra.mxu0 %v1826
    %1863 = vmatprep.subr.bf16.mxu0 0
    %1864 = vmatpush1.bf16.msra.mxu0 %v1827
    %1865 = vmatprep.subr.bf16.mxu0 0
    %1866 = vmatpush1.bf16.msra.mxu0 %v1828
    %1867 = vmatprep.subr.bf16.mxu0 0
    %1868 = vmatpush1.bf16.msra.mxu0 %v1829
    %1869 = vmatprep.subr.bf16.mxu0 0
    %1870 = vmatpush1.bf16.msra.mxu0 %v1830
    %1871 = vmatprep.subr.bf16.mxu0 0
    %1872 = vmatpush1.bf16.msra.mxu0 %v1831
    %1873 = vmatprep.subr.bf16.mxu0 0
    %1874 = vmatpush1.bf16.msra.mxu0 %v1832
    %1875 = vmatprep.subr.bf16.mxu0 0
    %1876 = vmatpush1.bf16.msra.mxu0 %v1833
    %1877 = vmatprep.subr.bf16.mxu0 0
    %1878 = vmatpush1.bf16.msra.mxu0 %v1834
    %1879 = vmatprep.subr.bf16.mxu0 0
    %1880 = vmatpush1.bf16.msra.mxu0 %v1835
    %1881 = vmatprep.subr.bf16.mxu0 0
    %1882 = vmatpush1.bf16.msra.mxu0 %v1836
    %1883 = vmatprep.subr.bf16.mxu0 0
    %1884 = vmatpush1.bf16.msra.mxu0 %v1837
    %1885 = vmatprep.subr.bf16.mxu0 0
    %1886 = vmatpush1.bf16.msra.mxu0 %v1838
    %1887 = vmatprep.mubr.bf16.mxu0 %v1726
    %1888 = vmatmul.mubr.bf16.gmra.mrb[0].mxu0 %v1725
    %v1889 = vpop.f32.mrb[0].mxu0
    %v1890 = vadd.f32 0.0, %v1889
    %v1891 = vpop.f32.mrb[0].mxu0
    %v1892 = vpop.f32.mrb[0].mxu0
    %v1893 = vpop.f32.mrb[0].mxu0
    %1894 = vdwg.mxu0
    %v1895 = vpack.c.bf16 %v1890, %v1890
    %v1896 = vld [vmem:[%s14] sm:$0x1]
    %v1898 = vpack.i.b16 %v1896, %v1896
    %v1900 = vlaneseq
    %v1901 = vshrl.u32 %v1900, 7
    %v1902 = vsub.s32 0, %v1901
    %v1903 = vrot.slane %v1898, %v1902
    %v1904 = vadd.bf16 %v1895, %v1903
    %v1905 = vmax.bf16 %v1904, 0
    %v1906 = vunpack.c.l.bf16 %v1905
    %v1907 = vlaneseq
    %v1908 = vand.u32 %v1907, 127
    %vm1909 = vcmp.lt.s32.totalorder %v1908, 2
    %v1910 = vsel %vm1909, %v1906, -inf
    %1911 = vmax.xlane.f32.xlu0 %v1910
    %v1912 = vpop.xlane.xlu0 %1911
    %v1913 = vsub.f32 %v1910, %v1912
    %v1914 = vmul.f32 %v1913, 1.442695
    %v1915 = vpow.pop %v1914
    %1916 = vadd.xlane.f32.xlu0 %v1915
    %v1917 = vpop.xlane.xlu0 %1916
    %v1918 = vrcp.pop %v1917
    %v1919 = vmul.f32 %v1915, %v1918
    %v1920 = vpack.c.bf16 %v1919, %v1919
    %1921 = vst [vmem:[#allocation16] sm:$0xf] %v1920
    // Predicated region
    $region94: #{tpu_custom_call.1} parent=1 // pred_check
      _
    $region95: #{tpu_custom_call.1} parent=1 // pred_check_branch
      %1923 = sbr.rel (0) target = $region97
    $region96: #{tpu_custom_call.1} parent=1 // pred_region
      %s1925 = ssub.s32 64, 64
      %1926 = vsyncadd [#allocation4], %s1925
      %s1928 = sshll.u32 [#allocation16], 4
      %s1929 = int_to_ptr.vmem [resolvable:$true] %s1928
      %1931 = dma.vmem_to_hbm [thread:$0]  %s1929, 64, %s15, [#allocation4]
    $region97: #{tpu_custom_call.1} parent=1 // pred_fallthru
      _
    // Predicated region
    $region98: #{tpu_custom_call.1} parent=1 // pred_check
      _
    $region99: #{tpu_custom_call.1} parent=1 // pred_check_branch
      %1933 = sbr.rel (0) target = $region101
    $region100: #{tpu_custom_call.1} parent=1 // pred_region
      %1934 = dma.done [#allocation4], 64
    $region101: #{tpu_custom_call.1} parent=1 // pred_fallthru
      _
    %1935 = vsyncpa [#allocation3], 1
    %1936 = vsyncpa [#allocation6], 1
    %1937 = vsyncpa [#allocation9], 1
    %1938 = vsyncpa [#allocation12], 1
    %1939 = vsyncpa [#allocation15], 1
    %1940 = vsyncpa [#allocation4], 1

</llo_original>
